<compile_context>
chip_gen: v6e
topology: v6e:2x2x1
jax: 0.10.0
libtpu: 0.0.40
codegen_flags: <defaults>
</compile_context>

<pallas_src>
import functools
import math

import jax
import jax.numpy as jnp
from jax.experimental import pallas as pl
from jax.experimental.pallas import tpu as pltpu


def _round_up(x, m):
    return (x + m - 1) // m * m


# ---------------------------------------------------------------------------
# Fused Pallas kernel: direct conv taps (MXU) -> folded BN -> ReLU
# ---------------------------------------------------------------------------
def _conv_bn_relu_kernel(x_ref, w_ref, s_ref, b_ref, o_ref, *,
                         taps_h, taps_w, dil, ow, relu):
    """One (row-tile, channel-tile) step of the fused conv.

    x_ref : (taps_h, th, w_in, C) bf16   pre-gathered input rows
    w_ref : (taps_h, taps_w, C, tn) bf16 weight panel (VMEM resident)
    s_ref : (1, tn) f32                  folded BN scale
    b_ref : (1, tn) f32                  folded BN shift (+ conv bias)
    o_ref : (th*ow, tn) f32              lane-dense output tile
    """
    th = x_ref.shape[1]
    c = x_ref.shape[3]
    tn = o_ref.shape[1]
    acc = jnp.zeros((th * ow, tn), jnp.float32)
    for kh in range(taps_h):
        for kw in range(taps_w):
            # Static window over the padded width realizes the KW taps without
            # ever materializing an im2col matrix in HBM.
            tap = x_ref[kh, :, pl.ds(kw * dil, ow), :]          # (th, ow, c)
            acc = acc + jnp.dot(tap.reshape(th * ow, c), w_ref[kh, kw],
                                preferred_element_type=jnp.float32)
    y = acc * s_ref[...] + b_ref[...]                            # folded BN (+bias)
    if relu:
        y = jnp.maximum(y, 0.0)
    o_ref[...] = y.astype(o_ref.dtype)


def _pick_tiles(m_rows, ow, taps_h, taps_w, w_in, c, n_pad):
    """Pick (row tile th, output-channel tile tn) under a VMEM budget."""
    # Output-channel tile: keep the weight panel VMEM resident but modest.
    tn = n_pad
    if n_pad > 512 or taps_h * taps_w * c * n_pad * 2 > (8 << 20):
        for cand in (512, 256, 128):
            if n_pad % cand == 0:
                tn = cand
                if taps_h * taps_w * c * cand * 2 <= (8 << 20):
                    break
    # TODO(synk): add an input-channel reduction grid axis (f32 VMEM
    # accumulator) for layers where even a 128-wide weight panel exceeds VMEM.

    def vmem_bytes(th):
        return (2 * taps_h * th * w_in * c * 2         # input double-buffer (bf16)
                + 2 * taps_h * taps_w * c * tn * 2     # weight panel (bf16)
                + 3 * th * ow * tn * 4)                # out double-buffer + acc (f32)

    th = _round_up(max(1, 1024 // max(ow, 1)), 8)      # ~1024 matmul rows / step
    if m_rows > 8:                                     # >=2 row tiles (v7x 2 TCs)
        th = min(th, _round_up((m_rows + 1) // 2, 8))
    th = min(th, _round_up(m_rows, 8))
    th = max(th, 8)
    while th > 8 and vmem_bytes(th) > (12 << 20):
        th = max(8, _round_up(th // 2, 8))
    return th, tn


def _fused_conv2d_bn_relu(x_nhwc, w_oihw, scale, shift, *, stride, padding,
                          dilation, relu):
    """relu((conv2d(x, w)) * scale + shift) for one channel group, NHWC f32 out."""
    B, H, W, C = x_nhwc.shape
    Cout, Cin, KH, KW = w_oihw.shape
    assert Cin == C
    OH = (H + 2 * padding - dilation * (KH - 1) - 1) // stride + 1
    OW = (W + 2 * padding - dilation * (KW - 1) - 1) // stride + 1
    n_pad = _round_up(Cout, 128)

    # bf16 at the DMA boundary (halves activation/weight HBM traffic).
    xb = x_nhwc.astype(jnp.bfloat16)
    if padding:
        xb = jnp.pad(xb, ((0, 0), (padding, padding), (padding, padding), (0, 0)))
    Wp = W + 2 * padding

    if stride == 1:
        # Row gather per kernel-row only (KH-x blowup, not KH*KW-x im2col).
        rows = [jax.lax.slice_in_dim(xb, kh * dilation, kh * dilation + OH, axis=1)
                for kh in range(KH)]
        x_taps = jnp.stack(rows, axis=0).reshape(KH, B * OH, Wp, C)
        taps_h, taps_w, dil, w_in = KH, KW, dilation, Wp
        w_r = jnp.transpose(w_oihw, (2, 3, 1, 0))               # (KH,KW,Cin,Cout)
    else:
        # Strided conv fallback: per-tap gather (tap-major im2col), same kernel.
        taps = []
        for kh in range(KH):
            for kw in range(KW):
                h0, w0 = kh * dilation, kw * dilation
                taps.append(jax.lax.slice(
                    xb, (0, h0, w0, 0),
                    (B, h0 + (OH - 1) * stride + 1, w0 + (OW - 1) * stride + 1, C),
                    (1, stride, stride, 1)))                    # (B, OH, OW, C)
        x_taps = jnp.stack(taps, axis=0).reshape(KH * KW, B * OH, OW, C)
        taps_h, taps_w, dil, w_in = KH * KW, 1, 0, OW
        w_r = jnp.transpose(w_oihw, (2, 3, 1, 0)).reshape(KH * KW, 1, Cin, Cout)

    if n_pad != Cout:                                           # lane-dense output
        w_r = jnp.pad(w_r, ((0, 0), (0, 0), (0, 0), (0, n_pad - Cout)))
        scale = jnp.pad(scale, (0, n_pad - Cout))
        shift = jnp.pad(shift, (0, n_pad - Cout))
    w_r = w_r.astype(jnp.bfloat16)
    scale = scale.reshape(1, n_pad).astype(jnp.float32)
    shift = shift.reshape(1, n_pad).astype(jnp.float32)

    m_rows = B * OH
    m_out = m_rows * OW
    th, tn = _pick_tiles(m_rows, OW, taps_h, taps_w, w_in, C, n_pad)
    grid = (pl.cdiv(m_rows, th), n_pad // tn)

    kern = functools.partial(_conv_bn_relu_kernel, taps_h=taps_h, taps_w=taps_w,
                             dil=dil, ow=OW, relu=relu)
    out = pl.pallas_call(
        kern,
        out_shape=jax.ShapeDtypeStruct((m_out, n_pad), jnp.float32),
        grid=grid,
        in_specs=[
            pl.BlockSpec((taps_h, th, w_in, C), lambda i, j: (0, i, 0, 0)),
            pl.BlockSpec((taps_h, taps_w, C, tn), lambda i, j: (0, 0, 0, j)),
            pl.BlockSpec((1, tn), lambda i, j: (0, j)),
            pl.BlockSpec((1, tn), lambda i, j: (0, j)),
        ],
        out_specs=pl.BlockSpec((th * OW, tn), lambda i, j: (i, j)),
        compiler_params=pltpu.CompilerParams(
            dimension_semantics=("parallel", "parallel"),
            vmem_limit_bytes=32 * 1024 * 1024),
    )(x_taps, w_r, scale, shift)

    if n_pad != Cout:
        out = out[:, :Cout]
    return out.reshape(B, OH, OW, Cout)


# ---------------------------------------------------------------------------
# BasicConv forward: Conv2d(bias optional) -> BatchNorm2d(eval) -> ReLU
# ---------------------------------------------------------------------------
def basic_conv_forward(params, x, *, stride=1, padding=0, dilation=1,
                       groups=1, relu=True, bn=True, eps=1e-5):
    """x: (B, Cin, H, W) f32 NCHW.  Returns (B, Cout, OH, OW) f32 NCHW."""
    weight = params['weight']                      # (Cout, Cin // groups, KH, KW)
    Cout, Cin_g, KH, KW = weight.shape
    B, Cin, H, W = x.shape
    assert Cin == Cin_g * groups and Cout % groups == 0
    Cout_g = Cout // groups

    # Fold conv bias + BatchNorm (eval mode, running stats) into scale/shift.
    # TODO(synk): training-mode BN (batch statistics + momentum update) is not implemented.
    bias = params.get('bias')
    if bn:
        inv = params['bn_gamma'] * jax.lax.rsqrt(params['bn_var'] + eps)
        scale = inv
        shift = params['bn_beta'] - params['bn_mean'] * inv
        if bias is not None:
            shift = shift + bias * inv
    else:
        scale = jnp.ones((Cout,), jnp.float32)
        shift = bias if bias is not None else jnp.zeros((Cout,), jnp.float32)

    x_nhwc = jnp.transpose(x, (0, 2, 3, 1))        # channels -> lane axis
    outs = []
    # TODO(synk): batch grouped convs into one pallas_call (group grid axis)
    # instead of a Python loop; groups == 1 for the layers exercised here.
    for g in range(groups):
        xg = x_nhwc[..., g * Cin_g:(g + 1) * Cin_g]
        wg = weight[g * Cout_g:(g + 1) * Cout_g]
        og = _fused_conv2d_bn_relu(
            xg, wg,
            scale[g * Cout_g:(g + 1) * Cout_g],
            shift[g * Cout_g:(g + 1) * Cout_g],
            stride=stride, padding=padding, dilation=dilation, relu=relu)
        outs.append(og)
    out = outs[0] if groups == 1 else jnp.concatenate(outs, axis=-1)
    return jnp.transpose(out, (0, 3, 1, 2))        # back to NCHW


# ---------------------------------------------------------------------------
# Deterministic parameter initialization (PyTorch-like Conv2d/BN defaults)
# ---------------------------------------------------------------------------
def init_basic_conv(key, in_planes, out_planes, kernel_size, *, groups=1,
                    bias=False, bn=True):
    kw_, kb_ = jax.random.split(key)
    fan_in = (in_planes // groups) * kernel_size * kernel_size
    bound = 1.0 / math.sqrt(fan_in)
    params = {
        'weight': jax.random.uniform(
            kw_, (out_planes, in_planes // groups, kernel_size, kernel_size),
            jnp.float32, -bound, bound),
    }
    if bias:
        params['bias'] = jax.random.uniform(kb_, (out_planes,), jnp.float32,
                                            -bound, bound)
    if bn:
        params['bn_gamma'] = jnp.ones((out_planes,), jnp.float32)
        params['bn_beta'] = jnp.zeros((out_planes,), jnp.float32)
        params['bn_mean'] = jnp.zeros((out_planes,), jnp.float32)
        params['bn_var'] = jnp.ones((out_planes,), jnp.float32)
    return params


# ---------------------------------------------------------------------------
if __name__ == "__main__":
    key = jax.random.PRNGKey(0)
    kx, kp = jax.random.split(key)

    # Small BasicConv: Conv2d(4->32, k=3, s=1, p=1, bias=False) + BN + ReLU
    B, Cin, H, W = 2, 4, 16, 16
    Cout, ksz, stride, padding, dilation, groups = 32, 3, 1, 1, 1, 1

    params = init_basic_conv(kp, Cin, Cout, ksz, groups=groups,
                             bias=False, bn=True)
    x = jax.random.normal(kx, (B, Cin, H, W), jnp.float32)

    fwd = jax.jit(functools.partial(basic_conv_forward, stride=stride,
                                    padding=padding, dilation=dilation,
                                    groups=groups, relu=True, bn=True))
    out = fwd(params, x)
    jax.block_until_ready(out)

    # Reference: XLA conv + folded eval-mode BN + ReLU (f32 end to end).
    ref = jax.lax.conv_general_dilated(
        x, params['weight'], window_strides=(stride, stride),
        padding=[(padding, padding), (padding, padding)],
        rhs_dilation=(dilation, dilation),
        dimension_numbers=('NCHW', 'OIHW', 'NCHW'),
        feature_group_count=groups)
    inv = params['bn_gamma'] * jax.lax.rsqrt(params['bn_var'] + 1e-5)
    ref = (ref * inv[None, :, None, None]
           + (params['bn_beta'] - params['bn_mean'] * inv)[None, :, None, None])
    ref = jnp.maximum(ref, 0.0)

    assert out.shape == (B, Cout, H, W)
    assert bool(jnp.all(jnp.isfinite(out)))
    max_err = float(jnp.max(jnp.abs(out - ref)))
    # bf16 matmul inputs with f32 accumulation -> loose tolerance vs f32 ref.
    assert max_err < 5e-2, f"max abs err {max_err}"
    print("KERNEL_OK")
</pallas_src>

<mosaic_0001>
module attributes {stable_mosaic.version = 11 : i64} {
  func.func @_conv_bn_relu_kernel(%arg0: i32, %arg1: i32, %arg2: memref<3x16x18x4xbf16, #tpu.memory_space<vmem>>, %arg3: memref<3x3x4x128xbf16, #tpu.memory_space<vmem>>, %arg4: memref<1x128xf32, #tpu.memory_space<vmem>>, %arg5: memref<1x128xf32, #tpu.memory_space<vmem>>, %arg6: memref<256x128xf32, #tpu.memory_space<vmem>>) attributes {dimension_semantics = [#tpu.dimension_semantics<parallel>, #tpu.dimension_semantics<parallel>], iteration_bounds = array<i64: 2, 1>, scalar_prefetch = 0 : i64, scratch_operands = 0 : i64, tpu.core_type = #tpu.core_type<tc>, window_params = [{transform_indices = @transform_0, window_bounds = array<i64: 3, 16, 18, 4>}, {transform_indices = @transform_1, window_bounds = array<i64: 3, 3, 4, 128>}, {transform_indices = @transform_2, window_bounds = array<i64: 1, 128>}, {transform_indices = @transform_3, window_bounds = array<i64: 1, 128>}, {transform_indices = @transform_4, window_bounds = array<i64: 256, 128>}]} {
    %cst = arith.constant 0.000000e+00 : f32
    %0 = vector.broadcast %cst : f32 to vector<256x128xf32>
    %c0 = arith.constant 0 : index
    %c0_0 = arith.constant 0 : index
    %c0_1 = arith.constant 0 : index
    %c0_2 = arith.constant 0 : index
    %1 = vector.load %arg2[%c0, %c0_0, %c0_1, %c0_2] : memref<3x16x18x4xbf16, #tpu.memory_space<vmem>>, vector<1x16x16x4xbf16>
    %2 = vector.shape_cast %1 : vector<1x16x16x4xbf16> to vector<16x16x4xbf16>
    %3 = vector.shape_cast %2 : vector<16x16x4xbf16> to vector<256x4xbf16>
    %c0_3 = arith.constant 0 : index
    %c0_4 = arith.constant 0 : index
    %c0_5 = arith.constant 0 : index
    %c0_6 = arith.constant 0 : index
    %4 = vector.load %arg3[%c0_3, %c0_4, %c0_5, %c0_6] : memref<3x3x4x128xbf16, #tpu.memory_space<vmem>>, vector<1x1x4x128xbf16>
    %5 = vector.shape_cast %4 : vector<1x1x4x128xbf16> to vector<4x128xbf16>
    %cst_7 = arith.constant dense<0.000000e+00> : vector<256x128xf32>
    %6 = tpu.matmul %3, %5, %cst_7 {dimension_numbers = #tpu.dot_dimension_numbers<[1], [0], [0], [1], [0, 0, 1, 1], [], []>} : vector<256x4xbf16>, vector<4x128xbf16>, vector<256x128xf32> -> vector<256x128xf32>
    %7 = arith.addf %0, %6 : vector<256x128xf32>
    %c0_8 = arith.constant 0 : index
    %c0_9 = arith.constant 0 : index
    %c1 = arith.constant 1 : index
    %c0_10 = arith.constant 0 : index
    %8 = vector.load %arg2[%c0_8, %c0_9, %c1, %c0_10] : memref<3x16x18x4xbf16, #tpu.memory_space<vmem>>, vector<1x16x16x4xbf16>
    %9 = vector.shape_cast %8 : vector<1x16x16x4xbf16> to vector<16x16x4xbf16>
    %10 = vector.shape_cast %9 : vector<16x16x4xbf16> to vector<256x4xbf16>
    %c0_11 = arith.constant 0 : index
    %c1_12 = arith.constant 1 : index
    %c0_13 = arith.constant 0 : index
    %c0_14 = arith.constant 0 : index
    %11 = vector.load %arg3[%c0_11, %c1_12, %c0_13, %c0_14] : memref<3x3x4x128xbf16, #tpu.memory_space<vmem>>, vector<1x1x4x128xbf16>
    %12 = vector.shape_cast %11 : vector<1x1x4x128xbf16> to vector<4x128xbf16>
    %cst_15 = arith.constant dense<0.000000e+00> : vector<256x128xf32>
    %13 = tpu.matmul %10, %12, %cst_15 {dimension_numbers = #tpu.dot_dimension_numbers<[1], [0], [0], [1], [0, 0, 1, 1], [], []>} : vector<256x4xbf16>, vector<4x128xbf16>, vector<256x128xf32> -> vector<256x128xf32>
    %14 = arith.addf %7, %13 : vector<256x128xf32>
    %c0_16 = arith.constant 0 : index
    %c0_17 = arith.constant 0 : index
    %c2 = arith.constant 2 : index
    %c0_18 = arith.constant 0 : index
    %15 = vector.load %arg2[%c0_16, %c0_17, %c2, %c0_18] : memref<3x16x18x4xbf16, #tpu.memory_space<vmem>>, vector<1x16x16x4xbf16>
    %16 = vector.shape_cast %15 : vector<1x16x16x4xbf16> to vector<16x16x4xbf16>
    %17 = vector.shape_cast %16 : vector<16x16x4xbf16> to vector<256x4xbf16>
    %c0_19 = arith.constant 0 : index
    %c2_20 = arith.constant 2 : index
    %c0_21 = arith.constant 0 : index
    %c0_22 = arith.constant 0 : index
    %18 = vector.load %arg3[%c0_19, %c2_20, %c0_21, %c0_22] : memref<3x3x4x128xbf16, #tpu.memory_space<vmem>>, vector<1x1x4x128xbf16>
    %19 = vector.shape_cast %18 : vector<1x1x4x128xbf16> to vector<4x128xbf16>
    %cst_23 = arith.constant dense<0.000000e+00> : vector<256x128xf32>
    %20 = tpu.matmul %17, %19, %cst_23 {dimension_numbers = #tpu.dot_dimension_numbers<[1], [0], [0], [1], [0, 0, 1, 1], [], []>} : vector<256x4xbf16>, vector<4x128xbf16>, vector<256x128xf32> -> vector<256x128xf32>
    %21 = arith.addf %14, %20 : vector<256x128xf32>
    %c1_24 = arith.constant 1 : index
    %c0_25 = arith.constant 0 : index
    %c0_26 = arith.constant 0 : index
    %c0_27 = arith.constant 0 : index
    %22 = vector.load %arg2[%c1_24, %c0_25, %c0_26, %c0_27] : memref<3x16x18x4xbf16, #tpu.memory_space<vmem>>, vector<1x16x16x4xbf16>
    %23 = vector.shape_cast %22 : vector<1x16x16x4xbf16> to vector<16x16x4xbf16>
    %24 = vector.shape_cast %23 : vector<16x16x4xbf16> to vector<256x4xbf16>
    %c1_28 = arith.constant 1 : index
    %c0_29 = arith.constant 0 : index
    %c0_30 = arith.constant 0 : index
    %c0_31 = arith.constant 0 : index
    %25 = vector.load %arg3[%c1_28, %c0_29, %c0_30, %c0_31] : memref<3x3x4x128xbf16, #tpu.memory_space<vmem>>, vector<1x1x4x128xbf16>
    %26 = vector.shape_cast %25 : vector<1x1x4x128xbf16> to vector<4x128xbf16>
    %cst_32 = arith.constant dense<0.000000e+00> : vector<256x128xf32>
    %27 = tpu.matmul %24, %26, %cst_32 {dimension_numbers = #tpu.dot_dimension_numbers<[1], [0], [0], [1], [0, 0, 1, 1], [], []>} : vector<256x4xbf16>, vector<4x128xbf16>, vector<256x128xf32> -> vector<256x128xf32>
    %28 = arith.addf %21, %27 : vector<256x128xf32>
    %c1_33 = arith.constant 1 : index
    %c0_34 = arith.constant 0 : index
    %c1_35 = arith.constant 1 : index
    %c0_36 = arith.constant 0 : index
    %29 = vector.load %arg2[%c1_33, %c0_34, %c1_35, %c0_36] : memref<3x16x18x4xbf16, #tpu.memory_space<vmem>>, vector<1x16x16x4xbf16>
    %30 = vector.shape_cast %29 : vector<1x16x16x4xbf16> to vector<16x16x4xbf16>
    %31 = vector.shape_cast %30 : vector<16x16x4xbf16> to vector<256x4xbf16>
    %c1_37 = arith.constant 1 : index
    %c1_38 = arith.constant 1 : index
    %c0_39 = arith.constant 0 : index
    %c0_40 = arith.constant 0 : index
    %32 = vector.load %arg3[%c1_37, %c1_38, %c0_39, %c0_40] : memref<3x3x4x128xbf16, #tpu.memory_space<vmem>>, vector<1x1x4x128xbf16>
    %33 = vector.shape_cast %32 : vector<1x1x4x128xbf16> to vector<4x128xbf16>
    %cst_41 = arith.constant dense<0.000000e+00> : vector<256x128xf32>
    %34 = tpu.matmul %31, %33, %cst_41 {dimension_numbers = #tpu.dot_dimension_numbers<[1], [0], [0], [1], [0, 0, 1, 1], [], []>} : vector<256x4xbf16>, vector<4x128xbf16>, vector<256x128xf32> -> vector<256x128xf32>
    %35 = arith.addf %28, %34 : vector<256x128xf32>
    %c1_42 = arith.constant 1 : index
    %c0_43 = arith.constant 0 : index
    %c2_44 = arith.constant 2 : index
    %c0_45 = arith.constant 0 : index
    %36 = vector.load %arg2[%c1_42, %c0_43, %c2_44, %c0_45] : memref<3x16x18x4xbf16, #tpu.memory_space<vmem>>, vector<1x16x16x4xbf16>
    %37 = vector.shape_cast %36 : vector<1x16x16x4xbf16> to vector<16x16x4xbf16>
    %38 = vector.shape_cast %37 : vector<16x16x4xbf16> to vector<256x4xbf16>
    %c1_46 = arith.constant 1 : index
    %c2_47 = arith.constant 2 : index
    %c0_48 = arith.constant 0 : index
    %c0_49 = arith.constant 0 : index
    %39 = vector.load %arg3[%c1_46, %c2_47, %c0_48, %c0_49] : memref<3x3x4x128xbf16, #tpu.memory_space<vmem>>, vector<1x1x4x128xbf16>
    %40 = vector.shape_cast %39 : vector<1x1x4x128xbf16> to vector<4x128xbf16>
    %cst_50 = arith.constant dense<0.000000e+00> : vector<256x128xf32>
    %41 = tpu.matmul %38, %40, %cst_50 {dimension_numbers = #tpu.dot_dimension_numbers<[1], [0], [0], [1], [0, 0, 1, 1], [], []>} : vector<256x4xbf16>, vector<4x128xbf16>, vector<256x128xf32> -> vector<256x128xf32>
    %42 = arith.addf %35, %41 : vector<256x128xf32>
    %c2_51 = arith.constant 2 : index
    %c0_52 = arith.constant 0 : index
    %c0_53 = arith.constant 0 : index
    %c0_54 = arith.constant 0 : index
    %43 = vector.load %arg2[%c2_51, %c0_52, %c0_53, %c0_54] : memref<3x16x18x4xbf16, #tpu.memory_space<vmem>>, vector<1x16x16x4xbf16>
    %44 = vector.shape_cast %43 : vector<1x16x16x4xbf16> to vector<16x16x4xbf16>
    %45 = vector.shape_cast %44 : vector<16x16x4xbf16> to vector<256x4xbf16>
    %c2_55 = arith.constant 2 : index
    %c0_56 = arith.constant 0 : index
    %c0_57 = arith.constant 0 : index
    %c0_58 = arith.constant 0 : index
    %46 = vector.load %arg3[%c2_55, %c0_56, %c0_57, %c0_58] : memref<3x3x4x128xbf16, #tpu.memory_space<vmem>>, vector<1x1x4x128xbf16>
    %47 = vector.shape_cast %46 : vector<1x1x4x128xbf16> to vector<4x128xbf16>
    %cst_59 = arith.constant dense<0.000000e+00> : vector<256x128xf32>
    %48 = tpu.matmul %45, %47, %cst_59 {dimension_numbers = #tpu.dot_dimension_numbers<[1], [0], [0], [1], [0, 0, 1, 1], [], []>} : vector<256x4xbf16>, vector<4x128xbf16>, vector<256x128xf32> -> vector<256x128xf32>
    %49 = arith.addf %42, %48 : vector<256x128xf32>
    %c2_60 = arith.constant 2 : index
    %c0_61 = arith.constant 0 : index
    %c1_62 = arith.constant 1 : index
    %c0_63 = arith.constant 0 : index
    %50 = vector.load %arg2[%c2_60, %c0_61, %c1_62, %c0_63] : memref<3x16x18x4xbf16, #tpu.memory_space<vmem>>, vector<1x16x16x4xbf16>
    %51 = vector.shape_cast %50 : vector<1x16x16x4xbf16> to vector<16x16x4xbf16>
    %52 = vector.shape_cast %51 : vector<16x16x4xbf16> to vector<256x4xbf16>
    %c2_64 = arith.constant 2 : index
    %c1_65 = arith.constant 1 : index
    %c0_66 = arith.constant 0 : index
    %c0_67 = arith.constant 0 : index
    %53 = vector.load %arg3[%c2_64, %c1_65, %c0_66, %c0_67] : memref<3x3x4x128xbf16, #tpu.memory_space<vmem>>, vector<1x1x4x128xbf16>
    %54 = vector.shape_cast %53 : vector<1x1x4x128xbf16> to vector<4x128xbf16>
    %cst_68 = arith.constant dense<0.000000e+00> : vector<256x128xf32>
    %55 = tpu.matmul %52, %54, %cst_68 {dimension_numbers = #tpu.dot_dimension_numbers<[1], [0], [0], [1], [0, 0, 1, 1], [], []>} : vector<256x4xbf16>, vector<4x128xbf16>, vector<256x128xf32> -> vector<256x128xf32>
    %56 = arith.addf %49, %55 : vector<256x128xf32>
    %c2_69 = arith.constant 2 : index
    %c0_70 = arith.constant 0 : index
    %c2_71 = arith.constant 2 : index
    %c0_72 = arith.constant 0 : index
    %57 = vector.load %arg2[%c2_69, %c0_70, %c2_71, %c0_72] : memref<3x16x18x4xbf16, #tpu.memory_space<vmem>>, vector<1x16x16x4xbf16>
    %58 = vector.shape_cast %57 : vector<1x16x16x4xbf16> to vector<16x16x4xbf16>
    %59 = vector.shape_cast %58 : vector<16x16x4xbf16> to vector<256x4xbf16>
    %c2_73 = arith.constant 2 : index
    %c2_74 = arith.constant 2 : index
    %c0_75 = arith.constant 0 : index
    %c0_76 = arith.constant 0 : index
    %60 = vector.load %arg3[%c2_73, %c2_74, %c0_75, %c0_76] : memref<3x3x4x128xbf16, #tpu.memory_space<vmem>>, vector<1x1x4x128xbf16>
    %61 = vector.shape_cast %60 : vector<1x1x4x128xbf16> to vector<4x128xbf16>
    %cst_77 = arith.constant dense<0.000000e+00> : vector<256x128xf32>
    %62 = tpu.matmul %59, %61, %cst_77 {dimension_numbers = #tpu.dot_dimension_numbers<[1], [0], [0], [1], [0, 0, 1, 1], [], []>} : vector<256x4xbf16>, vector<4x128xbf16>, vector<256x128xf32> -> vector<256x128xf32>
    %63 = arith.addf %56, %62 : vector<256x128xf32>
    %c0_78 = arith.constant 0 : index
    %c0_79 = arith.constant 0 : index
    %64 = vector.load %arg4[%c0_78, %c0_79] : memref<1x128xf32, #tpu.memory_space<vmem>>, vector<1x128xf32>
    %65 = vector.broadcast %64 : vector<1x128xf32> to vector<256x128xf32>
    %66 = arith.mulf %63, %65 : vector<256x128xf32>
    %c0_80 = arith.constant 0 : index
    %c0_81 = arith.constant 0 : index
    %67 = vector.load %arg5[%c0_80, %c0_81] : memref<1x128xf32, #tpu.memory_space<vmem>>, vector<1x128xf32>
    %68 = vector.broadcast %67 : vector<1x128xf32> to vector<256x128xf32>
    %69 = arith.addf %66, %68 : vector<256x128xf32>
    %cst_82 = arith.constant 0.000000e+00 : f32
    %70 = vector.broadcast %cst_82 : f32 to vector<256x128xf32>
    %71 = arith.maximumf %69, %70 : vector<256x128xf32>
    %c0_83 = arith.constant 0 : index
    %c0_84 = arith.constant 0 : index
    %72 = vector.load %arg6[%c0_83, %c0_84] : memref<256x128xf32, #tpu.memory_space<vmem>>, vector<256x128xf32>
    tpu.vector_store %arg6[%c0_83, %c0_84], %71 {strides = array<i32>} : memref<256x128xf32, #tpu.memory_space<vmem>>, vector<256x128xf32>,
    return
  }
  func.func @transform_0(%arg0: i32, %arg1: i32) -> (i32, i32, i32, i32) {
    %c0_i32 = arith.constant 0 : i32
    %c0_i32_0 = arith.constant 0 : i32
    %c0_i32_1 = arith.constant 0 : i32
    %c0_i32_2 = arith.constant 0 : i32
    return %c0_i32, %arg0, %c0_i32_0, %c0_i32_1 : i32, i32, i32, i32
  }
  func.func @transform_1(%arg0: i32, %arg1: i32) -> (i32, i32, i32, i32) {
    %c0_i32 = arith.constant 0 : i32
    %c0_i32_0 = arith.constant 0 : i32
    %c0_i32_1 = arith.constant 0 : i32
    %c0_i32_2 = arith.constant 0 : i32
    return %c0_i32, %c0_i32_0, %c0_i32_1, %arg1 : i32, i32, i32, i32
  }
  func.func @transform_2(%arg0: i32, %arg1: i32) -> (i32, i32) {
    %c0_i32 = arith.constant 0 : i32
    %c0_i32_0 = arith.constant 0 : i32
    return %c0_i32, %arg1 : i32, i32
  }
  func.func @transform_3(%arg0: i32, %arg1: i32) -> (i32, i32) {
    %c0_i32 = arith.constant 0 : i32
    %c0_i32_0 = arith.constant 0 : i32
    return %c0_i32, %arg1 : i32, i32
  }
  func.func @transform_4(%arg0: i32, %arg1: i32) -> (i32, i32) {
    %c0_i32 = arith.constant 0 : i32
    return %arg0, %arg1 : i32, i32
  }
}

</mosaic_0001>

<llo_original>
// kernel: basic_conv_forward.1
$region0: #{basic_conv_forward.1}
  #allocation0 [shape = 'u32[]', space=smem, size = 0x4, offset = 0x4, fixed_abs, tag = 'smem constant byte address 0x4 - core index']
  #allocation1 [shape = 'u32[144,128]{1,0:T(1,128)}', space=vmem, size = 0x12000, scoped, tag = 'internal scratch']
  %s0 = inlined_call_operand.vmem [shape: bf16[3,32,18,4], index: 0, kind: input, shape index: {}]
  %s1 = inlined_call_operand.vmem [shape: bf16[3,3,4,128], index: 1, kind: input, shape index: {}]
  %s2 = inlined_call_operand.vmem [shape: f32[1,128], index: 2, kind: input, shape index: {}]
  %s3 = inlined_call_operand.vmem [shape: f32[1,128], index: 3, kind: input, shape index: {}]
  %s4 = inlined_call_operand.hbm [shape: f32[512,128], index: 4, kind: output, shape index: {}]
  %s5 = sld [smem:[#allocation0]]
  $region90: #{basic_conv_forward.1} parent=0
    _
  %s7 = ssub.s32 1, %s5
  %s8 = scalar_select 0, %s7, %s5
  $region1: #{basic_conv_forward.1} parent=0
    #allocation2 [shape = 'u8[589824]{0}', space=vmem, size = 0x90000, scoped, tag = 'input window, operand 0']
    #allocation3 [shape = 'u8[262144]{0}', space=vmem, size = 0x40000, scoped, tag = 'output window, operand 0']
    #allocation4 [shape = 's32[2]{0}', space=sflag, size = 0x8, scoped, tag = 'scoped memory for basic_conv_forward.1']
    %9 = vsyncpa [#allocation4], 0
    %s10 = scalar_lea.sflag [#allocation4], 1
    %11 = vsyncpa %s10, 0
    loop: start=0, step=1, limit=4
    $region2: #{basic_conv_forward.1} parent=1 // loop_pre_header
      _
    $region3: #{basic_conv_forward.1} parent=1 // loop_header
      %s13 = sphi 0, %s17
      %p14 = scmp.ge.s32.totalorder %s13, 4
      %s20 = sphi 0, %s32
      %s21 = sphi 0, %s28
      %s22 = sphi 0, %s20
      %s23 = sphi 0, %s21
      %s24 = sphi 0, %s22
      %s25 = sphi 0, %s23
      %s35 = sphi 0, %s37
      %s38 = sphi 0, %s35
      %s39 = sphi 0, %s38
      %s55 = sphi 0, %s39
      %s61 = sphi 0, %s63
      %s64 = sphi 0, %s61
      %s65 = sphi 0, %s64
      %s81 = sphi 0, %s65
      %s87 = sphi 0, %s89
      %s90 = sphi 0, %s87
      %s91 = sphi 0, %s90
      %s107 = sphi 0, %s91
      %s113 = sphi 0, %s115
      %s116 = sphi 0, %s113
      %s117 = sphi 0, %s116
      %s133 = sphi 0, %s117
      %s141 = sphi 0, %s143
      %s144 = sphi 0, %s141
      %s145 = sphi 0, %s144
      %s161 = sphi 0, %s145
    $region4: #{basic_conv_forward.1} parent=1 // loop_header_branch
      %16 = sbr.rel (%p14) target = $region8
    $region5: #{basic_conv_forward.1} parent=1 // loop_body
      %s18 = ssub.s32 %s13, 1
      %s19 = ssub.s32 %s13, 2
      %s26 = sadd.s32 1, %s21
      %p27 = scmp.ge.s32.totalorder %s26, 1
      %s28 = scalar_select %p27, 0, %s26
      %s29 = sadd.s32 1, %s20
      %s30 = scalar_select %p27, %s29, %s20
      %p31 = scmp.ge.s32.totalorder %s30, 2
      %s32 = scalar_select %p31, 0, %s30
      %s33 = ssub.s32 %s20, %s32
      %p34 = scmp.eq.s32.totalorder %s33, 0
      %s36 = sadd.s32 %s35, 1
      %s37 = scalar_select %p34, %s35, %s36
      %p40 = pneg %p34
      %p41 = scmp.eq.s32.totalorder %s13, 1
      %p42 = por %p40, %p41
      %p43 = scmp.ne.s32.totalorder %s35, %s38
      %p44 = scmp.eq.s32.totalorder %s13, 0
      %p45 = por %p43, %p44
      %p46 = scmp.ne.s32.totalorder %s35, %s38
      %p47 = scmp.eq.s32.totalorder %s18, 1
      %p48 = por %p46, %p47
      %p49 = scmp.ne.s32.totalorder %s38, %s39
      %p50 = scmp.eq.s32.totalorder %s18, 0
      %p51 = por %p49, %p50
      %p52 = scmp.ne.s32.totalorder %s38, %s39
      %p53 = scmp.eq.s32.totalorder %s19, 1
      %p54 = por %p52, %p53
      %p56 = scmp.ne.s32.totalorder %s39, %s55
      %p57 = scmp.eq.s32.totalorder %s19, 0
      %p58 = por %p56, %p57
      %s59 = ssub.s32 %s21, %s28
      %p60 = scmp.eq.s32.totalorder %s59, 0
      %s62 = sadd.s32 %s61, 1
      %s63 = scalar_select %p60, %s61, %s62
      %p66 = pneg %p60
      %p67 = scmp.eq.s32.totalorder %s13, 1
      %p68 = por %p66, %p67
      %p69 = scmp.ne.s32.totalorder %s61, %s64
      %p70 = scmp.eq.s32.totalorder %s13, 0
      %p71 = por %p69, %p70
      %p72 = scmp.ne.s32.totalorder %s61, %s64
      %p73 = scmp.eq.s32.totalorder %s18, 1
      %p74 = por %p72, %p73
      %p75 = scmp.ne.s32.totalorder %s64, %s65
      %p76 = scmp.eq.s32.totalorder %s18, 0
      %p77 = por %p75, %p76
      %p78 = scmp.ne.s32.totalorder %s64, %s65
      %p79 = scmp.eq.s32.totalorder %s19, 1
      %p80 = por %p78, %p79
      %p82 = scmp.ne.s32.totalorder %s65, %s81
      %p83 = scmp.eq.s32.totalorder %s19, 0
      %p84 = por %p82, %p83
      %s85 = ssub.s32 %s21, %s28
      %p86 = scmp.eq.s32.totalorder %s85, 0
      %s88 = sadd.s32 %s87, 1
      %s89 = scalar_select %p86, %s87, %s88
      %p92 = pneg %p86
      %p93 = scmp.eq.s32.totalorder %s13, 1
      %p94 = por %p92, %p93
      %p95 = scmp.ne.s32.totalorder %s87, %s90
      %p96 = scmp.eq.s32.totalorder %s13, 0
      %p97 = por %p95, %p96
      %p98 = scmp.ne.s32.totalorder %s87, %s90
      %p99 = scmp.eq.s32.totalorder %s18, 1
      %p100 = por %p98, %p99
      %p101 = scmp.ne.s32.totalorder %s90, %s91
      %p102 = scmp.eq.s32.totalorder %s18, 0
      %p103 = por %p101, %p102
      %p104 = scmp.ne.s32.totalorder %s90, %s91
      %p105 = scmp.eq.s32.totalorder %s19, 1
      %p106 = por %p104, %p105
      %p108 = scmp.ne.s32.totalorder %s91, %s107
      %p109 = scmp.eq.s32.totalorder %s19, 0
      %p110 = por %p108, %p109
      %s111 = ssub.s32 %s21, %s28
      %p112 = scmp.eq.s32.totalorder %s111, 0
      %s114 = sadd.s32 %s113, 1
      %s115 = scalar_select %p112, %s113, %s114
      %p118 = pneg %p112
      %p119 = scmp.eq.s32.totalorder %s13, 1
      %p120 = por %p118, %p119
      %p121 = scmp.ne.s32.totalorder %s113, %s116
      %p122 = scmp.eq.s32.totalorder %s13, 0
      %p123 = por %p121, %p122
      %p124 = scmp.ne.s32.totalorder %s113, %s116
      %p125 = scmp.eq.s32.totalorder %s18, 1
      %p126 = por %p124, %p125
      %p127 = scmp.ne.s32.totalorder %s116, %s117
      %p128 = scmp.eq.s32.totalorder %s18, 0
      %p129 = por %p127, %p128
      %p130 = scmp.ne.s32.totalorder %s116, %s117
      %p131 = scmp.eq.s32.totalorder %s19, 1
      %p132 = por %p130, %p131
      %p134 = scmp.ne.s32.totalorder %s117, %s133
      %p135 = scmp.eq.s32.totalorder %s19, 0
      %p136 = por %p134, %p135
      %s137 = ssub.s32 %s20, %s32
      %s138 = ssub.s32 %s21, %s28
      %s139 = sor.u32 %s137, %s138
      %p140 = scmp.eq.s32.totalorder %s139, 0
      %s142 = sadd.s32 %s141, 1
      %s143 = scalar_select %p140, %s141, %s142
      %p146 = pneg %p140
      %p147 = scmp.eq.s32.totalorder %s13, 1
      %p148 = por %p146, %p147
      %p149 = scmp.ne.s32.totalorder %s141, %s144
      %p150 = scmp.eq.s32.totalorder %s13, 0
      %p151 = por %p149, %p150
      %p152 = scmp.ne.s32.totalorder %s141, %s144
      %p153 = scmp.eq.s32.totalorder %s18, 1
      %p154 = por %p152, %p153
      %p155 = scmp.ne.s32.totalorder %s144, %s145
      %p156 = scmp.eq.s32.totalorder %s18, 0
      %p157 = por %p155, %p156
      %p158 = scmp.ne.s32.totalorder %s144, %s145
      %p159 = scmp.eq.s32.totalorder %s19, 1
      %p160 = por %p158, %p159
      %p162 = scmp.ne.s32.totalorder %s145, %s161
      %p163 = scmp.eq.s32.totalorder %s19, 0
      %p164 = por %p162, %p163
      %p165 = scmp.le.s32.totalorder 1, %s13
      %p166 = scmp.lt.s32.totalorder %s13, 3
      %p167 = pnand %p165, %p166
      %p168 = pneg %p167
      // Predicated region
      $region9: #{basic_conv_forward.1} parent=5 // pred_check
        _
      $region10: #{basic_conv_forward.1} parent=5 // pred_check_branch
        %170 = sbr.rel (%p167) target = $region12
      $region11: #{basic_conv_forward.1} parent=5 // pred_region
        %s171 = ssub.s32 %s13, 1
        // Predicated region
        $region13: #{basic_conv_forward.1} parent=11 // pred_check
          %p172 = pneg %p77
        $region14: #{basic_conv_forward.1} parent=11 // pred_check_branch
          %174 = sbr.rel (%p172) target = $region16
        $region15: #{basic_conv_forward.1} parent=11 // pred_region
          %p175 = scmp.lt.s32.totalorder %s23, 0
          %s176 = scalar_select %p175, %s23, 0
          %s177 = smul.addr %s176, 2
          %s178 = scalar_lea.vmem %s1, %s177
        $region16: #{basic_conv_forward.1} parent=11 // pred_fallthru
          _
        // Predicated region
        $region17: #{basic_conv_forward.1} parent=11 // pred_check
          %p179 = pneg %p103
        $region18: #{basic_conv_forward.1} parent=11 // pred_check_branch
          %181 = sbr.rel (%p179) target = $region20
        $region19: #{basic_conv_forward.1} parent=11 // pred_region
          %p182 = scmp.lt.s32.totalorder %s23, 0
          %s183 = scalar_select %p182, %s23, 0
          %s184 = scalar_lea.vmem %s2, %s183
        $region20: #{basic_conv_forward.1} parent=11 // pred_fallthru
          _
        // Predicated region
        $region21: #{basic_conv_forward.1} parent=11 // pred_check
          %p185 = pneg %p129
        $region22: #{basic_conv_forward.1} parent=11 // pred_check_branch
          %187 = sbr.rel (%p185) target = $region24
        $region23: #{basic_conv_forward.1} parent=11 // pred_region
          %p188 = scmp.lt.s32.totalorder %s23, 0
          %s189 = scalar_select %p188, %s23, 0
          %s190 = scalar_lea.vmem %s3, %s189
        $region24: #{basic_conv_forward.1} parent=11 // pred_fallthru
          _
      $region12: #{basic_conv_forward.1} parent=5 // pred_fallthru
        _
      %p191 = scmp.lt.s32.totalorder %s13, 2
      // Predicated region
      $region25: #{basic_conv_forward.1} parent=5 // pred_check
        %p192 = pneg %p191
      $region26: #{basic_conv_forward.1} parent=5 // pred_check_branch
        %194 = sbr.rel (%p192) target = $region28
      $region27: #{basic_conv_forward.1} parent=5 // pred_region
        // Predicated region
        $region29: #{basic_conv_forward.1} parent=27 // pred_check
          %p195 = pneg %p45
        $region30: #{basic_conv_forward.1} parent=27 // pred_check_branch
          %197 = sbr.rel (%p195) target = $region32
        $region31: #{basic_conv_forward.1} parent=27 // pred_region
          %s198 = sand.u32 %s35, 1
          %s199 = sand.u32 %s35, 1
          %s200 = smul.addr %s199, 576
          %s201 = scalar_lea.vmem [#allocation2], %s200
          %s202 = smul.u32 16, %s20
          %s203 = smul.addr %s202, 3
          %s204 = smul.addr %s203, 4
          %s205 = scalar_lea.vmem %s0, %s204
          // Predicated region
          $region33: #{basic_conv_forward.1} parent=31 // pred_check
            _
          $region34: #{basic_conv_forward.1} parent=31 // pred_check_branch
            %207 = sbr.rel (0) target = $region36
          $region35: #{basic_conv_forward.1} parent=31 // pred_region
            // Predicated region
            $region37: #{basic_conv_forward.1} parent=35 // pred_check
              _
            $region38: #{basic_conv_forward.1} parent=35 // pred_check_branch
              %209 = sbr.rel target = $region40
            $region39: #{basic_conv_forward.1} parent=35 // pred_region
              // Predicated region
              $region52: #{basic_conv_forward.1} parent=39 // pred_check
                _
              $region53: #{basic_conv_forward.1} parent=39 // pred_check_branch
                %511 = sbr.rel (0) target = $region55
              $region54: #{basic_conv_forward.1} parent=39 // pred_region
                loop: start=0, step=1, limit=1
                $region56: #{basic_conv_forward.1} parent=54 // loop_pre_header
                  _
                $region57: #{basic_conv_forward.1} parent=54 // loop_header
                  %s513 = sphi 0, %s517
                  %p514 = scmp.ge.s32.totalorder %s513, 1
                  %s518 = sphi %s205, %s205
                  %s519 = sphi %s201, %s201
                $region58: #{basic_conv_forward.1} parent=54 // loop_header_branch
                  %516 = sbr.rel (%p514) target = $region62
                $region59: #{basic_conv_forward.1} parent=54 // loop_body
                  _
                $region60: #{basic_conv_forward.1} parent=54 // loop_footer
                  %s517 = sadd.s32 1, %s513
                $region61: #{basic_conv_forward.1} parent=54 // loop_footer_branch
                  %512 = sbr.rel target = $region57
                $region62: #{basic_conv_forward.1} parent=54 // loop_exit
                  _
                %s521 = ssub.s32 16, 1
                loop: start=0, step=1, limit=1
                $region63: #{basic_conv_forward.1} parent=54 // loop_pre_header
                  _
                $region64: #{basic_conv_forward.1} parent=54 // loop_header
                  %s523 = sphi 0, %s527
                  %p524 = scmp.ge.s32.totalorder %s523, 1
                  %s528 = sphi %s205, %s205
                  %s529 = sphi %s201, %s201
                $region65: #{basic_conv_forward.1} parent=54 // loop_header_branch
                  %526 = sbr.rel (%p524) target = $region69
                $region66: #{basic_conv_forward.1} parent=54 // loop_body
                  %v530 = vld [vmem:[%s528] sm:%s521]
                  %531 = vst [vmem:[%s529] sm:%s521] %v530
                  %v532 = vld [vmem:[%s528 + $0x4] sm:%s521]
                  %533 = vst [vmem:[%s529 + $0x4] sm:%s521] %v532
                  %v534 = vld [vmem:[%s528 + $0x8] sm:%s521]
                  %535 = vst [vmem:[%s529 + $0x8] sm:%s521] %v534
                  %v536 = vld [vmem:[%s528 + $0xc] sm:%s521]
                  %537 = vst [vmem:[%s529 + $0xc] sm:%s521] %v536
                  %v538 = vld [vmem:[%s528 + $0x10] sm:%s521]
                  %539 = vst [vmem:[%s529 + $0x10] sm:%s521] %v538
                  %v540 = vld [vmem:[%s528 + $0x14] sm:%s521]
                  %541 = vst [vmem:[%s529 + $0x14] sm:%s521] %v540
                  %v542 = vld [vmem:[%s528 + $0x18] sm:%s521]
                  %543 = vst [vmem:[%s529 + $0x18] sm:%s521] %v542
                  %v544 = vld [vmem:[%s528 + $0x1c] sm:%s521]
                  %545 = vst [vmem:[%s529 + $0x1c] sm:%s521] %v544
                  %v546 = vld [vmem:[%s528 + $0x20] sm:%s521]
                  %547 = vst [vmem:[%s529 + $0x20] sm:%s521] %v546
                  %v548 = vld [vmem:[%s528 + $0x24] sm:%s521]
                  %549 = vst [vmem:[%s529 + $0x24] sm:%s521] %v548
                  %v550 = vld [vmem:[%s528 + $0x28] sm:%s521]
                  %551 = vst [vmem:[%s529 + $0x28] sm:%s521] %v550
                  %v552 = vld [vmem:[%s528 + $0x2c] sm:%s521]
                  %553 = vst [vmem:[%s529 + $0x2c] sm:%s521] %v552
                  %v554 = vld [vmem:[%s528 + $0x30] sm:%s521]
                  %555 = vst [vmem:[%s529 + $0x30] sm:%s521] %v554
                  %v556 = vld [vmem:[%s528 + $0x34] sm:%s521]
                  %557 = vst [vmem:[%s529 + $0x34] sm:%s521] %v556
                  %v558 = vld [vmem:[%s528 + $0x38] sm:%s521]
                  %559 = vst [vmem:[%s529 + $0x38] sm:%s521] %v558
                  %v560 = vld [vmem:[%s528 + $0x3c] sm:%s521]
                  %561 = vst [vmem:[%s529 + $0x3c] sm:%s521] %v560
                  %v562 = vld [vmem:[%s528 + $0x40] sm:%s521]
                  %563 = vst [vmem:[%s529 + $0x40] sm:%s521] %v562
                  %v564 = vld [vmem:[%s528 + $0x44] sm:%s521]
                  %565 = vst [vmem:[%s529 + $0x44] sm:%s521] %v564
                  %v566 = vld [vmem:[%s528 + $0x48] sm:%s521]
                  %567 = vst [vmem:[%s529 + $0x48] sm:%s521] %v566
                  %v568 = vld [vmem:[%s528 + $0x4c] sm:%s521]
                  %569 = vst [vmem:[%s529 + $0x4c] sm:%s521] %v568
                  %v570 = vld [vmem:[%s528 + $0x50] sm:%s521]
                  %571 = vst [vmem:[%s529 + $0x50] sm:%s521] %v570
                  %v572 = vld [vmem:[%s528 + $0x54] sm:%s521]
                  %573 = vst [vmem:[%s529 + $0x54] sm:%s521] %v572
                  %v574 = vld [vmem:[%s528 + $0x58] sm:%s521]
                  %575 = vst [vmem:[%s529 + $0x58] sm:%s521] %v574
                  %v576 = vld [vmem:[%s528 + $0x5c] sm:%s521]
                  %577 = vst [vmem:[%s529 + $0x5c] sm:%s521] %v576
                  %v578 = vld [vmem:[%s528 + $0x60] sm:%s521]
                  %579 = vst [vmem:[%s529 + $0x60] sm:%s521] %v578
                  %v580 = vld [vmem:[%s528 + $0x64] sm:%s521]
                  %581 = vst [vmem:[%s529 + $0x64] sm:%s521] %v580
                  %v582 = vld [vmem:[%s528 + $0x68] sm:%s521]
                  %583 = vst [vmem:[%s529 + $0x68] sm:%s521] %v582
                  %v584 = vld [vmem:[%s528 + $0x6c] sm:%s521]
                  %585 = vst [vmem:[%s529 + $0x6c] sm:%s521] %v584
                  %v586 = vld [vmem:[%s528 + $0x70] sm:%s521]
                  %587 = vst [vmem:[%s529 + $0x70] sm:%s521] %v586
                  %v588 = vld [vmem:[%s528 + $0x74] sm:%s521]
                  %589 = vst [vmem:[%s529 + $0x74] sm:%s521] %v588
                  %v590 = vld [vmem:[%s528 + $0x78] sm:%s521]
                  %591 = vst [vmem:[%s529 + $0x78] sm:%s521] %v590
                  %v592 = vld [vmem:[%s528 + $0x7c] sm:%s521]
                  %593 = vst [vmem:[%s529 + $0x7c] sm:%s521] %v592
                  %v594 = vld [vmem:[%s528 + $0x80] sm:%s521]
                  %595 = vst [vmem:[%s529 + $0x80] sm:%s521] %v594
                  %v596 = vld [vmem:[%s528 + $0x84] sm:%s521]
                  %597 = vst [vmem:[%s529 + $0x84] sm:%s521] %v596
                  %v598 = vld [vmem:[%s528 + $0x88] sm:%s521]
                  %599 = vst [vmem:[%s529 + $0x88] sm:%s521] %v598
                  %v600 = vld [vmem:[%s528 + $0x8c] sm:%s521]
                  %601 = vst [vmem:[%s529 + $0x8c] sm:%s521] %v600
                  %v602 = vld [vmem:[%s528 + $0x90] sm:%s521]
                  %603 = vst [vmem:[%s529 + $0x90] sm:%s521] %v602
                  %v604 = vld [vmem:[%s528 + $0x94] sm:%s521]
                  %605 = vst [vmem:[%s529 + $0x94] sm:%s521] %v604
                  %v606 = vld [vmem:[%s528 + $0x98] sm:%s521]
                  %607 = vst [vmem:[%s529 + $0x98] sm:%s521] %v606
                  %v608 = vld [vmem:[%s528 + $0x9c] sm:%s521]
                  %609 = vst [vmem:[%s529 + $0x9c] sm:%s521] %v608
                  %v610 = vld [vmem:[%s528 + $0xa0] sm:%s521]
                  %611 = vst [vmem:[%s529 + $0xa0] sm:%s521] %v610
                  %v612 = vld [vmem:[%s528 + $0xa4] sm:%s521]
                  %613 = vst [vmem:[%s529 + $0xa4] sm:%s521] %v612
                  %v614 = vld [vmem:[%s528 + $0xa8] sm:%s521]
                  %615 = vst [vmem:[%s529 + $0xa8] sm:%s521] %v614
                  %v616 = vld [vmem:[%s528 + $0xac] sm:%s521]
                  %617 = vst [vmem:[%s529 + $0xac] sm:%s521] %v616
                  %v618 = vld [vmem:[%s528 + $0xb0] sm:%s521]
                  %619 = vst [vmem:[%s529 + $0xb0] sm:%s521] %v618
                  %v620 = vld [vmem:[%s528 + $0xb4] sm:%s521]
                  %621 = vst [vmem:[%s529 + $0xb4] sm:%s521] %v620
                  %v622 = vld [vmem:[%s528 + $0xb8] sm:%s521]
                  %623 = vst [vmem:[%s529 + $0xb8] sm:%s521] %v622
                  %v624 = vld [vmem:[%s528 + $0xbc] sm:%s521]
                  %625 = vst [vmem:[%s529 + $0xbc] sm:%s521] %v624
                  %v626 = vld [vmem:[%s528 + $0x180] sm:%s521]
                  %627 = vst [vmem:[%s529 + $0xc0] sm:%s521] %v626
                  %v628 = vld [vmem:[%s528 + $0x184] sm:%s521]
                  %629 = vst [vmem:[%s529 + $0xc4] sm:%s521] %v628
                  %v630 = vld [vmem:[%s528 + $0x188] sm:%s521]
                  %631 = vst [vmem:[%s529 + $0xc8] sm:%s521] %v630
                  %v632 = vld [vmem:[%s528 + $0x18c] sm:%s521]
                  %633 = vst [vmem:[%s529 + $0xcc] sm:%s521] %v632
                  %v634 = vld [vmem:[%s528 + $0x190] sm:%s521]
                  %635 = vst [vmem:[%s529 + $0xd0] sm:%s521] %v634
                  %v636 = vld [vmem:[%s528 + $0x194] sm:%s521]
                  %637 = vst [vmem:[%s529 + $0xd4] sm:%s521] %v636
                  %v638 = vld [vmem:[%s528 + $0x198] sm:%s521]
                  %639 = vst [vmem:[%s529 + $0xd8] sm:%s521] %v638
                  %v640 = vld [vmem:[%s528 + $0x19c] sm:%s521]
                  %641 = vst [vmem:[%s529 + $0xdc] sm:%s521] %v640
                  %v642 = vld [vmem:[%s528 + $0x1a0] sm:%s521]
                  %643 = vst [vmem:[%s529 + $0xe0] sm:%s521] %v642
                  %v644 = vld [vmem:[%s528 + $0x1a4] sm:%s521]
                  %645 = vst [vmem:[%s529 + $0xe4] sm:%s521] %v644
                  %v646 = vld [vmem:[%s528 + $0x1a8] sm:%s521]
                  %647 = vst [vmem:[%s529 + $0xe8] sm:%s521] %v646
                  %v648 = vld [vmem:[%s528 + $0x1ac] sm:%s521]
                  %649 = vst [vmem:[%s529 + $0xec] sm:%s521] %v648
                  %v650 = vld [vmem:[%s528 + $0x1b0] sm:%s521]
                  %651 = vst [vmem:[%s529 + $0xf0] sm:%s521] %v650
                  %v652 = vld [vmem:[%s528 + $0x1b4] sm:%s521]
                  %653 = vst [vmem:[%s529 + $0xf4] sm:%s521] %v652
                  %v654 = vld [vmem:[%s528 + $0x1b8] sm:%s521]
                  %655 = vst [vmem:[%s529 + $0xf8] sm:%s521] %v654
                  %v656 = vld [vmem:[%s528 + $0x1bc] sm:%s521]
                  %657 = vst [vmem:[%s529 + $0xfc] sm:%s521] %v656
                  %v658 = vld [vmem:[%s528 + $0x1c0] sm:%s521]
                  %659 = vst [vmem:[%s529 + $0x100] sm:%s521] %v658
                  %v660 = vld [vmem:[%s528 + $0x1c4] sm:%s521]
                  %661 = vst [vmem:[%s529 + $0x104] sm:%s521] %v660
                  %v662 = vld [vmem:[%s528 + $0x1c8] sm:%s521]
                  %663 = vst [vmem:[%s529 + $0x108] sm:%s521] %v662
                  %v664 = vld [vmem:[%s528 + $0x1cc] sm:%s521]
                  %665 = vst [vmem:[%s529 + $0x10c] sm:%s521] %v664
                  %v666 = vld [vmem:[%s528 + $0x1d0] sm:%s521]
                  %667 = vst [vmem:[%s529 + $0x110] sm:%s521] %v666
                  %v668 = vld [vmem:[%s528 + $0x1d4] sm:%s521]
                  %669 = vst [vmem:[%s529 + $0x114] sm:%s521] %v668
                  %v670 = vld [vmem:[%s528 + $0x1d8] sm:%s521]
                  %671 = vst [vmem:[%s529 + $0x118] sm:%s521] %v670
                  %v672 = vld [vmem:[%s528 + $0x1dc] sm:%s521]
                  %673 = vst [vmem:[%s529 + $0x11c] sm:%s521] %v672
                  %v674 = vld [vmem:[%s528 + $0x1e0] sm:%s521]
                  %675 = vst [vmem:[%s529 + $0x120] sm:%s521] %v674
                  %v676 = vld [vmem:[%s528 + $0x1e4] sm:%s521]
                  %677 = vst [vmem:[%s529 + $0x124] sm:%s521] %v676
                  %v678 = vld [vmem:[%s528 + $0x1e8] sm:%s521]
                  %679 = vst [vmem:[%s529 + $0x128] sm:%s521] %v678
                  %v680 = vld [vmem:[%s528 + $0x1ec] sm:%s521]
                  %681 = vst [vmem:[%s529 + $0x12c] sm:%s521] %v680
                  %v682 = vld [vmem:[%s528 + $0x1f0] sm:%s521]
                  %683 = vst [vmem:[%s529 + $0x130] sm:%s521] %v682
                  %v684 = vld [vmem:[%s528 + $0x1f4] sm:%s521]
                  %685 = vst [vmem:[%s529 + $0x134] sm:%s521] %v684
                  %v686 = vld [vmem:[%s528 + $0x1f8] sm:%s521]
                  %687 = vst [vmem:[%s529 + $0x138] sm:%s521] %v686
                  %v688 = vld [vmem:[%s528 + $0x1fc] sm:%s521]
                  %689 = vst [vmem:[%s529 + $0x13c] sm:%s521] %v688
                  %v690 = vld [vmem:[%s528 + $0x200] sm:%s521]
                  %691 = vst [vmem:[%s529 + $0x140] sm:%s521] %v690
                  %v692 = vld [vmem:[%s528 + $0x204] sm:%s521]
                  %693 = vst [vmem:[%s529 + $0x144] sm:%s521] %v692
                  %v694 = vld [vmem:[%s528 + $0x208] sm:%s521]
                  %695 = vst [vmem:[%s529 + $0x148] sm:%s521] %v694
                  %v696 = vld [vmem:[%s528 + $0x20c] sm:%s521]
                  %697 = vst [vmem:[%s529 + $0x14c] sm:%s521] %v696
                  %v698 = vld [vmem:[%s528 + $0x210] sm:%s521]
                  %699 = vst [vmem:[%s529 + $0x150] sm:%s521] %v698
                  %v700 = vld [vmem:[%s528 + $0x214] sm:%s521]
                  %701 = vst [vmem:[%s529 + $0x154] sm:%s521] %v700
                  %v702 = vld [vmem:[%s528 + $0x218] sm:%s521]
                  %703 = vst [vmem:[%s529 + $0x158] sm:%s521] %v702
                  %v704 = vld [vmem:[%s528 + $0x21c] sm:%s521]
                  %705 = vst [vmem:[%s529 + $0x15c] sm:%s521] %v704
                  %v706 = vld [vmem:[%s528 + $0x220] sm:%s521]
                  %707 = vst [vmem:[%s529 + $0x160] sm:%s521] %v706
                  %v708 = vld [vmem:[%s528 + $0x224] sm:%s521]
                  %709 = vst [vmem:[%s529 + $0x164] sm:%s521] %v708
                  %v710 = vld [vmem:[%s528 + $0x228] sm:%s521]
                  %711 = vst [vmem:[%s529 + $0x168] sm:%s521] %v710
                  %v712 = vld [vmem:[%s528 + $0x22c] sm:%s521]
                  %713 = vst [vmem:[%s529 + $0x16c] sm:%s521] %v712
                  %v714 = vld [vmem:[%s528 + $0x230] sm:%s521]
                  %715 = vst [vmem:[%s529 + $0x170] sm:%s521] %v714
                  %v716 = vld [vmem:[%s528 + $0x234] sm:%s521]
                  %717 = vst [vmem:[%s529 + $0x174] sm:%s521] %v716
                  %v718 = vld [vmem:[%s528 + $0x238] sm:%s521]
                  %719 = vst [vmem:[%s529 + $0x178] sm:%s521] %v718
                  %v720 = vld [vmem:[%s528 + $0x23c] sm:%s521]
                  %721 = vst [vmem:[%s529 + $0x17c] sm:%s521] %v720
                  %v722 = vld [vmem:[%s528 + $0x300] sm:%s521]
                  %723 = vst [vmem:[%s529 + $0x180] sm:%s521] %v722
                  %v724 = vld [vmem:[%s528 + $0x304] sm:%s521]
                  %725 = vst [vmem:[%s529 + $0x184] sm:%s521] %v724
                  %v726 = vld [vmem:[%s528 + $0x308] sm:%s521]
                  %727 = vst [vmem:[%s529 + $0x188] sm:%s521] %v726
                  %v728 = vld [vmem:[%s528 + $0x30c] sm:%s521]
                  %729 = vst [vmem:[%s529 + $0x18c] sm:%s521] %v728
                  %v730 = vld [vmem:[%s528 + $0x310] sm:%s521]
                  %731 = vst [vmem:[%s529 + $0x190] sm:%s521] %v730
                  %v732 = vld [vmem:[%s528 + $0x314] sm:%s521]
                  %733 = vst [vmem:[%s529 + $0x194] sm:%s521] %v732
                  %v734 = vld [vmem:[%s528 + $0x318] sm:%s521]
                  %735 = vst [vmem:[%s529 + $0x198] sm:%s521] %v734
                  %v736 = vld [vmem:[%s528 + $0x31c] sm:%s521]
                  %737 = vst [vmem:[%s529 + $0x19c] sm:%s521] %v736
                  %v738 = vld [vmem:[%s528 + $0x320] sm:%s521]
                  %739 = vst [vmem:[%s529 + $0x1a0] sm:%s521] %v738
                  %v740 = vld [vmem:[%s528 + $0x324] sm:%s521]
                  %741 = vst [vmem:[%s529 + $0x1a4] sm:%s521] %v740
                  %v742 = vld [vmem:[%s528 + $0x328] sm:%s521]
                  %743 = vst [vmem:[%s529 + $0x1a8] sm:%s521] %v742
                  %v744 = vld [vmem:[%s528 + $0x32c] sm:%s521]
                  %745 = vst [vmem:[%s529 + $0x1ac] sm:%s521] %v744
                  %v746 = vld [vmem:[%s528 + $0x330] sm:%s521]
                  %747 = vst [vmem:[%s529 + $0x1b0] sm:%s521] %v746
                  %v748 = vld [vmem:[%s528 + $0x334] sm:%s521]
                  %749 = vst [vmem:[%s529 + $0x1b4] sm:%s521] %v748
                  %v750 = vld [vmem:[%s528 + $0x338] sm:%s521]
                  %751 = vst [vmem:[%s529 + $0x1b8] sm:%s521] %v750
                  %v752 = vld [vmem:[%s528 + $0x33c] sm:%s521]
                  %753 = vst [vmem:[%s529 + $0x1bc] sm:%s521] %v752
                  %v754 = vld [vmem:[%s528 + $0x340] sm:%s521]
                  %755 = vst [vmem:[%s529 + $0x1c0] sm:%s521] %v754
                  %v756 = vld [vmem:[%s528 + $0x344] sm:%s521]
                  %757 = vst [vmem:[%s529 + $0x1c4] sm:%s521] %v756
                  %v758 = vld [vmem:[%s528 + $0x348] sm:%s521]
                  %759 = vst [vmem:[%s529 + $0x1c8] sm:%s521] %v758
                  %v760 = vld [vmem:[%s528 + $0x34c] sm:%s521]
                  %761 = vst [vmem:[%s529 + $0x1cc] sm:%s521] %v760
                  %v762 = vld [vmem:[%s528 + $0x350] sm:%s521]
                  %763 = vst [vmem:[%s529 + $0x1d0] sm:%s521] %v762
                  %v764 = vld [vmem:[%s528 + $0x354] sm:%s521]
                  %765 = vst [vmem:[%s529 + $0x1d4] sm:%s521] %v764
                  %v766 = vld [vmem:[%s528 + $0x358] sm:%s521]
                  %767 = vst [vmem:[%s529 + $0x1d8] sm:%s521] %v766
                  %v768 = vld [vmem:[%s528 + $0x35c] sm:%s521]
                  %769 = vst [vmem:[%s529 + $0x1dc] sm:%s521] %v768
                  %v770 = vld [vmem:[%s528 + $0x360] sm:%s521]
                  %771 = vst [vmem:[%s529 + $0x1e0] sm:%s521] %v770
                  %v772 = vld [vmem:[%s528 + $0x364] sm:%s521]
                  %773 = vst [vmem:[%s529 + $0x1e4] sm:%s521] %v772
                  %v774 = vld [vmem:[%s528 + $0x368] sm:%s521]
                  %775 = vst [vmem:[%s529 + $0x1e8] sm:%s521] %v774
                  %v776 = vld [vmem:[%s528 + $0x36c] sm:%s521]
                  %777 = vst [vmem:[%s529 + $0x1ec] sm:%s521] %v776
                  %v778 = vld [vmem:[%s528 + $0x370] sm:%s521]
                  %779 = vst [vmem:[%s529 + $0x1f0] sm:%s521] %v778
                  %v780 = vld [vmem:[%s528 + $0x374] sm:%s521]
                  %781 = vst [vmem:[%s529 + $0x1f4] sm:%s521] %v780
                  %v782 = vld [vmem:[%s528 + $0x378] sm:%s521]
                  %783 = vst [vmem:[%s529 + $0x1f8] sm:%s521] %v782
                  %v784 = vld [vmem:[%s528 + $0x37c] sm:%s521]
                  %785 = vst [vmem:[%s529 + $0x1fc] sm:%s521] %v784
                  %v786 = vld [vmem:[%s528 + $0x380] sm:%s521]
                  %787 = vst [vmem:[%s529 + $0x200] sm:%s521] %v786
                  %v788 = vld [vmem:[%s528 + $0x384] sm:%s521]
                  %789 = vst [vmem:[%s529 + $0x204] sm:%s521] %v788
                  %v790 = vld [vmem:[%s528 + $0x388] sm:%s521]
                  %791 = vst [vmem:[%s529 + $0x208] sm:%s521] %v790
                  %v792 = vld [vmem:[%s528 + $0x38c] sm:%s521]
                  %793 = vst [vmem:[%s529 + $0x20c] sm:%s521] %v792
                  %v794 = vld [vmem:[%s528 + $0x390] sm:%s521]
                  %795 = vst [vmem:[%s529 + $0x210] sm:%s521] %v794
                  %v796 = vld [vmem:[%s528 + $0x394] sm:%s521]
                  %797 = vst [vmem:[%s529 + $0x214] sm:%s521] %v796
                  %v798 = vld [vmem:[%s528 + $0x398] sm:%s521]
                  %799 = vst [vmem:[%s529 + $0x218] sm:%s521] %v798
                  %v800 = vld [vmem:[%s528 + $0x39c] sm:%s521]
                  %801 = vst [vmem:[%s529 + $0x21c] sm:%s521] %v800
                  %v802 = vld [vmem:[%s528 + $0x3a0] sm:%s521]
                  %803 = vst [vmem:[%s529 + $0x220] sm:%s521] %v802
                  %v804 = vld [vmem:[%s528 + $0x3a4] sm:%s521]
                  %805 = vst [vmem:[%s529 + $0x224] sm:%s521] %v804
                  %v806 = vld [vmem:[%s528 + $0x3a8] sm:%s521]
                  %807 = vst [vmem:[%s529 + $0x228] sm:%s521] %v806
                  %v808 = vld [vmem:[%s528 + $0x3ac] sm:%s521]
                  %809 = vst [vmem:[%s529 + $0x22c] sm:%s521] %v808
                  %v810 = vld [vmem:[%s528 + $0x3b0] sm:%s521]
                  %811 = vst [vmem:[%s529 + $0x230] sm:%s521] %v810
                  %v812 = vld [vmem:[%s528 + $0x3b4] sm:%s521]
                  %813 = vst [vmem:[%s529 + $0x234] sm:%s521] %v812
                  %v814 = vld [vmem:[%s528 + $0x3b8] sm:%s521]
                  %815 = vst [vmem:[%s529 + $0x238] sm:%s521] %v814
                  %v816 = vld [vmem:[%s528 + $0x3bc] sm:%s521]
                  %817 = vst [vmem:[%s529 + $0x23c] sm:%s521] %v816
                $region67: #{basic_conv_forward.1} parent=54 // loop_footer
                  %s527 = sadd.s32 1, %s523
                $region68: #{basic_conv_forward.1} parent=54 // loop_footer_branch
                  %522 = sbr.rel target = $region64
                $region69: #{basic_conv_forward.1} parent=54 // loop_exit
                  _
              $region55: #{basic_conv_forward.1} parent=39 // pred_fallthru
                _
            $region40: #{basic_conv_forward.1} parent=35 // pred_fallthru
              _
            // Predicated region
            $region41: #{basic_conv_forward.1} parent=35 // pred_check
              _
            $region42: #{basic_conv_forward.1} parent=35 // pred_check_branch
              %211 = sbr.rel (0) target = $region44
            $region43: #{basic_conv_forward.1} parent=35 // pred_region
              %s213 = ssub.s32 16, 1
              loop: start=0, step=1, limit=1
              $region45: #{basic_conv_forward.1} parent=43 // loop_pre_header
                _
              $region46: #{basic_conv_forward.1} parent=43 // loop_header
                %s215 = sphi 0, %s219
                %p216 = scmp.ge.s32.totalorder %s215, 1
                %s220 = sphi %s205, %s205
                %s221 = sphi %s201, %s201
              $region47: #{basic_conv_forward.1} parent=43 // loop_header_branch
                %218 = sbr.rel (%p216) target = $region51
              $region48: #{basic_conv_forward.1} parent=43 // loop_body
                %v222 = vld [vmem:[%s220] sm:%s213]
                %223 = vst [vmem:[%s221] sm:%s213] %v222
                %v224 = vld [vmem:[%s220 + $0x4] sm:%s213]
                %225 = vst [vmem:[%s221 + $0x4] sm:%s213] %v224
                %v226 = vld [vmem:[%s220 + $0x8] sm:%s213]
                %227 = vst [vmem:[%s221 + $0x8] sm:%s213] %v226
                %v228 = vld [vmem:[%s220 + $0xc] sm:%s213]
                %229 = vst [vmem:[%s221 + $0xc] sm:%s213] %v228
                %v230 = vld [vmem:[%s220 + $0x10] sm:%s213]
                %231 = vst [vmem:[%s221 + $0x10] sm:%s213] %v230
                %v232 = vld [vmem:[%s220 + $0x14] sm:%s213]
                %233 = vst [vmem:[%s221 + $0x14] sm:%s213] %v232
                %v234 = vld [vmem:[%s220 + $0x18] sm:%s213]
                %235 = vst [vmem:[%s221 + $0x18] sm:%s213] %v234
                %v236 = vld [vmem:[%s220 + $0x1c] sm:%s213]
                %237 = vst [vmem:[%s221 + $0x1c] sm:%s213] %v236
                %v238 = vld [vmem:[%s220 + $0x20] sm:%s213]
                %239 = vst [vmem:[%s221 + $0x20] sm:%s213] %v238
                %v240 = vld [vmem:[%s220 + $0x24] sm:%s213]
                %241 = vst [vmem:[%s221 + $0x24] sm:%s213] %v240
                %v242 = vld [vmem:[%s220 + $0x28] sm:%s213]
                %243 = vst [vmem:[%s221 + $0x28] sm:%s213] %v242
                %v244 = vld [vmem:[%s220 + $0x2c] sm:%s213]
                %245 = vst [vmem:[%s221 + $0x2c] sm:%s213] %v244
                %v246 = vld [vmem:[%s220 + $0x30] sm:%s213]
                %247 = vst [vmem:[%s221 + $0x30] sm:%s213] %v246
                %v248 = vld [vmem:[%s220 + $0x34] sm:%s213]
                %249 = vst [vmem:[%s221 + $0x34] sm:%s213] %v248
                %v250 = vld [vmem:[%s220 + $0x38] sm:%s213]
                %251 = vst [vmem:[%s221 + $0x38] sm:%s213] %v250
                %v252 = vld [vmem:[%s220 + $0x3c] sm:%s213]
                %253 = vst [vmem:[%s221 + $0x3c] sm:%s213] %v252
                %v254 = vld [vmem:[%s220 + $0x40] sm:%s213]
                %255 = vst [vmem:[%s221 + $0x40] sm:%s213] %v254
                %v256 = vld [vmem:[%s220 + $0x44] sm:%s213]
                %257 = vst [vmem:[%s221 + $0x44] sm:%s213] %v256
                %v258 = vld [vmem:[%s220 + $0x48] sm:%s213]
                %259 = vst [vmem:[%s221 + $0x48] sm:%s213] %v258
                %v260 = vld [vmem:[%s220 + $0x4c] sm:%s213]
                %261 = vst [vmem:[%s221 + $0x4c] sm:%s213] %v260
                %v262 = vld [vmem:[%s220 + $0x50] sm:%s213]
                %263 = vst [vmem:[%s221 + $0x50] sm:%s213] %v262
                %v264 = vld [vmem:[%s220 + $0x54] sm:%s213]
                %265 = vst [vmem:[%s221 + $0x54] sm:%s213] %v264
                %v266 = vld [vmem:[%s220 + $0x58] sm:%s213]
                %267 = vst [vmem:[%s221 + $0x58] sm:%s213] %v266
                %v268 = vld [vmem:[%s220 + $0x5c] sm:%s213]
                %269 = vst [vmem:[%s221 + $0x5c] sm:%s213] %v268
                %v270 = vld [vmem:[%s220 + $0x60] sm:%s213]
                %271 = vst [vmem:[%s221 + $0x60] sm:%s213] %v270
                %v272 = vld [vmem:[%s220 + $0x64] sm:%s213]
                %273 = vst [vmem:[%s221 + $0x64] sm:%s213] %v272
                %v274 = vld [vmem:[%s220 + $0x68] sm:%s213]
                %275 = vst [vmem:[%s221 + $0x68] sm:%s213] %v274
                %v276 = vld [vmem:[%s220 + $0x6c] sm:%s213]
                %277 = vst [vmem:[%s221 + $0x6c] sm:%s213] %v276
                %v278 = vld [vmem:[%s220 + $0x70] sm:%s213]
                %279 = vst [vmem:[%s221 + $0x70] sm:%s213] %v278
                %v280 = vld [vmem:[%s220 + $0x74] sm:%s213]
                %281 = vst [vmem:[%s221 + $0x74] sm:%s213] %v280
                %v282 = vld [vmem:[%s220 + $0x78] sm:%s213]
                %283 = vst [vmem:[%s221 + $0x78] sm:%s213] %v282
                %v284 = vld [vmem:[%s220 + $0x7c] sm:%s213]
                %285 = vst [vmem:[%s221 + $0x7c] sm:%s213] %v284
                %v286 = vld [vmem:[%s220 + $0x80] sm:%s213]
                %287 = vst [vmem:[%s221 + $0x80] sm:%s213] %v286
                %v288 = vld [vmem:[%s220 + $0x84] sm:%s213]
                %289 = vst [vmem:[%s221 + $0x84] sm:%s213] %v288
                %v290 = vld [vmem:[%s220 + $0x88] sm:%s213]
                %291 = vst [vmem:[%s221 + $0x88] sm:%s213] %v290
                %v292 = vld [vmem:[%s220 + $0x8c] sm:%s213]
                %293 = vst [vmem:[%s221 + $0x8c] sm:%s213] %v292
                %v294 = vld [vmem:[%s220 + $0x90] sm:%s213]
                %295 = vst [vmem:[%s221 + $0x90] sm:%s213] %v294
                %v296 = vld [vmem:[%s220 + $0x94] sm:%s213]
                %297 = vst [vmem:[%s221 + $0x94] sm:%s213] %v296
                %v298 = vld [vmem:[%s220 + $0x98] sm:%s213]
                %299 = vst [vmem:[%s221 + $0x98] sm:%s213] %v298
                %v300 = vld [vmem:[%s220 + $0x9c] sm:%s213]
                %301 = vst [vmem:[%s221 + $0x9c] sm:%s213] %v300
                %v302 = vld [vmem:[%s220 + $0xa0] sm:%s213]
                %303 = vst [vmem:[%s221 + $0xa0] sm:%s213] %v302
                %v304 = vld [vmem:[%s220 + $0xa4] sm:%s213]
                %305 = vst [vmem:[%s221 + $0xa4] sm:%s213] %v304
                %v306 = vld [vmem:[%s220 + $0xa8] sm:%s213]
                %307 = vst [vmem:[%s221 + $0xa8] sm:%s213] %v306
                %v308 = vld [vmem:[%s220 + $0xac] sm:%s213]
                %309 = vst [vmem:[%s221 + $0xac] sm:%s213] %v308
                %v310 = vld [vmem:[%s220 + $0xb0] sm:%s213]
                %311 = vst [vmem:[%s221 + $0xb0] sm:%s213] %v310
                %v312 = vld [vmem:[%s220 + $0xb4] sm:%s213]
                %313 = vst [vmem:[%s221 + $0xb4] sm:%s213] %v312
                %v314 = vld [vmem:[%s220 + $0xb8] sm:%s213]
                %315 = vst [vmem:[%s221 + $0xb8] sm:%s213] %v314
                %v316 = vld [vmem:[%s220 + $0xbc] sm:%s213]
                %317 = vst [vmem:[%s221 + $0xbc] sm:%s213] %v316
                %v318 = vld [vmem:[%s220 + $0x180] sm:%s213]
                %319 = vst [vmem:[%s221 + $0xc0] sm:%s213] %v318
                %v320 = vld [vmem:[%s220 + $0x184] sm:%s213]
                %321 = vst [vmem:[%s221 + $0xc4] sm:%s213] %v320
                %v322 = vld [vmem:[%s220 + $0x188] sm:%s213]
                %323 = vst [vmem:[%s221 + $0xc8] sm:%s213] %v322
                %v324 = vld [vmem:[%s220 + $0x18c] sm:%s213]
                %325 = vst [vmem:[%s221 + $0xcc] sm:%s213] %v324
                %v326 = vld [vmem:[%s220 + $0x190] sm:%s213]
                %327 = vst [vmem:[%s221 + $0xd0] sm:%s213] %v326
                %v328 = vld [vmem:[%s220 + $0x194] sm:%s213]
                %329 = vst [vmem:[%s221 + $0xd4] sm:%s213] %v328
                %v330 = vld [vmem:[%s220 + $0x198] sm:%s213]
                %331 = vst [vmem:[%s221 + $0xd8] sm:%s213] %v330
                %v332 = vld [vmem:[%s220 + $0x19c] sm:%s213]
                %333 = vst [vmem:[%s221 + $0xdc] sm:%s213] %v332
                %v334 = vld [vmem:[%s220 + $0x1a0] sm:%s213]
                %335 = vst [vmem:[%s221 + $0xe0] sm:%s213] %v334
                %v336 = vld [vmem:[%s220 + $0x1a4] sm:%s213]
                %337 = vst [vmem:[%s221 + $0xe4] sm:%s213] %v336
                %v338 = vld [vmem:[%s220 + $0x1a8] sm:%s213]
                %339 = vst [vmem:[%s221 + $0xe8] sm:%s213] %v338
                %v340 = vld [vmem:[%s220 + $0x1ac] sm:%s213]
                %341 = vst [vmem:[%s221 + $0xec] sm:%s213] %v340
                %v342 = vld [vmem:[%s220 + $0x1b0] sm:%s213]
                %343 = vst [vmem:[%s221 + $0xf0] sm:%s213] %v342
                %v344 = vld [vmem:[%s220 + $0x1b4] sm:%s213]
                %345 = vst [vmem:[%s221 + $0xf4] sm:%s213] %v344
                %v346 = vld [vmem:[%s220 + $0x1b8] sm:%s213]
                %347 = vst [vmem:[%s221 + $0xf8] sm:%s213] %v346
                %v348 = vld [vmem:[%s220 + $0x1bc] sm:%s213]
                %349 = vst [vmem:[%s221 + $0xfc] sm:%s213] %v348
                %v350 = vld [vmem:[%s220 + $0x1c0] sm:%s213]
                %351 = vst [vmem:[%s221 + $0x100] sm:%s213] %v350
                %v352 = vld [vmem:[%s220 + $0x1c4] sm:%s213]
                %353 = vst [vmem:[%s221 + $0x104] sm:%s213] %v352
                %v354 = vld [vmem:[%s220 + $0x1c8] sm:%s213]
                %355 = vst [vmem:[%s221 + $0x108] sm:%s213] %v354
                %v356 = vld [vmem:[%s220 + $0x1cc] sm:%s213]
                %357 = vst [vmem:[%s221 + $0x10c] sm:%s213] %v356
                %v358 = vld [vmem:[%s220 + $0x1d0] sm:%s213]
                %359 = vst [vmem:[%s221 + $0x110] sm:%s213] %v358
                %v360 = vld [vmem:[%s220 + $0x1d4] sm:%s213]
                %361 = vst [vmem:[%s221 + $0x114] sm:%s213] %v360
                %v362 = vld [vmem:[%s220 + $0x1d8] sm:%s213]
                %363 = vst [vmem:[%s221 + $0x118] sm:%s213] %v362
                %v364 = vld [vmem:[%s220 + $0x1dc] sm:%s213]
                %365 = vst [vmem:[%s221 + $0x11c] sm:%s213] %v364
                %v366 = vld [vmem:[%s220 + $0x1e0] sm:%s213]
                %367 = vst [vmem:[%s221 + $0x120] sm:%s213] %v366
                %v368 = vld [vmem:[%s220 + $0x1e4] sm:%s213]
                %369 = vst [vmem:[%s221 + $0x124] sm:%s213] %v368
                %v370 = vld [vmem:[%s220 + $0x1e8] sm:%s213]
                %371 = vst [vmem:[%s221 + $0x128] sm:%s213] %v370
                %v372 = vld [vmem:[%s220 + $0x1ec] sm:%s213]
                %373 = vst [vmem:[%s221 + $0x12c] sm:%s213] %v372
                %v374 = vld [vmem:[%s220 + $0x1f0] sm:%s213]
                %375 = vst [vmem:[%s221 + $0x130] sm:%s213] %v374
                %v376 = vld [vmem:[%s220 + $0x1f4] sm:%s213]
                %377 = vst [vmem:[%s221 + $0x134] sm:%s213] %v376
                %v378 = vld [vmem:[%s220 + $0x1f8] sm:%s213]
                %379 = vst [vmem:[%s221 + $0x138] sm:%s213] %v378
                %v380 = vld [vmem:[%s220 + $0x1fc] sm:%s213]
                %381 = vst [vmem:[%s221 + $0x13c] sm:%s213] %v380
                %v382 = vld [vmem:[%s220 + $0x200] sm:%s213]
                %383 = vst [vmem:[%s221 + $0x140] sm:%s213] %v382
                %v384 = vld [vmem:[%s220 + $0x204] sm:%s213]
                %385 = vst [vmem:[%s221 + $0x144] sm:%s213] %v384
                %v386 = vld [vmem:[%s220 + $0x208] sm:%s213]
                %387 = vst [vmem:[%s221 + $0x148] sm:%s213] %v386
                %v388 = vld [vmem:[%s220 + $0x20c] sm:%s213]
                %389 = vst [vmem:[%s221 + $0x14c] sm:%s213] %v388
                %v390 = vld [vmem:[%s220 + $0x210] sm:%s213]
                %391 = vst [vmem:[%s221 + $0x150] sm:%s213] %v390
                %v392 = vld [vmem:[%s220 + $0x214] sm:%s213]
                %393 = vst [vmem:[%s221 + $0x154] sm:%s213] %v392
                %v394 = vld [vmem:[%s220 + $0x218] sm:%s213]
                %395 = vst [vmem:[%s221 + $0x158] sm:%s213] %v394
                %v396 = vld [vmem:[%s220 + $0x21c] sm:%s213]
                %397 = vst [vmem:[%s221 + $0x15c] sm:%s213] %v396
                %v398 = vld [vmem:[%s220 + $0x220] sm:%s213]
                %399 = vst [vmem:[%s221 + $0x160] sm:%s213] %v398
                %v400 = vld [vmem:[%s220 + $0x224] sm:%s213]
                %401 = vst [vmem:[%s221 + $0x164] sm:%s213] %v400
                %v402 = vld [vmem:[%s220 + $0x228] sm:%s213]
                %403 = vst [vmem:[%s221 + $0x168] sm:%s213] %v402
                %v404 = vld [vmem:[%s220 + $0x22c] sm:%s213]
                %405 = vst [vmem:[%s221 + $0x16c] sm:%s213] %v404
                %v406 = vld [vmem:[%s220 + $0x230] sm:%s213]
                %407 = vst [vmem:[%s221 + $0x170] sm:%s213] %v406
                %v408 = vld [vmem:[%s220 + $0x234] sm:%s213]
                %409 = vst [vmem:[%s221 + $0x174] sm:%s213] %v408
                %v410 = vld [vmem:[%s220 + $0x238] sm:%s213]
                %411 = vst [vmem:[%s221 + $0x178] sm:%s213] %v410
                %v412 = vld [vmem:[%s220 + $0x23c] sm:%s213]
                %413 = vst [vmem:[%s221 + $0x17c] sm:%s213] %v412
                %v414 = vld [vmem:[%s220 + $0x300] sm:%s213]
                %415 = vst [vmem:[%s221 + $0x180] sm:%s213] %v414
                %v416 = vld [vmem:[%s220 + $0x304] sm:%s213]
                %417 = vst [vmem:[%s221 + $0x184] sm:%s213] %v416
                %v418 = vld [vmem:[%s220 + $0x308] sm:%s213]
                %419 = vst [vmem:[%s221 + $0x188] sm:%s213] %v418
                %v420 = vld [vmem:[%s220 + $0x30c] sm:%s213]
                %421 = vst [vmem:[%s221 + $0x18c] sm:%s213] %v420
                %v422 = vld [vmem:[%s220 + $0x310] sm:%s213]
                %423 = vst [vmem:[%s221 + $0x190] sm:%s213] %v422
                %v424 = vld [vmem:[%s220 + $0x314] sm:%s213]
                %425 = vst [vmem:[%s221 + $0x194] sm:%s213] %v424
                %v426 = vld [vmem:[%s220 + $0x318] sm:%s213]
                %427 = vst [vmem:[%s221 + $0x198] sm:%s213] %v426
                %v428 = vld [vmem:[%s220 + $0x31c] sm:%s213]
                %429 = vst [vmem:[%s221 + $0x19c] sm:%s213] %v428
                %v430 = vld [vmem:[%s220 + $0x320] sm:%s213]
                %431 = vst [vmem:[%s221 + $0x1a0] sm:%s213] %v430
                %v432 = vld [vmem:[%s220 + $0x324] sm:%s213]
                %433 = vst [vmem:[%s221 + $0x1a4] sm:%s213] %v432
                %v434 = vld [vmem:[%s220 + $0x328] sm:%s213]
                %435 = vst [vmem:[%s221 + $0x1a8] sm:%s213] %v434
                %v436 = vld [vmem:[%s220 + $0x32c] sm:%s213]
                %437 = vst [vmem:[%s221 + $0x1ac] sm:%s213] %v436
                %v438 = vld [vmem:[%s220 + $0x330] sm:%s213]
                %439 = vst [vmem:[%s221 + $0x1b0] sm:%s213] %v438
                %v440 = vld [vmem:[%s220 + $0x334] sm:%s213]
                %441 = vst [vmem:[%s221 + $0x1b4] sm:%s213] %v440
                %v442 = vld [vmem:[%s220 + $0x338] sm:%s213]
                %443 = vst [vmem:[%s221 + $0x1b8] sm:%s213] %v442
                %v444 = vld [vmem:[%s220 + $0x33c] sm:%s213]
                %445 = vst [vmem:[%s221 + $0x1bc] sm:%s213] %v444
                %v446 = vld [vmem:[%s220 + $0x340] sm:%s213]
                %447 = vst [vmem:[%s221 + $0x1c0] sm:%s213] %v446
                %v448 = vld [vmem:[%s220 + $0x344] sm:%s213]
                %449 = vst [vmem:[%s221 + $0x1c4] sm:%s213] %v448
                %v450 = vld [vmem:[%s220 + $0x348] sm:%s213]
                %451 = vst [vmem:[%s221 + $0x1c8] sm:%s213] %v450
                %v452 = vld [vmem:[%s220 + $0x34c] sm:%s213]
                %453 = vst [vmem:[%s221 + $0x1cc] sm:%s213] %v452
                %v454 = vld [vmem:[%s220 + $0x350] sm:%s213]
                %455 = vst [vmem:[%s221 + $0x1d0] sm:%s213] %v454
                %v456 = vld [vmem:[%s220 + $0x354] sm:%s213]
                %457 = vst [vmem:[%s221 + $0x1d4] sm:%s213] %v456
                %v458 = vld [vmem:[%s220 + $0x358] sm:%s213]
                %459 = vst [vmem:[%s221 + $0x1d8] sm:%s213] %v458
                %v460 = vld [vmem:[%s220 + $0x35c] sm:%s213]
                %461 = vst [vmem:[%s221 + $0x1dc] sm:%s213] %v460
                %v462 = vld [vmem:[%s220 + $0x360] sm:%s213]
                %463 = vst [vmem:[%s221 + $0x1e0] sm:%s213] %v462
                %v464 = vld [vmem:[%s220 + $0x364] sm:%s213]
                %465 = vst [vmem:[%s221 + $0x1e4] sm:%s213] %v464
                %v466 = vld [vmem:[%s220 + $0x368] sm:%s213]
                %467 = vst [vmem:[%s221 + $0x1e8] sm:%s213] %v466
                %v468 = vld [vmem:[%s220 + $0x36c] sm:%s213]
                %469 = vst [vmem:[%s221 + $0x1ec] sm:%s213] %v468
                %v470 = vld [vmem:[%s220 + $0x370] sm:%s213]
                %471 = vst [vmem:[%s221 + $0x1f0] sm:%s213] %v470
                %v472 = vld [vmem:[%s220 + $0x374] sm:%s213]
                %473 = vst [vmem:[%s221 + $0x1f4] sm:%s213] %v472
                %v474 = vld [vmem:[%s220 + $0x378] sm:%s213]
                %475 = vst [vmem:[%s221 + $0x1f8] sm:%s213] %v474
                %v476 = vld [vmem:[%s220 + $0x37c] sm:%s213]
                %477 = vst [vmem:[%s221 + $0x1fc] sm:%s213] %v476
                %v478 = vld [vmem:[%s220 + $0x380] sm:%s213]
                %479 = vst [vmem:[%s221 + $0x200] sm:%s213] %v478
                %v480 = vld [vmem:[%s220 + $0x384] sm:%s213]
                %481 = vst [vmem:[%s221 + $0x204] sm:%s213] %v480
                %v482 = vld [vmem:[%s220 + $0x388] sm:%s213]
                %483 = vst [vmem:[%s221 + $0x208] sm:%s213] %v482
                %v484 = vld [vmem:[%s220 + $0x38c] sm:%s213]
                %485 = vst [vmem:[%s221 + $0x20c] sm:%s213] %v484
                %v486 = vld [vmem:[%s220 + $0x390] sm:%s213]
                %487 = vst [vmem:[%s221 + $0x210] sm:%s213] %v486
                %v488 = vld [vmem:[%s220 + $0x394] sm:%s213]
                %489 = vst [vmem:[%s221 + $0x214] sm:%s213] %v488
                %v490 = vld [vmem:[%s220 + $0x398] sm:%s213]
                %491 = vst [vmem:[%s221 + $0x218] sm:%s213] %v490
                %v492 = vld [vmem:[%s220 + $0x39c] sm:%s213]
                %493 = vst [vmem:[%s221 + $0x21c] sm:%s213] %v492
                %v494 = vld [vmem:[%s220 + $0x3a0] sm:%s213]
                %495 = vst [vmem:[%s221 + $0x220] sm:%s213] %v494
                %v496 = vld [vmem:[%s220 + $0x3a4] sm:%s213]
                %497 = vst [vmem:[%s221 + $0x224] sm:%s213] %v496
                %v498 = vld [vmem:[%s220 + $0x3a8] sm:%s213]
                %499 = vst [vmem:[%s221 + $0x228] sm:%s213] %v498
                %v500 = vld [vmem:[%s220 + $0x3ac] sm:%s213]
                %501 = vst [vmem:[%s221 + $0x22c] sm:%s213] %v500
                %v502 = vld [vmem:[%s220 + $0x3b0] sm:%s213]
                %503 = vst [vmem:[%s221 + $0x230] sm:%s213] %v502
                %v504 = vld [vmem:[%s220 + $0x3b4] sm:%s213]
                %505 = vst [vmem:[%s221 + $0x234] sm:%s213] %v504
                %v506 = vld [vmem:[%s220 + $0x3b8] sm:%s213]
                %507 = vst [vmem:[%s221 + $0x238] sm:%s213] %v506
                %v508 = vld [vmem:[%s220 + $0x3bc] sm:%s213]
                %509 = vst [vmem:[%s221 + $0x23c] sm:%s213] %v508
              $region49: #{basic_conv_forward.1} parent=43 // loop_footer
                %s219 = sadd.s32 1, %s215
              $region50: #{basic_conv_forward.1} parent=43 // loop_footer_branch
                %214 = sbr.rel target = $region46
              $region51: #{basic_conv_forward.1} parent=43 // loop_exit
                _
            $region44: #{basic_conv_forward.1} parent=35 // pred_fallthru
              _
          $region36: #{basic_conv_forward.1} parent=31 // pred_fallthru
            _
          %818 = vnop
        $region32: #{basic_conv_forward.1} parent=27 // pred_fallthru
          _
      $region28: #{basic_conv_forward.1} parent=5 // pred_fallthru
        _
      %p819 = scmp.le.s32.totalorder 1, %s13
      %p820 = scmp.lt.s32.totalorder %s13, 3
      %p821 = pnand %p819, %p820
      %p822 = pneg %p821
      // Predicated region
      $region70: #{basic_conv_forward.1} parent=5 // pred_check
        _
      $region71: #{basic_conv_forward.1} parent=5 // pred_check_branch
        %824 = sbr.rel (%p821) target = $region73
      $region72: #{basic_conv_forward.1} parent=5 // pred_region
        %s825 = ssub.s32 %s13, 1
        %s826 = sand.u32 %s38, 1
        %s827 = sand.u32 %s38, 1
        %s828 = smul.addr %s827, 576
        %s829 = scalar_lea.vmem [#allocation2], %s828
        // Predicated region
        $region74: #{basic_conv_forward.1} parent=72 // pred_check
          %p830 = pneg %p51
        $region75: #{basic_conv_forward.1} parent=72 // pred_check_branch
          %832 = sbr.rel (%p830) target = $region77
        $region76: #{basic_conv_forward.1} parent=72 // pred_region
          _
        $region77: #{basic_conv_forward.1} parent=72 // pred_fallthru
          _
        %s833 = sand.u32 %s38, 1
        %s834 = sand.u32 %s38, 1
        %s835 = smul.addr %s834, 576
        %s836 = scalar_lea.vmem [#allocation2], %s835
        %p837 = pneg %p51
        %p838 = pneg %p48
        %p839 = scmp.lt.s32.totalorder %s23, 0
        %s840 = scalar_select %p839, %s23, 0
        %s841 = smul.addr %s840, 2
        %s842 = scalar_lea.vmem %s1, %s841
        %p843 = pneg %p77
        %p844 = pneg %p74
        %p845 = scmp.lt.s32.totalorder %s23, 0
        %s846 = scalar_select %p845, %s23, 0
        %s847 = scalar_lea.vmem %s2, %s846
        %p848 = pneg %p103
        %p849 = pneg %p100
        %p850 = scmp.lt.s32.totalorder %s23, 0
        %s851 = scalar_select %p850, %s23, 0
        %s852 = scalar_lea.vmem %s3, %s851
        %p853 = pneg %p129
        %p854 = pneg %p126
        %p855 = pneg %p157
        %p856 = pneg %p154
        %s857 = sand.u32 %s144, 1
        %s858 = scalar_lea.sflag [#allocation4], %s857
        %s859 = sand.u32 %s144, 1
        %s860 = smul.addr %s859, 256
        %s861 = scalar_lea.vmem [#allocation3], %s860
        %s862 = smul.u32 16, %s22
        %p863 = scmp.lt.s32.totalorder %s23, 0
        %s864 = scalar_select %p863, %s23, 0
        %s865 = smul.addr %s864, 2
        %s866 = scalar_lea.vmem %s1, %s865
        %p867 = scmp.lt.s32.totalorder %s23, 0
        %s868 = scalar_select %p867, %s23, 0
        %s869 = scalar_lea.vmem %s2, %s868
        %p870 = scmp.lt.s32.totalorder %s23, 0
        %s871 = scalar_select %p870, %s23, 0
        %s872 = scalar_lea.vmem %s3, %s871
        %s873 = smul.u32 32, %s22
        %v875 = vld [vmem:[%s829] sm:$0xf]
        %v876 = vld [vmem:[%s829 + $0x4] sm:$0xf]
        %v877 = vld [vmem:[%s829 + $0xc] sm:$0xf]
        %v878 = vld [vmem:[%s829 + $0x10] sm:$0xf]
        %v879 = vld [vmem:[%s829 + $0x18] sm:$0xf]
        %v880 = vld [vmem:[%s829 + $0x1c] sm:$0xf]
        %v881 = vld [vmem:[%s829 + $0x24] sm:$0xf]
        %v882 = vld [vmem:[%s829 + $0x28] sm:$0xf]
        %v883 = vld [vmem:[%s829 + $0x30] sm:$0xf]
        %v884 = vld [vmem:[%s829 + $0x34] sm:$0xf]
        %v885 = vld [vmem:[%s829 + $0x3c] sm:$0xf]
        %v886 = vld [vmem:[%s829 + $0x40] sm:$0xf]
        %v887 = vld [vmem:[%s829 + $0x48] sm:$0xf]
        %v888 = vld [vmem:[%s829 + $0x4c] sm:$0xf]
        %v889 = vld [vmem:[%s829 + $0x54] sm:$0xf]
        %v890 = vld [vmem:[%s829 + $0x58] sm:$0xf]
        %v891 = vld [vmem:[%s829 + $0x60] sm:$0xf]
        %v892 = vld [vmem:[%s829 + $0x64] sm:$0xf]
        %v893 = vld [vmem:[%s829 + $0x6c] sm:$0xf]
        %v894 = vld [vmem:[%s829 + $0x70] sm:$0xf]
        %v895 = vld [vmem:[%s829 + $0x78] sm:$0xf]
        %v896 = vld [vmem:[%s829 + $0x7c] sm:$0xf]
        %v897 = vld [vmem:[%s829 + $0x84] sm:$0xf]
        %v898 = vld [vmem:[%s829 + $0x88] sm:$0xf]
        %v899 = vld [vmem:[%s829 + $0x90] sm:$0xf]
        %v900 = vld [vmem:[%s829 + $0x94] sm:$0xf]
        %v901 = vld [vmem:[%s829 + $0x9c] sm:$0xf]
        %v902 = vld [vmem:[%s829 + $0xa0] sm:$0xf]
        %v903 = vld [vmem:[%s829 + $0xa8] sm:$0xf]
        %v904 = vld [vmem:[%s829 + $0xac] sm:$0xf]
        %v905 = vld [vmem:[%s829 + $0xb4] sm:$0xf]
        %v906 = vld [vmem:[%s829 + $0xb8] sm:$0xf]
        %v907 = vld [vmem:[%s866] sm:$0x3]
        %v908 = vld [vmem:[%s829 + $0x8] sm:$0x1]
        %v909 = vld [vmem:[%s829 + $0x14] sm:$0x1]
        %v910 = vld [vmem:[%s829 + $0x20] sm:$0x1]
        %v911 = vld [vmem:[%s829 + $0x2c] sm:$0x1]
        %v912 = vld [vmem:[%s829 + $0x38] sm:$0x1]
        %v913 = vld [vmem:[%s829 + $0x44] sm:$0x1]
        %v914 = vld [vmem:[%s829 + $0x50] sm:$0x1]
        %v915 = vld [vmem:[%s829 + $0x5c] sm:$0x1]
        %v916 = vld [vmem:[%s829 + $0x68] sm:$0x1]
        %v917 = vld [vmem:[%s829 + $0x74] sm:$0x1]
        %v918 = vld [vmem:[%s829 + $0x80] sm:$0x1]
        %v919 = vld [vmem:[%s829 + $0x8c] sm:$0x1]
        %v920 = vld [vmem:[%s829 + $0x98] sm:$0x1]
        %v921 = vld [vmem:[%s829 + $0xa4] sm:$0x1]
        %v922 = vld [vmem:[%s829 + $0xb0] sm:$0x1]
        %v923 = vld [vmem:[%s829 + $0xbc] sm:$0x1]
        %vm924 = vsmask.f32 3328
        %vm925 = vsmask.f32 7440
        %vm926 = vmor %vm924, %vm925
        %v928 = vshrl.u32 %v875, 16
        %v930 = vrot.slane %v928, 4
        %v931 = vshll.u32 %v875, 16
        %v933 = vrot.slane %v931, 5
        %v934 = vor.u32 %v930, %v933
        %v935 = vrot.slane %v934, 4
        %v937 = vshll.u32 %v876, 16
        %v939 = vrot.slane %v937, 5
        %v940 = vsel %vm926, %v935, %v939
        %v941 = vshrl.u32 %v876, 16
        %v943 = vrot.slane %v941, 4
        %v944 = vor.u32 %v943, %v939
        %v945 = vrot.slane %v944, 4
        %v947 = vshll.u32 %v908, 16
        %v949 = vrot.slane %v947, 5
        %v950 = vsel %vm926, %v945, %v949
        %v952 = vshrl.u32 %v877, 16
        %v954 = vrot.slane %v952, 4
        %v955 = vshll.u32 %v877, 16
        %v957 = vrot.slane %v955, 5
        %v958 = vor.u32 %v954, %v957
        %v959 = vrot.slane %v958, 4
        %v961 = vshll.u32 %v878, 16
        %v963 = vrot.slane %v961, 5
        %v964 = vsel %vm926, %v959, %v963
        %v965 = vshrl.u32 %v878, 16
        %v967 = vrot.slane %v965, 4
        %v968 = vor.u32 %v967, %v963
        %v969 = vrot.slane %v968, 4
        %v971 = vshll.u32 %v909, 16
        %v973 = vrot.slane %v971, 5
        %v974 = vsel %vm926, %v969, %v973
        %v976 = vshrl.u32 %v879, 16
        %v978 = vrot.slane %v976, 4
        %v979 = vshll.u32 %v879, 16
        %v981 = vrot.slane %v979, 5
        %v982 = vor.u32 %v978, %v981
        %v983 = vrot.slane %v982, 4
        %v985 = vshll.u32 %v880, 16
        %v987 = vrot.slane %v985, 5
        %v988 = vsel %vm926, %v983, %v987
        %v989 = vshrl.u32 %v880, 16
        %v991 = vrot.slane %v989, 4
        %v992 = vor.u32 %v991, %v987
        %v993 = vrot.slane %v992, 4
        %v995 = vshll.u32 %v910, 16
        %v997 = vrot.slane %v995, 5
        %v998 = vsel %vm926, %v993, %v997
        %v1000 = vshrl.u32 %v881, 16
        %v1002 = vrot.slane %v1000, 4
        %v1003 = vshll.u32 %v881, 16
        %v1005 = vrot.slane %v1003, 5
        %v1006 = vor.u32 %v1002, %v1005
        %v1007 = vrot.slane %v1006, 4
        %v1009 = vshll.u32 %v882, 16
        %v1011 = vrot.slane %v1009, 5
        %v1012 = vsel %vm926, %v1007, %v1011
        %v1013 = vshrl.u32 %v882, 16
        %v1015 = vrot.slane %v1013, 4
        %v1016 = vor.u32 %v1015, %v1011
        %v1017 = vrot.slane %v1016, 4
        %v1019 = vshll.u32 %v911, 16
        %v1021 = vrot.slane %v1019, 5
        %v1022 = vsel %vm926, %v1017, %v1021
        %v1024 = vshrl.u32 %v883, 16
        %v1026 = vrot.slane %v1024, 4
        %v1027 = vshll.u32 %v883, 16
        %v1029 = vrot.slane %v1027, 5
        %v1030 = vor.u32 %v1026, %v1029
        %v1031 = vrot.slane %v1030, 4
        %v1033 = vshll.u32 %v884, 16
        %v1035 = vrot.slane %v1033, 5
        %v1036 = vsel %vm926, %v1031, %v1035
        %v1037 = vshrl.u32 %v884, 16
        %v1039 = vrot.slane %v1037, 4
        %v1040 = vor.u32 %v1039, %v1035
        %v1041 = vrot.slane %v1040, 4
        %v1043 = vshll.u32 %v912, 16
        %v1045 = vrot.slane %v1043, 5
        %v1046 = vsel %vm926, %v1041, %v1045
        %v1048 = vshrl.u32 %v885, 16
        %v1050 = vrot.slane %v1048, 4
        %v1051 = vshll.u32 %v885, 16
        %v1053 = vrot.slane %v1051, 5
        %v1054 = vor.u32 %v1050, %v1053
        %v1055 = vrot.slane %v1054, 4
        %v1057 = vshll.u32 %v886, 16
        %v1059 = vrot.slane %v1057, 5
        %v1060 = vsel %vm926, %v1055, %v1059
        %v1061 = vshrl.u32 %v886, 16
        %v1063 = vrot.slane %v1061, 4
        %v1064 = vor.u32 %v1063, %v1059
        %v1065 = vrot.slane %v1064, 4
        %v1067 = vshll.u32 %v913, 16
        %v1069 = vrot.slane %v1067, 5
        %v1070 = vsel %vm926, %v1065, %v1069
        %v1072 = vshrl.u32 %v887, 16
        %v1074 = vrot.slane %v1072, 4
        %v1075 = vshll.u32 %v887, 16
        %v1077 = vrot.slane %v1075, 5
        %v1078 = vor.u32 %v1074, %v1077
        %v1079 = vrot.slane %v1078, 4
        %v1081 = vshll.u32 %v888, 16
        %v1083 = vrot.slane %v1081, 5
        %v1084 = vsel %vm926, %v1079, %v1083
        %v1085 = vshrl.u32 %v888, 16
        %v1087 = vrot.slane %v1085, 4
        %v1088 = vor.u32 %v1087, %v1083
        %v1089 = vrot.slane %v1088, 4
        %v1091 = vshll.u32 %v914, 16
        %v1093 = vrot.slane %v1091, 5
        %v1094 = vsel %vm926, %v1089, %v1093
        %v1096 = vshrl.u32 %v889, 16
        %v1098 = vrot.slane %v1096, 4
        %v1099 = vshll.u32 %v889, 16
        %v1101 = vrot.slane %v1099, 5
        %v1102 = vor.u32 %v1098, %v1101
        %v1103 = vrot.slane %v1102, 4
        %v1105 = vshll.u32 %v890, 16
        %v1107 = vrot.slane %v1105, 5
        %v1108 = vsel %vm926, %v1103, %v1107
        %v1109 = vshrl.u32 %v890, 16
        %v1111 = vrot.slane %v1109, 4
        %v1112 = vor.u32 %v1111, %v1107
        %v1113 = vrot.slane %v1112, 4
        %v1115 = vshll.u32 %v915, 16
        %v1117 = vrot.slane %v1115, 5
        %v1118 = vsel %vm926, %v1113, %v1117
        %v1120 = vshrl.u32 %v891, 16
        %v1122 = vrot.slane %v1120, 4
        %v1123 = vshll.u32 %v891, 16
        %v1125 = vrot.slane %v1123, 5
        %v1126 = vor.u32 %v1122, %v1125
        %v1127 = vrot.slane %v1126, 4
        %v1129 = vshll.u32 %v892, 16
        %v1131 = vrot.slane %v1129, 5
        %v1132 = vsel %vm926, %v1127, %v1131
        %v1133 = vshrl.u32 %v892, 16
        %v1135 = vrot.slane %v1133, 4
        %v1136 = vor.u32 %v1135, %v1131
        %v1137 = vrot.slane %v1136, 4
        %v1139 = vshll.u32 %v916, 16
        %v1141 = vrot.slane %v1139, 5
        %v1142 = vsel %vm926, %v1137, %v1141
        %v1144 = vshrl.u32 %v893, 16
        %v1146 = vrot.slane %v1144, 4
        %v1147 = vshll.u32 %v893, 16
        %v1149 = vrot.slane %v1147, 5
        %v1150 = vor.u32 %v1146, %v1149
        %v1151 = vrot.slane %v1150, 4
        %v1153 = vshll.u32 %v894, 16
        %v1155 = vrot.slane %v1153, 5
        %v1156 = vsel %vm926, %v1151, %v1155
        %v1157 = vshrl.u32 %v894, 16
        %v1159 = vrot.slane %v1157, 4
        %v1160 = vor.u32 %v1159, %v1155
        %v1161 = vrot.slane %v1160, 4
        %v1163 = vshll.u32 %v917, 16
        %v1165 = vrot.slane %v1163, 5
        %v1166 = vsel %vm926, %v1161, %v1165
        %v1168 = vshrl.u32 %v895, 16
        %v1170 = vrot.slane %v1168, 4
        %v1171 = vshll.u32 %v895, 16
        %v1173 = vrot.slane %v1171, 5
        %v1174 = vor.u32 %v1170, %v1173
        %v1175 = vrot.slane %v1174, 4
        %v1177 = vshll.u32 %v896, 16
        %v1179 = vrot.slane %v1177, 5
        %v1180 = vsel %vm926, %v1175, %v1179
        %v1181 = vshrl.u32 %v896, 16
        %v1183 = vrot.slane %v1181, 4
        %v1184 = vor.u32 %v1183, %v1179
        %v1185 = vrot.slane %v1184, 4
        %v1187 = vshll.u32 %v918, 16
        %v1189 = vrot.slane %v1187, 5
        %v1190 = vsel %vm926, %v1185, %v1189
        %v1192 = vshrl.u32 %v897, 16
        %v1194 = vrot.slane %v1192, 4
        %v1195 = vshll.u32 %v897, 16
        %v1197 = vrot.slane %v1195, 5
        %v1198 = vor.u32 %v1194, %v1197
        %v1199 = vrot.slane %v1198, 4
        %v1201 = vshll.u32 %v898, 16
        %v1203 = vrot.slane %v1201, 5
        %v1204 = vsel %vm926, %v1199, %v1203
        %v1205 = vshrl.u32 %v898, 16
        %v1207 = vrot.slane %v1205, 4
        %v1208 = vor.u32 %v1207, %v1203
        %v1209 = vrot.slane %v1208, 4
        %v1211 = vshll.u32 %v919, 16
        %v1213 = vrot.slane %v1211, 5
        %v1214 = vsel %vm926, %v1209, %v1213
        %v1216 = vshrl.u32 %v899, 16
        %v1218 = vrot.slane %v1216, 4
        %v1219 = vshll.u32 %v899, 16
        %v1221 = vrot.slane %v1219, 5
        %v1222 = vor.u32 %v1218, %v1221
        %v1223 = vrot.slane %v1222, 4
        %v1225 = vshll.u32 %v900, 16
        %v1227 = vrot.slane %v1225, 5
        %v1228 = vsel %vm926, %v1223, %v1227
        %v1229 = vshrl.u32 %v900, 16
        %v1231 = vrot.slane %v1229, 4
        %v1232 = vor.u32 %v1231, %v1227
        %v1233 = vrot.slane %v1232, 4
        %v1235 = vshll.u32 %v920, 16
        %v1237 = vrot.slane %v1235, 5
        %v1238 = vsel %vm926, %v1233, %v1237
        %v1240 = vshrl.u32 %v901, 16
        %v1242 = vrot.slane %v1240, 4
        %v1243 = vshll.u32 %v901, 16
        %v1245 = vrot.slane %v1243, 5
        %v1246 = vor.u32 %v1242, %v1245
        %v1247 = vrot.slane %v1246, 4
        %v1249 = vshll.u32 %v902, 16
        %v1251 = vrot.slane %v1249, 5
        %v1252 = vsel %vm926, %v1247, %v1251
        %v1253 = vshrl.u32 %v902, 16
        %v1255 = vrot.slane %v1253, 4
        %v1256 = vor.u32 %v1255, %v1251
        %v1257 = vrot.slane %v1256, 4
        %v1259 = vshll.u32 %v921, 16
        %v1261 = vrot.slane %v1259, 5
        %v1262 = vsel %vm926, %v1257, %v1261
        %v1264 = vshrl.u32 %v903, 16
        %v1266 = vrot.slane %v1264, 4
        %v1267 = vshll.u32 %v903, 16
        %v1269 = vrot.slane %v1267, 5
        %v1270 = vor.u32 %v1266, %v1269
        %v1271 = vrot.slane %v1270, 4
        %v1273 = vshll.u32 %v904, 16
        %v1275 = vrot.slane %v1273, 5
        %v1276 = vsel %vm926, %v1271, %v1275
        %v1277 = vshrl.u32 %v904, 16
        %v1279 = vrot.slane %v1277, 4
        %v1280 = vor.u32 %v1279, %v1275
        %v1281 = vrot.slane %v1280, 4
        %v1283 = vshll.u32 %v922, 16
        %v1285 = vrot.slane %v1283, 5
        %v1286 = vsel %vm926, %v1281, %v1285
        %v1288 = vshrl.u32 %v905, 16
        %v1290 = vrot.slane %v1288, 4
        %v1291 = vshll.u32 %v905, 16
        %v1293 = vrot.slane %v1291, 5
        %v1294 = vor.u32 %v1290, %v1293
        %v1295 = vrot.slane %v1294, 4
        %v1297 = vshll.u32 %v906, 16
        %v1299 = vrot.slane %v1297, 5
        %v1300 = vsel %vm926, %v1295, %v1299
        %v1301 = vshrl.u32 %v906, 16
        %v1303 = vrot.slane %v1301, 4
        %v1304 = vor.u32 %v1303, %v1299
        %v1305 = vrot.slane %v1304, 4
        %v1307 = vshll.u32 %v923, 16
        %v1309 = vrot.slane %v1307, 5
        %v1310 = vsel %vm926, %v1305, %v1309
        %s1311 = scalar_lea.vmem %s866, 2
        %v1312 = vld [vmem:[%s1311] sm:$0x3]
        %v1313 = vunpack.c.l.b16 %v940
        %v1314 = vunpack.c.l.b16 %v950
        %v1315 = vunpack.c.l.b16 %v964
        %v1316 = vunpack.c.l.b16 %v974
        %v1317 = vunpack.c.l.b16 %v988
        %v1318 = vunpack.c.l.b16 %v998
        %v1319 = vunpack.c.l.b16 %v1012
        %v1320 = vunpack.c.l.b16 %v1022
        %v1321 = vunpack.c.l.b16 %v1036
        %v1322 = vunpack.c.l.b16 %v1046
        %v1323 = vunpack.c.l.b16 %v1060
        %v1324 = vunpack.c.l.b16 %v1070
        %v1325 = vunpack.c.l.b16 %v1084
        %v1326 = vunpack.c.l.b16 %v1094
        %v1327 = vunpack.c.l.b16 %v1108
        %v1328 = vunpack.c.l.b16 %v1118
        %v1329 = vunpack.c.l.b16 %v1132
        %v1330 = vunpack.c.l.b16 %v1142
        %v1331 = vunpack.c.l.b16 %v1156
        %v1332 = vunpack.c.l.b16 %v1166
        %v1333 = vunpack.c.l.b16 %v1180
        %v1334 = vunpack.c.l.b16 %v1190
        %v1335 = vunpack.c.l.b16 %v1204
        %v1336 = vunpack.c.l.b16 %v1214
        %v1337 = vunpack.c.l.b16 %v1228
        %v1338 = vunpack.c.l.b16 %v1238
        %v1339 = vunpack.c.l.b16 %v1252
        %v1340 = vunpack.c.l.b16 %v1262
        %v1341 = vunpack.c.l.b16 %v1276
        %v1342 = vunpack.c.l.b16 %v1286
        %v1343 = vunpack.c.l.b16 %v1300
        %v1344 = vunpack.c.l.b16 %v1310
        %v1345 = vpack.c.b16 %v1314, %v1313
        %v1346 = vpack.c.b16 %v1316, %v1315
        %v1347 = vpack.c.b16 %v1318, %v1317
        %v1348 = vpack.c.b16 %v1320, %v1319
        %v1349 = vpack.c.b16 %v1322, %v1321
        %v1350 = vpack.c.b16 %v1324, %v1323
        %v1351 = vpack.c.b16 %v1326, %v1325
        %v1352 = vpack.c.b16 %v1328, %v1327
        %v1353 = vpack.c.b16 %v1330, %v1329
        %v1354 = vpack.c.b16 %v1332, %v1331
        %v1355 = vpack.c.b16 %v1334, %v1333
        %v1356 = vpack.c.b16 %v1336, %v1335
        %v1357 = vpack.c.b16 %v1338, %v1337
        %v1358 = vpack.c.b16 %v1340, %v1339
        %v1359 = vpack.c.b16 %v1342, %v1341
        %v1360 = vpack.c.b16 %v1344, %v1343
        %vm1361 = vcmask 31744
        %v1363 = vsel %vm1361, %v1345, 0
        %v1366 = vsel %vm1361, %v1346, 0
        %v1369 = vsel %vm1361, %v1347, 0
        %v1372 = vsel %vm1361, %v1348, 0
        %v1375 = vsel %vm1361, %v1349, 0
        %v1378 = vsel %vm1361, %v1350, 0
        %v1381 = vsel %vm1361, %v1351, 0
        %v1384 = vsel %vm1361, %v1352, 0
        %v1387 = vsel %vm1361, %v1353, 0
        %v1390 = vsel %vm1361, %v1354, 0
        %v1393 = vsel %vm1361, %v1355, 0
        %v1396 = vsel %vm1361, %v1356, 0
        %v1399 = vsel %vm1361, %v1357, 0
        %v1402 = vsel %vm1361, %v1358, 0
        %v1405 = vsel %vm1361, %v1359, 0
        %v1408 = vsel %vm1361, %v1360, 0
        %vm1410 = vcmask 1041408
        %v1412 = vsel %vm1410, %v1312, 0
        %1414 = vmatprep.subr.bf16.mxu0 0
        %1415 = vmatpush1.bf16.msra.mxu0 0
        %1416 = vmatprep.subr.bf16.mxu0 0
        %1417 = vmatpush1.bf16.msra.mxu0 0
        %1418 = vmatprep.subr.bf16.mxu0 0
        %1419 = vmatpush1.bf16.msra.mxu0 0
        %1420 = vmatprep.subr.bf16.mxu0 0
        %1421 = vmatpush1.bf16.msra.mxu0 0
        %1422 = vmatprep.subr.bf16.mxu0 0
        %1423 = vmatpush1.bf16.msra.mxu0 0
        %1424 = vmatprep.subr.bf16.mxu0 0
        %1425 = vmatpush1.bf16.msra.mxu0 0
        %1426 = vmatprep.subr.bf16.mxu0 0
        %1427 = vmatpush1.bf16.msra.mxu0 0
        %1428 = vmatprep.subr.bf16.mxu0 0
        %1429 = vmatpush1.bf16.msra.mxu0 %v1412
        %1430 = vmatprep.subr.bf16.mxu0 0
        %1431 = vmatpush2.bf16.msra.mxu0 0
        %1432 = vmatprep.subr.bf16.mxu0 0
        %1433 = vmatpush2.bf16.msra.mxu0 0
        %1434 = vmatprep.subr.bf16.mxu0 0
        %1435 = vmatpush2.bf16.msra.mxu0 0
        %1436 = vmatprep.subr.bf16.mxu0 0
        %1437 = vmatpush2.bf16.msra.mxu0 0
        %1438 = vmatprep.subr.bf16.mxu0 0
        %1439 = vmatpush2.bf16.msra.mxu0 0
        %1440 = vmatprep.subr.bf16.mxu0 0
        %1441 = vmatpush2.bf16.msra.mxu0 0
        %1442 = vmatprep.subr.bf16.mxu0 0
        %1443 = vmatpush2.bf16.msra.mxu0 0
        %1444 = vmatprep.subr.bf16.mxu0 0
        %1445 = vmatpush2.bf16.msra.mxu0 0
        %1446 = vmatprep.mubr.bf16.mxu0 0
        %1447 = vmatmul.mubr.bf16.gmra.mxu0 %v1363
        %v1448 = vpop.f32.mrf.mxu0
        %v1449 = vadd.f32 0.0, %v1448
        %v1450 = vpop.f32.mrf.mxu0
        %v1451 = vpop.f32.mrf.mxu0
        %v1452 = vadd.f32 0.0, %v1451
        %v1453 = vpop.f32.mrf.mxu0
        %1454 = vmatprep.mubr.bf16.mxu0 0
        %1455 = vmatmul.mubr.bf16.gmra.mxu0 %v1366
        %v1456 = vpop.f32.mrf.mxu0
        %v1457 = vadd.f32 0.0, %v1456
        %v1458 = vpop.f32.mrf.mxu0
        %v1459 = vpop.f32.mrf.mxu0
        %v1460 = vadd.f32 0.0, %v1459
        %v1461 = vpop.f32.mrf.mxu0
        %1462 = vmatprep.mubr.bf16.mxu0 0
        %1463 = vmatmul.mubr.bf16.gmra.mxu0 %v1369
        %v1464 = vpop.f32.mrf.mxu0
        %v1465 = vadd.f32 0.0, %v1464
        %v1466 = vpop.f32.mrf.mxu0
        %v1467 = vpop.f32.mrf.mxu0
        %v1468 = vadd.f32 0.0, %v1467
        %v1469 = vpop.f32.mrf.mxu0
        %1470 = vmatprep.mubr.bf16.mxu0 0
        %1471 = vmatmul.mubr.bf16.gmra.mxu0 %v1372
        %v1472 = vpop.f32.mrf.mxu0
        %v1473 = vadd.f32 0.0, %v1472
        %v1474 = vpop.f32.mrf.mxu0
        %v1475 = vpop.f32.mrf.mxu0
        %v1476 = vadd.f32 0.0, %v1475
        %v1477 = vpop.f32.mrf.mxu0
        %1478 = vmatprep.mubr.bf16.mxu0 0
        %1479 = vmatmul.mubr.bf16.gmra.mxu0 %v1375
        %v1480 = vpop.f32.mrf.mxu0
        %v1481 = vadd.f32 0.0, %v1480
        %v1482 = vpop.f32.mrf.mxu0
        %v1483 = vpop.f32.mrf.mxu0
        %v1484 = vadd.f32 0.0, %v1483
        %v1485 = vpop.f32.mrf.mxu0
        %1486 = vmatprep.mubr.bf16.mxu0 0
        %1487 = vmatmul.mubr.bf16.gmra.mxu0 %v1378
        %v1488 = vpop.f32.mrf.mxu0
        %v1489 = vadd.f32 0.0, %v1488
        %v1490 = vpop.f32.mrf.mxu0
        %v1491 = vpop.f32.mrf.mxu0
        %v1492 = vadd.f32 0.0, %v1491
        %v1493 = vpop.f32.mrf.mxu0
        %1494 = vmatprep.mubr.bf16.mxu0 0
        %1495 = vmatmul.mubr.bf16.gmra.mxu0 %v1381
        %v1496 = vpop.f32.mrf.mxu0
        %v1497 = vadd.f32 0.0, %v1496
        %v1498 = vpop.f32.mrf.mxu0
        %v1499 = vpop.f32.mrf.mxu0
        %v1500 = vadd.f32 0.0, %v1499
        %v1501 = vpop.f32.mrf.mxu0
        %1502 = vmatprep.mubr.bf16.mxu0 0
        %1503 = vmatmul.mubr.bf16.gmra.mxu0 %v1384
        %v1504 = vpop.f32.mrf.mxu0
        %v1505 = vadd.f32 0.0, %v1504
        %v1506 = vpop.f32.mrf.mxu0
        %v1507 = vpop.f32.mrf.mxu0
        %v1508 = vadd.f32 0.0, %v1507
        %v1509 = vpop.f32.mrf.mxu0
        %1510 = vmatprep.mubr.bf16.mxu0 0
        %1511 = vmatmul.mubr.bf16.gmra.mxu0 %v1387
        %v1512 = vpop.f32.mrf.mxu0
        %v1513 = vadd.f32 0.0, %v1512
        %v1514 = vpop.f32.mrf.mxu0
        %v1515 = vpop.f32.mrf.mxu0
        %v1516 = vadd.f32 0.0, %v1515
        %v1517 = vpop.f32.mrf.mxu0
        %1518 = vmatprep.mubr.bf16.mxu0 0
        %1519 = vmatmul.mubr.bf16.gmra.mxu0 %v1390
        %v1520 = vpop.f32.mrf.mxu0
        %v1521 = vadd.f32 0.0, %v1520
        %v1522 = vpop.f32.mrf.mxu0
        %v1523 = vpop.f32.mrf.mxu0
        %v1524 = vadd.f32 0.0, %v1523
        %v1525 = vpop.f32.mrf.mxu0
        %1526 = vmatprep.mubr.bf16.mxu0 0
        %1527 = vmatmul.mubr.bf16.gmra.mxu0 %v1393
        %v1528 = vpop.f32.mrf.mxu0
        %v1529 = vadd.f32 0.0, %v1528
        %v1530 = vpop.f32.mrf.mxu0
        %v1531 = vpop.f32.mrf.mxu0
        %v1532 = vadd.f32 0.0, %v1531
        %v1533 = vpop.f32.mrf.mxu0
        %1534 = vmatprep.mubr.bf16.mxu0 0
        %1535 = vmatmul.mubr.bf16.gmra.mxu0 %v1396
        %v1536 = vpop.f32.mrf.mxu0
        %v1537 = vadd.f32 0.0, %v1536
        %v1538 = vpop.f32.mrf.mxu0
        %v1539 = vpop.f32.mrf.mxu0
        %v1540 = vadd.f32 0.0, %v1539
        %v1541 = vpop.f32.mrf.mxu0
        %1542 = vmatprep.mubr.bf16.mxu0 0
        %1543 = vmatmul.mubr.bf16.gmra.mxu0 %v1399
        %v1544 = vpop.f32.mrf.mxu0
        %v1545 = vadd.f32 0.0, %v1544
        %v1546 = vpop.f32.mrf.mxu0
        %v1547 = vpop.f32.mrf.mxu0
        %v1548 = vadd.f32 0.0, %v1547
        %v1549 = vpop.f32.mrf.mxu0
        %1550 = vmatprep.mubr.bf16.mxu0 0
        %1551 = vmatmul.mubr.bf16.gmra.mxu0 %v1402
        %v1552 = vpop.f32.mrf.mxu0
        %v1553 = vadd.f32 0.0, %v1552
        %v1554 = vpop.f32.mrf.mxu0
        %v1555 = vpop.f32.mrf.mxu0
        %v1556 = vadd.f32 0.0, %v1555
        %v1557 = vpop.f32.mrf.mxu0
        %1558 = vmatprep.mubr.bf16.mxu0 0
        %1559 = vmatmul.mubr.bf16.gmra.mxu0 %v1405
        %v1560 = vpop.f32.mrf.mxu0
        %v1561 = vadd.f32 0.0, %v1560
        %v1562 = vpop.f32.mrf.mxu0
        %v1563 = vpop.f32.mrf.mxu0
        %v1564 = vadd.f32 0.0, %v1563
        %v1565 = vpop.f32.mrf.mxu0
        %1566 = vmatprep.mubr.bf16.mxu0 0
        %1567 = vmatmul.mubr.bf16.gmra.mxu0 %v1408
        %v1568 = vpop.f32.mrf.mxu0
        %v1569 = vadd.f32 0.0, %v1568
        %v1570 = vpop.f32.mrf.mxu0
        %v1571 = vpop.f32.mrf.mxu0
        %v1572 = vadd.f32 0.0, %v1571
        %v1573 = vpop.f32.mrf.mxu0
        %1574 = vdwg.mxu0
        %v1607 = vunpack.c.l.b16 %v875
        %v1608 = vunpack.c.l.b16 %v876
        %v1609 = vunpack.c.l.b16 %v877
        %v1610 = vunpack.c.l.b16 %v878
        %v1611 = vunpack.c.l.b16 %v879
        %v1612 = vunpack.c.l.b16 %v880
        %v1613 = vunpack.c.l.b16 %v881
        %v1614 = vunpack.c.l.b16 %v882
        %v1615 = vunpack.c.l.b16 %v883
        %v1616 = vunpack.c.l.b16 %v884
        %v1617 = vunpack.c.l.b16 %v885
        %v1618 = vunpack.c.l.b16 %v886
        %v1619 = vunpack.c.l.b16 %v887
        %v1620 = vunpack.c.l.b16 %v888
        %v1621 = vunpack.c.l.b16 %v889
        %v1622 = vunpack.c.l.b16 %v890
        %v1623 = vunpack.c.l.b16 %v891
        %v1624 = vunpack.c.l.b16 %v892
        %v1625 = vunpack.c.l.b16 %v893
        %v1626 = vunpack.c.l.b16 %v894
        %v1627 = vunpack.c.l.b16 %v895
        %v1628 = vunpack.c.l.b16 %v896
        %v1629 = vunpack.c.l.b16 %v897
        %v1630 = vunpack.c.l.b16 %v898
        %v1631 = vunpack.c.l.b16 %v899
        %v1632 = vunpack.c.l.b16 %v900
        %v1633 = vunpack.c.l.b16 %v901
        %v1634 = vunpack.c.l.b16 %v902
        %v1635 = vunpack.c.l.b16 %v903
        %v1636 = vunpack.c.l.b16 %v904
        %v1637 = vunpack.c.l.b16 %v905
        %v1638 = vunpack.c.l.b16 %v906
        %v1639 = vpack.c.b16 %v1608, %v1607
        %v1640 = vpack.c.b16 %v1610, %v1609
        %v1641 = vpack.c.b16 %v1612, %v1611
        %v1642 = vpack.c.b16 %v1614, %v1613
        %v1643 = vpack.c.b16 %v1616, %v1615
        %v1644 = vpack.c.b16 %v1618, %v1617
        %v1645 = vpack.c.b16 %v1620, %v1619
        %v1646 = vpack.c.b16 %v1622, %v1621
        %v1647 = vpack.c.b16 %v1624, %v1623
        %v1648 = vpack.c.b16 %v1626, %v1625
        %v1649 = vpack.c.b16 %v1628, %v1627
        %v1650 = vpack.c.b16 %v1630, %v1629
        %v1651 = vpack.c.b16 %v1632, %v1631
        %v1652 = vpack.c.b16 %v1634, %v1633
        %v1653 = vpack.c.b16 %v1636, %v1635
        %v1654 = vpack.c.b16 %v1638, %v1637
        %v1656 = vsel %vm1361, %v1639, 0
        %v1659 = vsel %vm1361, %v1640, 0
        %v1662 = vsel %vm1361, %v1641, 0
        %v1665 = vsel %vm1361, %v1642, 0
        %v1668 = vsel %vm1361, %v1643, 0
        %v1671 = vsel %vm1361, %v1644, 0
        %v1674 = vsel %vm1361, %v1645, 0
        %v1677 = vsel %vm1361, %v1646, 0
        %v1680 = vsel %vm1361, %v1647, 0
        %v1683 = vsel %vm1361, %v1648, 0
        %v1686 = vsel %vm1361, %v1649, 0
        %v1689 = vsel %vm1361, %v1650, 0
        %v1692 = vsel %vm1361, %v1651, 0
        %v1695 = vsel %vm1361, %v1652, 0
        %v1698 = vsel %vm1361, %v1653, 0
        %v1701 = vsel %vm1361, %v1654, 0
        %v1704 = vsel %vm1410, %v907, 0
        %1706 = vmatprep.subr.bf16.mxu0 0
        %1707 = vmatpush1.bf16.msra.mxu0 0
        %1708 = vmatprep.subr.bf16.mxu0 0
        %1709 = vmatpush1.bf16.msra.mxu0 0
        %1710 = vmatprep.subr.bf16.mxu0 0
        %1711 = vmatpush1.bf16.msra.mxu0 0
        %1712 = vmatprep.subr.bf16.mxu0 0
        %1713 = vmatpush1.bf16.msra.mxu0 0
        %1714 = vmatprep.subr.bf16.mxu0 0
        %1715 = vmatpush1.bf16.msra.mxu0 0
        %1716 = vmatprep.subr.bf16.mxu0 0
        %1717 = vmatpush1.bf16.msra.mxu0 0
        %1718 = vmatprep.subr.bf16.mxu0 0
        %1719 = vmatpush1.bf16.msra.mxu0 0
        %1720 = vmatprep.subr.bf16.mxu0 0
        %1721 = vmatpush1.bf16.msra.mxu0 %v1704
        %1722 = vmatprep.subr.bf16.mxu0 0
        %1723 = vmatpush2.bf16.msra.mxu0 0
        %1724 = vmatprep.subr.bf16.mxu0 0
        %1725 = vmatpush2.bf16.msra.mxu0 0
        %1726 = vmatprep.subr.bf16.mxu0 0
        %1727 = vmatpush2.bf16.msra.mxu0 0
        %1728 = vmatprep.subr.bf16.mxu0 0
        %1729 = vmatpush2.bf16.msra.mxu0 0
        %1730 = vmatprep.subr.bf16.mxu0 0
        %1731 = vmatpush2.bf16.msra.mxu0 0
        %1732 = vmatprep.subr.bf16.mxu0 0
        %1733 = vmatpush2.bf16.msra.mxu0 0
        %1734 = vmatprep.subr.bf16.mxu0 0
        %1735 = vmatpush2.bf16.msra.mxu0 0
        %1736 = vmatprep.subr.bf16.mxu0 0
        %1737 = vmatpush2.bf16.msra.mxu0 0
        %1738 = vmatprep.mubr.bf16.mxu0 0
        %1739 = vmatmul.mubr.bf16.gmra.mxu0 %v1656
        %v1740 = vpop.f32.mrf.mxu0
        %v1741 = vadd.f32 %v1449, %v1740
        %v1742 = vpop.f32.mrf.mxu0
        %v1743 = vpop.f32.mrf.mxu0
        %v1744 = vadd.f32 %v1452, %v1743
        %v1745 = vpop.f32.mrf.mxu0
        %1746 = vmatprep.mubr.bf16.mxu0 0
        %1747 = vmatmul.mubr.bf16.gmra.mxu0 %v1659
        %v1748 = vpop.f32.mrf.mxu0
        %v1749 = vadd.f32 %v1457, %v1748
        %v1750 = vpop.f32.mrf.mxu0
        %v1751 = vpop.f32.mrf.mxu0
        %v1752 = vadd.f32 %v1460, %v1751
        %v1753 = vpop.f32.mrf.mxu0
        %1754 = vmatprep.mubr.bf16.mxu0 0
        %1755 = vmatmul.mubr.bf16.gmra.mxu0 %v1662
        %v1756 = vpop.f32.mrf.mxu0
        %v1757 = vadd.f32 %v1465, %v1756
        %v1758 = vpop.f32.mrf.mxu0
        %v1759 = vpop.f32.mrf.mxu0
        %v1760 = vadd.f32 %v1468, %v1759
        %v1761 = vpop.f32.mrf.mxu0
        %1762 = vmatprep.mubr.bf16.mxu0 0
        %1763 = vmatmul.mubr.bf16.gmra.mxu0 %v1665
        %v1764 = vpop.f32.mrf.mxu0
        %v1765 = vadd.f32 %v1473, %v1764
        %v1766 = vpop.f32.mrf.mxu0
        %v1767 = vpop.f32.mrf.mxu0
        %v1768 = vadd.f32 %v1476, %v1767
        %v1769 = vpop.f32.mrf.mxu0
        %1770 = vmatprep.mubr.bf16.mxu0 0
        %1771 = vmatmul.mubr.bf16.gmra.mxu0 %v1668
        %v1772 = vpop.f32.mrf.mxu0
        %v1773 = vadd.f32 %v1481, %v1772
        %v1774 = vpop.f32.mrf.mxu0
        %v1775 = vpop.f32.mrf.mxu0
        %v1776 = vadd.f32 %v1484, %v1775
        %v1777 = vpop.f32.mrf.mxu0
        %1778 = vmatprep.mubr.bf16.mxu0 0
        %1779 = vmatmul.mubr.bf16.gmra.mxu0 %v1671
        %v1780 = vpop.f32.mrf.mxu0
        %v1781 = vadd.f32 %v1489, %v1780
        %v1782 = vpop.f32.mrf.mxu0
        %v1783 = vpop.f32.mrf.mxu0
        %v1784 = vadd.f32 %v1492, %v1783
        %v1785 = vpop.f32.mrf.mxu0
        %1786 = vmatprep.mubr.bf16.mxu0 0
        %1787 = vmatmul.mubr.bf16.gmra.mxu0 %v1674
        %v1788 = vpop.f32.mrf.mxu0
        %v1789 = vadd.f32 %v1497, %v1788
        %v1790 = vpop.f32.mrf.mxu0
        %v1791 = vpop.f32.mrf.mxu0
        %v1792 = vadd.f32 %v1500, %v1791
        %v1793 = vpop.f32.mrf.mxu0
        %1794 = vmatprep.mubr.bf16.mxu0 0
        %1795 = vmatmul.mubr.bf16.gmra.mxu0 %v1677
        %v1796 = vpop.f32.mrf.mxu0
        %v1797 = vadd.f32 %v1505, %v1796
        %v1798 = vpop.f32.mrf.mxu0
        %v1799 = vpop.f32.mrf.mxu0
        %v1800 = vadd.f32 %v1508, %v1799
        %v1801 = vpop.f32.mrf.mxu0
        %1802 = vmatprep.mubr.bf16.mxu0 0
        %1803 = vmatmul.mubr.bf16.gmra.mxu0 %v1680
        %v1804 = vpop.f32.mrf.mxu0
        %v1805 = vadd.f32 %v1513, %v1804
        %v1806 = vpop.f32.mrf.mxu0
        %v1807 = vpop.f32.mrf.mxu0
        %v1808 = vadd.f32 %v1516, %v1807
        %v1809 = vpop.f32.mrf.mxu0
        %1810 = vmatprep.mubr.bf16.mxu0 0
        %1811 = vmatmul.mubr.bf16.gmra.mxu0 %v1683
        %v1812 = vpop.f32.mrf.mxu0
        %v1813 = vadd.f32 %v1521, %v1812
        %v1814 = vpop.f32.mrf.mxu0
        %v1815 = vpop.f32.mrf.mxu0
        %v1816 = vadd.f32 %v1524, %v1815
        %v1817 = vpop.f32.mrf.mxu0
        %1818 = vmatprep.mubr.bf16.mxu0 0
        %1819 = vmatmul.mubr.bf16.gmra.mxu0 %v1686
        %v1820 = vpop.f32.mrf.mxu0
        %v1821 = vadd.f32 %v1529, %v1820
        %v1822 = vpop.f32.mrf.mxu0
        %v1823 = vpop.f32.mrf.mxu0
        %v1824 = vadd.f32 %v1532, %v1823
        %v1825 = vpop.f32.mrf.mxu0
        %1826 = vmatprep.mubr.bf16.mxu0 0
        %1827 = vmatmul.mubr.bf16.gmra.mxu0 %v1689
        %v1828 = vpop.f32.mrf.mxu0
        %v1829 = vadd.f32 %v1537, %v1828
        %v1830 = vpop.f32.mrf.mxu0
        %v1831 = vpop.f32.mrf.mxu0
        %v1832 = vadd.f32 %v1540, %v1831
        %v1833 = vpop.f32.mrf.mxu0
        %1834 = vmatprep.mubr.bf16.mxu0 0
        %1835 = vmatmul.mubr.bf16.gmra.mxu0 %v1692
        %v1836 = vpop.f32.mrf.mxu0
        %v1837 = vadd.f32 %v1545, %v1836
        %v1838 = vpop.f32.mrf.mxu0
        %v1839 = vpop.f32.mrf.mxu0
        %v1840 = vadd.f32 %v1548, %v1839
        %v1841 = vpop.f32.mrf.mxu0
        %1842 = vmatprep.mubr.bf16.mxu0 0
        %1843 = vmatmul.mubr.bf16.gmra.mxu0 %v1695
        %v1844 = vpop.f32.mrf.mxu0
        %v1845 = vadd.f32 %v1553, %v1844
        %v1846 = vpop.f32.mrf.mxu0
        %v1847 = vpop.f32.mrf.mxu0
        %v1848 = vadd.f32 %v1556, %v1847
        %v1849 = vpop.f32.mrf.mxu0
        %1850 = vmatprep.mubr.bf16.mxu0 0
        %1851 = vmatmul.mubr.bf16.gmra.mxu0 %v1698
        %v1852 = vpop.f32.mrf.mxu0
        %v1853 = vadd.f32 %v1561, %v1852
        %v1854 = vpop.f32.mrf.mxu0
        %v1855 = vpop.f32.mrf.mxu0
        %v1856 = vadd.f32 %v1564, %v1855
        %v1857 = vpop.f32.mrf.mxu0
        %1858 = vmatprep.mubr.bf16.mxu0 0
        %1859 = vmatmul.mubr.bf16.gmra.mxu0 %v1701
        %v1860 = vpop.f32.mrf.mxu0
        %v1861 = vadd.f32 %v1569, %v1860
        %v1862 = vpop.f32.mrf.mxu0
        %v1863 = vpop.f32.mrf.mxu0
        %v1864 = vadd.f32 %v1572, %v1863
        %v1865 = vpop.f32.mrf.mxu0
        %1866 = vdwg.mxu0
        %v1867 = vld [vmem:[%s829] sm:$0xe]
        %v1868 = vld [vmem:[%s829 + $0xc] sm:$0xe]
        %v1869 = vld [vmem:[%s829 + $0x18] sm:$0xe]
        %v1870 = vld [vmem:[%s829 + $0x24] sm:$0xe]
        %v1871 = vld [vmem:[%s829 + $0x30] sm:$0xe]
        %v1872 = vld [vmem:[%s829 + $0x3c] sm:$0xe]
        %v1873 = vld [vmem:[%s829 + $0x48] sm:$0xe]
        %v1874 = vld [vmem:[%s829 + $0x54] sm:$0xe]
        %v1875 = vld [vmem:[%s829 + $0x60] sm:$0xe]
        %v1876 = vld [vmem:[%s829 + $0x6c] sm:$0xe]
        %v1877 = vld [vmem:[%s829 + $0x78] sm:$0xe]
        %v1878 = vld [vmem:[%s829 + $0x84] sm:$0xe]
        %v1879 = vld [vmem:[%s829 + $0x90] sm:$0xe]
        %v1880 = vld [vmem:[%s829 + $0x9c] sm:$0xe]
        %v1881 = vld [vmem:[%s829 + $0xa8] sm:$0xe]
        %v1882 = vld [vmem:[%s829 + $0xb4] sm:$0xe]
        %vm1915 = vcmask 1042432
        %vm1916 = vcmask 1046532
        %vm1917 = vmor %vm1915, %vm1916
        %v1918 = vrot.slane %v1867, 5
        %v1919 = vrot.slane %v1918, 4
        %v1920 = vrot.slane %v876, 5
        %v1921 = vsel %vm1917, %v1919, %v1920
        %v1922 = vrot.slane %v1920, 4
        %v1923 = vrot.slane %v908, 5
        %v1924 = vsel %vm1917, %v1922, %v1923
        %v1925 = vrot.slane %v1868, 5
        %v1926 = vrot.slane %v1925, 4
        %v1927 = vrot.slane %v878, 5
        %v1928 = vsel %vm1917, %v1926, %v1927
        %v1929 = vrot.slane %v1927, 4
        %v1930 = vrot.slane %v909, 5
        %v1931 = vsel %vm1917, %v1929, %v1930
        %v1932 = vrot.slane %v1869, 5
        %v1933 = vrot.slane %v1932, 4
        %v1934 = vrot.slane %v880, 5
        %v1935 = vsel %vm1917, %v1933, %v1934
        %v1936 = vrot.slane %v1934, 4
        %v1937 = vrot.slane %v910, 5
        %v1938 = vsel %vm1917, %v1936, %v1937
        %v1939 = vrot.slane %v1870, 5
        %v1940 = vrot.slane %v1939, 4
        %v1941 = vrot.slane %v882, 5
        %v1942 = vsel %vm1917, %v1940, %v1941
        %v1943 = vrot.slane %v1941, 4
        %v1944 = vrot.slane %v911, 5
        %v1945 = vsel %vm1917, %v1943, %v1944
        %v1946 = vrot.slane %v1871, 5
        %v1947 = vrot.slane %v1946, 4
        %v1948 = vrot.slane %v884, 5
        %v1949 = vsel %vm1917, %v1947, %v1948
        %v1950 = vrot.slane %v1948, 4
        %v1951 = vrot.slane %v912, 5
        %v1952 = vsel %vm1917, %v1950, %v1951
        %v1953 = vrot.slane %v1872, 5
        %v1954 = vrot.slane %v1953, 4
        %v1955 = vrot.slane %v886, 5
        %v1956 = vsel %vm1917, %v1954, %v1955
        %v1957 = vrot.slane %v1955, 4
        %v1958 = vrot.slane %v913, 5
        %v1959 = vsel %vm1917, %v1957, %v1958
        %v1960 = vrot.slane %v1873, 5
        %v1961 = vrot.slane %v1960, 4
        %v1962 = vrot.slane %v888, 5
        %v1963 = vsel %vm1917, %v1961, %v1962
        %v1964 = vrot.slane %v1962, 4
        %v1965 = vrot.slane %v914, 5
        %v1966 = vsel %vm1917, %v1964, %v1965
        %v1967 = vrot.slane %v1874, 5
        %v1968 = vrot.slane %v1967, 4
        %v1969 = vrot.slane %v890, 5
        %v1970 = vsel %vm1917, %v1968, %v1969
        %v1971 = vrot.slane %v1969, 4
        %v1972 = vrot.slane %v915, 5
        %v1973 = vsel %vm1917, %v1971, %v1972
        %v1974 = vrot.slane %v1875, 5
        %v1975 = vrot.slane %v1974, 4
        %v1976 = vrot.slane %v892, 5
        %v1977 = vsel %vm1917, %v1975, %v1976
        %v1978 = vrot.slane %v1976, 4
        %v1979 = vrot.slane %v916, 5
        %v1980 = vsel %vm1917, %v1978, %v1979
        %v1981 = vrot.slane %v1876, 5
        %v1982 = vrot.slane %v1981, 4
        %v1983 = vrot.slane %v894, 5
        %v1984 = vsel %vm1917, %v1982, %v1983
        %v1985 = vrot.slane %v1983, 4
        %v1986 = vrot.slane %v917, 5
        %v1987 = vsel %vm1917, %v1985, %v1986
        %v1988 = vrot.slane %v1877, 5
        %v1989 = vrot.slane %v1988, 4
        %v1990 = vrot.slane %v896, 5
        %v1991 = vsel %vm1917, %v1989, %v1990
        %v1992 = vrot.slane %v1990, 4
        %v1993 = vrot.slane %v918, 5
        %v1994 = vsel %vm1917, %v1992, %v1993
        %v1995 = vrot.slane %v1878, 5
        %v1996 = vrot.slane %v1995, 4
        %v1997 = vrot.slane %v898, 5
        %v1998 = vsel %vm1917, %v1996, %v1997
        %v1999 = vrot.slane %v1997, 4
        %v2000 = vrot.slane %v919, 5
        %v2001 = vsel %vm1917, %v1999, %v2000
        %v2002 = vrot.slane %v1879, 5
        %v2003 = vrot.slane %v2002, 4
        %v2004 = vrot.slane %v900, 5
        %v2005 = vsel %vm1917, %v2003, %v2004
        %v2006 = vrot.slane %v2004, 4
        %v2007 = vrot.slane %v920, 5
        %v2008 = vsel %vm1917, %v2006, %v2007
        %v2009 = vrot.slane %v1880, 5
        %v2010 = vrot.slane %v2009, 4
        %v2011 = vrot.slane %v902, 5
        %v2012 = vsel %vm1917, %v2010, %v2011
        %v2013 = vrot.slane %v2011, 4
        %v2014 = vrot.slane %v921, 5
        %v2015 = vsel %vm1917, %v2013, %v2014
        %v2016 = vrot.slane %v1881, 5
        %v2017 = vrot.slane %v2016, 4
        %v2018 = vrot.slane %v904, 5
        %v2019 = vsel %vm1917, %v2017, %v2018
        %v2020 = vrot.slane %v2018, 4
        %v2021 = vrot.slane %v922, 5
        %v2022 = vsel %vm1917, %v2020, %v2021
        %v2023 = vrot.slane %v1882, 5
        %v2024 = vrot.slane %v2023, 4
        %v2025 = vrot.slane %v906, 5
        %v2026 = vsel %vm1917, %v2024, %v2025
        %v2027 = vrot.slane %v2025, 4
        %v2028 = vrot.slane %v923, 5
        %v2029 = vsel %vm1917, %v2027, %v2028
        %s2030 = scalar_lea.vmem %s866, 4
        %v2031 = vld [vmem:[%s2030] sm:$0x3]
        %v2032 = vunpack.c.l.b16 %v1921
        %v2033 = vunpack.c.l.b16 %v1924
        %v2034 = vunpack.c.l.b16 %v1928
        %v2035 = vunpack.c.l.b16 %v1931
        %v2036 = vunpack.c.l.b16 %v1935
        %v2037 = vunpack.c.l.b16 %v1938
        %v2038 = vunpack.c.l.b16 %v1942
        %v2039 = vunpack.c.l.b16 %v1945
        %v2040 = vunpack.c.l.b16 %v1949
        %v2041 = vunpack.c.l.b16 %v1952
        %v2042 = vunpack.c.l.b16 %v1956
        %v2043 = vunpack.c.l.b16 %v1959
        %v2044 = vunpack.c.l.b16 %v1963
        %v2045 = vunpack.c.l.b16 %v1966
        %v2046 = vunpack.c.l.b16 %v1970
        %v2047 = vunpack.c.l.b16 %v1973
        %v2048 = vunpack.c.l.b16 %v1977
        %v2049 = vunpack.c.l.b16 %v1980
        %v2050 = vunpack.c.l.b16 %v1984
        %v2051 = vunpack.c.l.b16 %v1987
        %v2052 = vunpack.c.l.b16 %v1991
        %v2053 = vunpack.c.l.b16 %v1994
        %v2054 = vunpack.c.l.b16 %v1998
        %v2055 = vunpack.c.l.b16 %v2001
        %v2056 = vunpack.c.l.b16 %v2005
        %v2057 = vunpack.c.l.b16 %v2008
        %v2058 = vunpack.c.l.b16 %v2012
        %v2059 = vunpack.c.l.b16 %v2015
        %v2060 = vunpack.c.l.b16 %v2019
        %v2061 = vunpack.c.l.b16 %v2022
        %v2062 = vunpack.c.l.b16 %v2026
        %v2063 = vunpack.c.l.b16 %v2029
        %v2064 = vpack.c.b16 %v2033, %v2032
        %v2065 = vpack.c.b16 %v2035, %v2034
        %v2066 = vpack.c.b16 %v2037, %v2036
        %v2067 = vpack.c.b16 %v2039, %v2038
        %v2068 = vpack.c.b16 %v2041, %v2040
        %v2069 = vpack.c.b16 %v2043, %v2042
        %v2070 = vpack.c.b16 %v2045, %v2044
        %v2071 = vpack.c.b16 %v2047, %v2046
        %v2072 = vpack.c.b16 %v2049, %v2048
        %v2073 = vpack.c.b16 %v2051, %v2050
        %v2074 = vpack.c.b16 %v2053, %v2052
        %v2075 = vpack.c.b16 %v2055, %v2054
        %v2076 = vpack.c.b16 %v2057, %v2056
        %v2077 = vpack.c.b16 %v2059, %v2058
        %v2078 = vpack.c.b16 %v2061, %v2060
        %v2079 = vpack.c.b16 %v2063, %v2062
        %v2081 = vsel %vm1361, %v2064, 0
        %v2084 = vsel %vm1361, %v2065, 0
        %v2087 = vsel %vm1361, %v2066, 0
        %v2090 = vsel %vm1361, %v2067, 0
        %v2093 = vsel %vm1361, %v2068, 0
        %v2096 = vsel %vm1361, %v2069, 0
        %v2099 = vsel %vm1361, %v2070, 0
        %v2102 = vsel %vm1361, %v2071, 0
        %v2105 = vsel %vm1361, %v2072, 0
        %v2108 = vsel %vm1361, %v2073, 0
        %v2111 = vsel %vm1361, %v2074, 0
        %v2114 = vsel %vm1361, %v2075, 0
        %v2117 = vsel %vm1361, %v2076, 0
        %v2120 = vsel %vm1361, %v2077, 0
        %v2123 = vsel %vm1361, %v2078, 0
        %v2126 = vsel %vm1361, %v2079, 0
        %v2129 = vsel %vm1410, %v2031, 0
        %2131 = vmatprep.subr.bf16.mxu0 0
        %2132 = vmatpush1.bf16.msra.mxu0 0
        %2133 = vmatprep.subr.bf16.mxu0 0
        %2134 = vmatpush1.bf16.msra.mxu0 0
        %2135 = vmatprep.subr.bf16.mxu0 0
        %2136 = vmatpush1.bf16.msra.mxu0 0
        %2137 = vmatprep.subr.bf16.mxu0 0
        %2138 = vmatpush1.bf16.msra.mxu0 0
        %2139 = vmatprep.subr.bf16.mxu0 0
        %2140 = vmatpush1.bf16.msra.mxu0 0
        %2141 = vmatprep.subr.bf16.mxu0 0
        %2142 = vmatpush1.bf16.msra.mxu0 0
        %2143 = vmatprep.subr.bf16.mxu0 0
        %2144 = vmatpush1.bf16.msra.mxu0 0
        %2145 = vmatprep.subr.bf16.mxu0 0
        %2146 = vmatpush1.bf16.msra.mxu0 %v2129
        %2147 = vmatprep.subr.bf16.mxu0 0
        %2148 = vmatpush2.bf16.msra.mxu0 0
        %2149 = vmatprep.subr.bf16.mxu0 0
        %2150 = vmatpush2.bf16.msra.mxu0 0
        %2151 = vmatprep.subr.bf16.mxu0 0
        %2152 = vmatpush2.bf16.msra.mxu0 0
        %2153 = vmatprep.subr.bf16.mxu0 0
        %2154 = vmatpush2.bf16.msra.mxu0 0
        %2155 = vmatprep.subr.bf16.mxu0 0
        %2156 = vmatpush2.bf16.msra.mxu0 0
        %2157 = vmatprep.subr.bf16.mxu0 0
        %2158 = vmatpush2.bf16.msra.mxu0 0
        %2159 = vmatprep.subr.bf16.mxu0 0
        %2160 = vmatpush2.bf16.msra.mxu0 0
        %2161 = vmatprep.subr.bf16.mxu0 0
        %2162 = vmatpush2.bf16.msra.mxu0 0
        %2163 = vmatprep.mubr.bf16.mxu0 0
        %2164 = vmatmul.mubr.bf16.gmra.mxu0 %v2081
        %v2165 = vpop.f32.mrf.mxu0
        %v2166 = vadd.f32 0.0, %v2165
        %v2167 = vpop.f32.mrf.mxu0
        %v2168 = vpop.f32.mrf.mxu0
        %v2169 = vadd.f32 0.0, %v2168
        %v2170 = vpop.f32.mrf.mxu0
        %2171 = vmatprep.mubr.bf16.mxu0 0
        %2172 = vmatmul.mubr.bf16.gmra.mxu0 %v2084
        %v2173 = vpop.f32.mrf.mxu0
        %v2174 = vadd.f32 0.0, %v2173
        %v2175 = vpop.f32.mrf.mxu0
        %v2176 = vpop.f32.mrf.mxu0
        %v2177 = vadd.f32 0.0, %v2176
        %v2178 = vpop.f32.mrf.mxu0
        %2179 = vmatprep.mubr.bf16.mxu0 0
        %2180 = vmatmul.mubr.bf16.gmra.mxu0 %v2087
        %v2181 = vpop.f32.mrf.mxu0
        %v2182 = vadd.f32 0.0, %v2181
        %v2183 = vpop.f32.mrf.mxu0
        %v2184 = vpop.f32.mrf.mxu0
        %v2185 = vadd.f32 0.0, %v2184
        %v2186 = vpop.f32.mrf.mxu0
        %2187 = vmatprep.mubr.bf16.mxu0 0
        %2188 = vmatmul.mubr.bf16.gmra.mxu0 %v2090
        %v2189 = vpop.f32.mrf.mxu0
        %v2190 = vadd.f32 0.0, %v2189
        %v2191 = vpop.f32.mrf.mxu0
        %v2192 = vpop.f32.mrf.mxu0
        %v2193 = vadd.f32 0.0, %v2192
        %v2194 = vpop.f32.mrf.mxu0
        %2195 = vmatprep.mubr.bf16.mxu0 0
        %2196 = vmatmul.mubr.bf16.gmra.mxu0 %v2093
        %v2197 = vpop.f32.mrf.mxu0
        %v2198 = vadd.f32 0.0, %v2197
        %v2199 = vpop.f32.mrf.mxu0
        %v2200 = vpop.f32.mrf.mxu0
        %v2201 = vadd.f32 0.0, %v2200
        %v2202 = vpop.f32.mrf.mxu0
        %2203 = vmatprep.mubr.bf16.mxu0 0
        %2204 = vmatmul.mubr.bf16.gmra.mxu0 %v2096
        %v2205 = vpop.f32.mrf.mxu0
        %v2206 = vadd.f32 0.0, %v2205
        %v2207 = vpop.f32.mrf.mxu0
        %v2208 = vpop.f32.mrf.mxu0
        %v2209 = vadd.f32 0.0, %v2208
        %v2210 = vpop.f32.mrf.mxu0
        %2211 = vmatprep.mubr.bf16.mxu0 0
        %2212 = vmatmul.mubr.bf16.gmra.mxu0 %v2099
        %v2213 = vpop.f32.mrf.mxu0
        %v2214 = vadd.f32 0.0, %v2213
        %v2215 = vpop.f32.mrf.mxu0
        %v2216 = vpop.f32.mrf.mxu0
        %v2217 = vadd.f32 0.0, %v2216
        %v2218 = vpop.f32.mrf.mxu0
        %2219 = vmatprep.mubr.bf16.mxu0 0
        %2220 = vmatmul.mubr.bf16.gmra.mxu0 %v2102
        %v2221 = vpop.f32.mrf.mxu0
        %v2222 = vadd.f32 0.0, %v2221
        %v2223 = vpop.f32.mrf.mxu0
        %v2224 = vpop.f32.mrf.mxu0
        %v2225 = vadd.f32 0.0, %v2224
        %v2226 = vpop.f32.mrf.mxu0
        %2227 = vmatprep.mubr.bf16.mxu0 0
        %2228 = vmatmul.mubr.bf16.gmra.mxu0 %v2105
        %v2229 = vpop.f32.mrf.mxu0
        %v2230 = vadd.f32 0.0, %v2229
        %v2231 = vpop.f32.mrf.mxu0
        %v2232 = vpop.f32.mrf.mxu0
        %v2233 = vadd.f32 0.0, %v2232
        %v2234 = vpop.f32.mrf.mxu0
        %2235 = vmatprep.mubr.bf16.mxu0 0
        %2236 = vmatmul.mubr.bf16.gmra.mxu0 %v2108
        %v2237 = vpop.f32.mrf.mxu0
        %v2238 = vadd.f32 0.0, %v2237
        %v2239 = vpop.f32.mrf.mxu0
        %v2240 = vpop.f32.mrf.mxu0
        %v2241 = vadd.f32 0.0, %v2240
        %v2242 = vpop.f32.mrf.mxu0
        %2243 = vmatprep.mubr.bf16.mxu0 0
        %2244 = vmatmul.mubr.bf16.gmra.mxu0 %v2111
        %v2245 = vpop.f32.mrf.mxu0
        %v2246 = vadd.f32 0.0, %v2245
        %v2247 = vpop.f32.mrf.mxu0
        %v2248 = vpop.f32.mrf.mxu0
        %v2249 = vadd.f32 0.0, %v2248
        %v2250 = vpop.f32.mrf.mxu0
        %2251 = vmatprep.mubr.bf16.mxu0 0
        %2252 = vmatmul.mubr.bf16.gmra.mxu0 %v2114
        %v2253 = vpop.f32.mrf.mxu0
        %v2254 = vadd.f32 0.0, %v2253
        %v2255 = vpop.f32.mrf.mxu0
        %v2256 = vpop.f32.mrf.mxu0
        %v2257 = vadd.f32 0.0, %v2256
        %v2258 = vpop.f32.mrf.mxu0
        %2259 = vmatprep.mubr.bf16.mxu0 0
        %2260 = vmatmul.mubr.bf16.gmra.mxu0 %v2117
        %v2261 = vpop.f32.mrf.mxu0
        %v2262 = vadd.f32 0.0, %v2261
        %v2263 = vpop.f32.mrf.mxu0
        %v2264 = vpop.f32.mrf.mxu0
        %v2265 = vadd.f32 0.0, %v2264
        %v2266 = vpop.f32.mrf.mxu0
        %2267 = vmatprep.mubr.bf16.mxu0 0
        %2268 = vmatmul.mubr.bf16.gmra.mxu0 %v2120
        %v2269 = vpop.f32.mrf.mxu0
        %v2270 = vadd.f32 0.0, %v2269
        %v2271 = vpop.f32.mrf.mxu0
        %v2272 = vpop.f32.mrf.mxu0
        %v2273 = vadd.f32 0.0, %v2272
        %v2274 = vpop.f32.mrf.mxu0
        %2275 = vmatprep.mubr.bf16.mxu0 0
        %2276 = vmatmul.mubr.bf16.gmra.mxu0 %v2123
        %v2277 = vpop.f32.mrf.mxu0
        %v2278 = vadd.f32 0.0, %v2277
        %v2279 = vpop.f32.mrf.mxu0
        %v2280 = vpop.f32.mrf.mxu0
        %v2281 = vadd.f32 0.0, %v2280
        %v2282 = vpop.f32.mrf.mxu0
        %2283 = vmatprep.mubr.bf16.mxu0 0
        %2284 = vmatmul.mubr.bf16.gmra.mxu0 %v2126
        %v2285 = vpop.f32.mrf.mxu0
        %v2286 = vadd.f32 0.0, %v2285
        %v2287 = vpop.f32.mrf.mxu0
        %v2288 = vpop.f32.mrf.mxu0
        %v2289 = vadd.f32 0.0, %v2288
        %v2290 = vpop.f32.mrf.mxu0
        %2291 = vdwg.mxu0
        %v2292 = vadd.f32 %v1741, %v2166
        %v2293 = vadd.f32 %v1744, %v2169
        %v2294 = vadd.f32 %v1749, %v2174
        %v2295 = vadd.f32 %v1752, %v2177
        %v2296 = vadd.f32 %v1757, %v2182
        %v2297 = vadd.f32 %v1760, %v2185
        %v2298 = vadd.f32 %v1765, %v2190
        %v2299 = vadd.f32 %v1768, %v2193
        %v2300 = vadd.f32 %v1773, %v2198
        %v2301 = vadd.f32 %v1776, %v2201
        %v2302 = vadd.f32 %v1781, %v2206
        %v2303 = vadd.f32 %v1784, %v2209
        %v2304 = vadd.f32 %v1789, %v2214
        %v2305 = vadd.f32 %v1792, %v2217
        %v2306 = vadd.f32 %v1797, %v2222
        %v2307 = vadd.f32 %v1800, %v2225
        %v2308 = vadd.f32 %v1805, %v2230
        %v2309 = vadd.f32 %v1808, %v2233
        %v2310 = vadd.f32 %v1813, %v2238
        %v2311 = vadd.f32 %v1816, %v2241
        %v2312 = vadd.f32 %v1821, %v2246
        %v2313 = vadd.f32 %v1824, %v2249
        %v2314 = vadd.f32 %v1829, %v2254
        %v2315 = vadd.f32 %v1832, %v2257
        %v2316 = vadd.f32 %v1837, %v2262
        %v2317 = vadd.f32 %v1840, %v2265
        %v2318 = vadd.f32 %v1845, %v2270
        %v2319 = vadd.f32 %v1848, %v2273
        %v2320 = vadd.f32 %v1853, %v2278
        %v2321 = vadd.f32 %v1856, %v2281
        %v2322 = vadd.f32 %v1861, %v2286
        %v2323 = vadd.f32 %v1864, %v2289
        %s2324 = scalar_lea.vmem %s829, 192 [#allocation2]
        %v2325 = vld [vmem:[%s2324] sm:$0xf]
        %v2326 = vld [vmem:[%s2324 + $0x4] sm:$0xf]
        %v2327 = vld [vmem:[%s2324 + $0xc] sm:$0xf]
        %v2328 = vld [vmem:[%s2324 + $0x10] sm:$0xf]
        %v2329 = vld [vmem:[%s2324 + $0x18] sm:$0xf]
        %v2330 = vld [vmem:[%s2324 + $0x1c] sm:$0xf]
        %v2331 = vld [vmem:[%s2324 + $0x24] sm:$0xf]
        %v2332 = vld [vmem:[%s2324 + $0x28] sm:$0xf]
        %v2333 = vld [vmem:[%s2324 + $0x30] sm:$0xf]
        %v2334 = vld [vmem:[%s2324 + $0x34] sm:$0xf]
        %v2335 = vld [vmem:[%s2324 + $0x3c] sm:$0xf]
        %v2336 = vld [vmem:[%s2324 + $0x40] sm:$0xf]
        %v2337 = vld [vmem:[%s2324 + $0x48] sm:$0xf]
        %v2338 = vld [vmem:[%s2324 + $0x4c] sm:$0xf]
        %v2339 = vld [vmem:[%s2324 + $0x54] sm:$0xf]
        %v2340 = vld [vmem:[%s2324 + $0x58] sm:$0xf]
        %v2341 = vld [vmem:[%s2324 + $0x60] sm:$0xf]
        %v2342 = vld [vmem:[%s2324 + $0x64] sm:$0xf]
        %v2343 = vld [vmem:[%s2324 + $0x6c] sm:$0xf]
        %v2344 = vld [vmem:[%s2324 + $0x70] sm:$0xf]
        %v2345 = vld [vmem:[%s2324 + $0x78] sm:$0xf]
        %v2346 = vld [vmem:[%s2324 + $0x7c] sm:$0xf]
        %v2347 = vld [vmem:[%s2324 + $0x84] sm:$0xf]
        %v2348 = vld [vmem:[%s2324 + $0x88] sm:$0xf]
        %v2349 = vld [vmem:[%s2324 + $0x90] sm:$0xf]
        %v2350 = vld [vmem:[%s2324 + $0x94] sm:$0xf]
        %v2351 = vld [vmem:[%s2324 + $0x9c] sm:$0xf]
        %v2352 = vld [vmem:[%s2324 + $0xa0] sm:$0xf]
        %v2353 = vld [vmem:[%s2324 + $0xa8] sm:$0xf]
        %v2354 = vld [vmem:[%s2324 + $0xac] sm:$0xf]
        %v2355 = vld [vmem:[%s2324 + $0xb4] sm:$0xf]
        %v2356 = vld [vmem:[%s2324 + $0xb8] sm:$0xf]
        %s2357 = scalar_lea.vmem %s866, 6
        %v2358 = vld [vmem:[%s2357] sm:$0x3]
        %v2391 = vunpack.c.l.b16 %v2325
        %v2392 = vunpack.c.l.b16 %v2326
        %v2393 = vunpack.c.l.b16 %v2327
        %v2394 = vunpack.c.l.b16 %v2328
        %v2395 = vunpack.c.l.b16 %v2329
        %v2396 = vunpack.c.l.b16 %v2330
        %v2397 = vunpack.c.l.b16 %v2331
        %v2398 = vunpack.c.l.b16 %v2332
        %v2399 = vunpack.c.l.b16 %v2333
        %v2400 = vunpack.c.l.b16 %v2334
        %v2401 = vunpack.c.l.b16 %v2335
        %v2402 = vunpack.c.l.b16 %v2336
        %v2403 = vunpack.c.l.b16 %v2337
        %v2404 = vunpack.c.l.b16 %v2338
        %v2405 = vunpack.c.l.b16 %v2339
        %v2406 = vunpack.c.l.b16 %v2340
        %v2407 = vunpack.c.l.b16 %v2341
        %v2408 = vunpack.c.l.b16 %v2342
        %v2409 = vunpack.c.l.b16 %v2343
        %v2410 = vunpack.c.l.b16 %v2344
        %v2411 = vunpack.c.l.b16 %v2345
        %v2412 = vunpack.c.l.b16 %v2346
        %v2413 = vunpack.c.l.b16 %v2347
        %v2414 = vunpack.c.l.b16 %v2348
        %v2415 = vunpack.c.l.b16 %v2349
        %v2416 = vunpack.c.l.b16 %v2350
        %v2417 = vunpack.c.l.b16 %v2351
        %v2418 = vunpack.c.l.b16 %v2352
        %v2419 = vunpack.c.l.b16 %v2353
        %v2420 = vunpack.c.l.b16 %v2354
        %v2421 = vunpack.c.l.b16 %v2355
        %v2422 = vunpack.c.l.b16 %v2356
        %v2423 = vpack.c.b16 %v2392, %v2391
        %v2424 = vpack.c.b16 %v2394, %v2393
        %v2425 = vpack.c.b16 %v2396, %v2395
        %v2426 = vpack.c.b16 %v2398, %v2397
        %v2427 = vpack.c.b16 %v2400, %v2399
        %v2428 = vpack.c.b16 %v2402, %v2401
        %v2429 = vpack.c.b16 %v2404, %v2403
        %v2430 = vpack.c.b16 %v2406, %v2405
        %v2431 = vpack.c.b16 %v2408, %v2407
        %v2432 = vpack.c.b16 %v2410, %v2409
        %v2433 = vpack.c.b16 %v2412, %v2411
        %v2434 = vpack.c.b16 %v2414, %v2413
        %v2435 = vpack.c.b16 %v2416, %v2415
        %v2436 = vpack.c.b16 %v2418, %v2417
        %v2437 = vpack.c.b16 %v2420, %v2419
        %v2438 = vpack.c.b16 %v2422, %v2421
        %v2440 = vsel %vm1361, %v2423, 0
        %v2443 = vsel %vm1361, %v2424, 0
        %v2446 = vsel %vm1361, %v2425, 0
        %v2449 = vsel %vm1361, %v2426, 0
        %v2452 = vsel %vm1361, %v2427, 0
        %v2455 = vsel %vm1361, %v2428, 0
        %v2458 = vsel %vm1361, %v2429, 0
        %v2461 = vsel %vm1361, %v2430, 0
        %v2464 = vsel %vm1361, %v2431, 0
        %v2467 = vsel %vm1361, %v2432, 0
        %v2470 = vsel %vm1361, %v2433, 0
        %v2473 = vsel %vm1361, %v2434, 0
        %v2476 = vsel %vm1361, %v2435, 0
        %v2479 = vsel %vm1361, %v2436, 0
        %v2482 = vsel %vm1361, %v2437, 0
        %v2485 = vsel %vm1361, %v2438, 0
        %v2488 = vsel %vm1410, %v2358, 0
        %2490 = vmatprep.subr.bf16.mxu0 0
        %2491 = vmatpush1.bf16.msra.mxu0 0
        %2492 = vmatprep.subr.bf16.mxu0 0
        %2493 = vmatpush1.bf16.msra.mxu0 0
        %2494 = vmatprep.subr.bf16.mxu0 0
        %2495 = vmatpush1.bf16.msra.mxu0 0
        %2496 = vmatprep.subr.bf16.mxu0 0
        %2497 = vmatpush1.bf16.msra.mxu0 0
        %2498 = vmatprep.subr.bf16.mxu0 0
        %2499 = vmatpush1.bf16.msra.mxu0 0
        %2500 = vmatprep.subr.bf16.mxu0 0
        %2501 = vmatpush1.bf16.msra.mxu0 0
        %2502 = vmatprep.subr.bf16.mxu0 0
        %2503 = vmatpush1.bf16.msra.mxu0 0
        %2504 = vmatprep.subr.bf16.mxu0 0
        %2505 = vmatpush1.bf16.msra.mxu0 %v2488
        %2506 = vmatprep.subr.bf16.mxu0 0
        %2507 = vmatpush2.bf16.msra.mxu0 0
        %2508 = vmatprep.subr.bf16.mxu0 0
        %2509 = vmatpush2.bf16.msra.mxu0 0
        %2510 = vmatprep.subr.bf16.mxu0 0
        %2511 = vmatpush2.bf16.msra.mxu0 0
        %2512 = vmatprep.subr.bf16.mxu0 0
        %2513 = vmatpush2.bf16.msra.mxu0 0
        %2514 = vmatprep.subr.bf16.mxu0 0
        %2515 = vmatpush2.bf16.msra.mxu0 0
        %2516 = vmatprep.subr.bf16.mxu0 0
        %2517 = vmatpush2.bf16.msra.mxu0 0
        %2518 = vmatprep.subr.bf16.mxu0 0
        %2519 = vmatpush2.bf16.msra.mxu0 0
        %2520 = vmatprep.subr.bf16.mxu0 0
        %2521 = vmatpush2.bf16.msra.mxu0 0
        %2522 = vmatprep.mubr.bf16.mxu0 0
        %2523 = vmatmul.mubr.bf16.gmra.mxu0 %v2440
        %v2524 = vpop.f32.mrf.mxu0
        %v2525 = vadd.f32 0.0, %v2524
        %v2526 = vpop.f32.mrf.mxu0
        %v2527 = vpop.f32.mrf.mxu0
        %v2528 = vadd.f32 0.0, %v2527
        %v2529 = vpop.f32.mrf.mxu0
        %2530 = vmatprep.mubr.bf16.mxu0 0
        %2531 = vmatmul.mubr.bf16.gmra.mxu0 %v2443
        %v2532 = vpop.f32.mrf.mxu0
        %v2533 = vadd.f32 0.0, %v2532
        %v2534 = vpop.f32.mrf.mxu0
        %v2535 = vpop.f32.mrf.mxu0
        %v2536 = vadd.f32 0.0, %v2535
        %v2537 = vpop.f32.mrf.mxu0
        %2538 = vmatprep.mubr.bf16.mxu0 0
        %2539 = vmatmul.mubr.bf16.gmra.mxu0 %v2446
        %v2540 = vpop.f32.mrf.mxu0
        %v2541 = vadd.f32 0.0, %v2540
        %v2542 = vpop.f32.mrf.mxu0
        %v2543 = vpop.f32.mrf.mxu0
        %v2544 = vadd.f32 0.0, %v2543
        %v2545 = vpop.f32.mrf.mxu0
        %2546 = vmatprep.mubr.bf16.mxu0 0
        %2547 = vmatmul.mubr.bf16.gmra.mxu0 %v2449
        %v2548 = vpop.f32.mrf.mxu0
        %v2549 = vadd.f32 0.0, %v2548
        %v2550 = vpop.f32.mrf.mxu0
        %v2551 = vpop.f32.mrf.mxu0
        %v2552 = vadd.f32 0.0, %v2551
        %v2553 = vpop.f32.mrf.mxu0
        %2554 = vmatprep.mubr.bf16.mxu0 0
        %2555 = vmatmul.mubr.bf16.gmra.mxu0 %v2452
        %v2556 = vpop.f32.mrf.mxu0
        %v2557 = vadd.f32 0.0, %v2556
        %v2558 = vpop.f32.mrf.mxu0
        %v2559 = vpop.f32.mrf.mxu0
        %v2560 = vadd.f32 0.0, %v2559
        %v2561 = vpop.f32.mrf.mxu0
        %2562 = vmatprep.mubr.bf16.mxu0 0
        %2563 = vmatmul.mubr.bf16.gmra.mxu0 %v2455
        %v2564 = vpop.f32.mrf.mxu0
        %v2565 = vadd.f32 0.0, %v2564
        %v2566 = vpop.f32.mrf.mxu0
        %v2567 = vpop.f32.mrf.mxu0
        %v2568 = vadd.f32 0.0, %v2567
        %v2569 = vpop.f32.mrf.mxu0
        %2570 = vmatprep.mubr.bf16.mxu0 0
        %2571 = vmatmul.mubr.bf16.gmra.mxu0 %v2458
        %v2572 = vpop.f32.mrf.mxu0
        %v2573 = vadd.f32 0.0, %v2572
        %v2574 = vpop.f32.mrf.mxu0
        %v2575 = vpop.f32.mrf.mxu0
        %v2576 = vadd.f32 0.0, %v2575
        %v2577 = vpop.f32.mrf.mxu0
        %2578 = vmatprep.mubr.bf16.mxu0 0
        %2579 = vmatmul.mubr.bf16.gmra.mxu0 %v2461
        %v2580 = vpop.f32.mrf.mxu0
        %v2581 = vadd.f32 0.0, %v2580
        %v2582 = vpop.f32.mrf.mxu0
        %v2583 = vpop.f32.mrf.mxu0
        %v2584 = vadd.f32 0.0, %v2583
        %v2585 = vpop.f32.mrf.mxu0
        %2586 = vmatprep.mubr.bf16.mxu0 0
        %2587 = vmatmul.mubr.bf16.gmra.mxu0 %v2464
        %v2588 = vpop.f32.mrf.mxu0
        %v2589 = vadd.f32 0.0, %v2588
        %v2590 = vpop.f32.mrf.mxu0
        %v2591 = vpop.f32.mrf.mxu0
        %v2592 = vadd.f32 0.0, %v2591
        %v2593 = vpop.f32.mrf.mxu0
        %2594 = vmatprep.mubr.bf16.mxu0 0
        %2595 = vmatmul.mubr.bf16.gmra.mxu0 %v2467
        %v2596 = vpop.f32.mrf.mxu0
        %v2597 = vadd.f32 0.0, %v2596
        %v2598 = vpop.f32.mrf.mxu0
        %v2599 = vpop.f32.mrf.mxu0
        %v2600 = vadd.f32 0.0, %v2599
        %v2601 = vpop.f32.mrf.mxu0
        %2602 = vmatprep.mubr.bf16.mxu0 0
        %2603 = vmatmul.mubr.bf16.gmra.mxu0 %v2470
        %v2604 = vpop.f32.mrf.mxu0
        %v2605 = vadd.f32 0.0, %v2604
        %v2606 = vpop.f32.mrf.mxu0
        %v2607 = vpop.f32.mrf.mxu0
        %v2608 = vadd.f32 0.0, %v2607
        %v2609 = vpop.f32.mrf.mxu0
        %2610 = vmatprep.mubr.bf16.mxu0 0
        %2611 = vmatmul.mubr.bf16.gmra.mxu0 %v2473
        %v2612 = vpop.f32.mrf.mxu0
        %v2613 = vadd.f32 0.0, %v2612
        %v2614 = vpop.f32.mrf.mxu0
        %v2615 = vpop.f32.mrf.mxu0
        %v2616 = vadd.f32 0.0, %v2615
        %v2617 = vpop.f32.mrf.mxu0
        %2618 = vmatprep.mubr.bf16.mxu0 0
        %2619 = vmatmul.mubr.bf16.gmra.mxu0 %v2476
        %v2620 = vpop.f32.mrf.mxu0
        %v2621 = vadd.f32 0.0, %v2620
        %v2622 = vpop.f32.mrf.mxu0
        %v2623 = vpop.f32.mrf.mxu0
        %v2624 = vadd.f32 0.0, %v2623
        %v2625 = vpop.f32.mrf.mxu0
        %2626 = vmatprep.mubr.bf16.mxu0 0
        %2627 = vmatmul.mubr.bf16.gmra.mxu0 %v2479
        %v2628 = vpop.f32.mrf.mxu0
        %v2629 = vadd.f32 0.0, %v2628
        %v2630 = vpop.f32.mrf.mxu0
        %v2631 = vpop.f32.mrf.mxu0
        %v2632 = vadd.f32 0.0, %v2631
        %v2633 = vpop.f32.mrf.mxu0
        %2634 = vmatprep.mubr.bf16.mxu0 0
        %2635 = vmatmul.mubr.bf16.gmra.mxu0 %v2482
        %v2636 = vpop.f32.mrf.mxu0
        %v2637 = vadd.f32 0.0, %v2636
        %v2638 = vpop.f32.mrf.mxu0
        %v2639 = vpop.f32.mrf.mxu0
        %v2640 = vadd.f32 0.0, %v2639
        %v2641 = vpop.f32.mrf.mxu0
        %2642 = vmatprep.mubr.bf16.mxu0 0
        %2643 = vmatmul.mubr.bf16.gmra.mxu0 %v2485
        %v2644 = vpop.f32.mrf.mxu0
        %v2645 = vadd.f32 0.0, %v2644
        %v2646 = vpop.f32.mrf.mxu0
        %v2647 = vpop.f32.mrf.mxu0
        %v2648 = vadd.f32 0.0, %v2647
        %v2649 = vpop.f32.mrf.mxu0
        %2650 = vdwg.mxu0
        %v2651 = vadd.f32 %v2292, %v2525
        %v2652 = vadd.f32 %v2293, %v2528
        %v2653 = vadd.f32 %v2294, %v2533
        %v2654 = vadd.f32 %v2295, %v2536
        %v2655 = vadd.f32 %v2296, %v2541
        %v2656 = vadd.f32 %v2297, %v2544
        %v2657 = vadd.f32 %v2298, %v2549
        %v2658 = vadd.f32 %v2299, %v2552
        %v2659 = vadd.f32 %v2300, %v2557
        %v2660 = vadd.f32 %v2301, %v2560
        %v2661 = vadd.f32 %v2302, %v2565
        %v2662 = vadd.f32 %v2303, %v2568
        %v2663 = vadd.f32 %v2304, %v2573
        %v2664 = vadd.f32 %v2305, %v2576
        %v2665 = vadd.f32 %v2306, %v2581
        %v2666 = vadd.f32 %v2307, %v2584
        %v2667 = vadd.f32 %v2308, %v2589
        %v2668 = vadd.f32 %v2309, %v2592
        %v2669 = vadd.f32 %v2310, %v2597
        %v2670 = vadd.f32 %v2311, %v2600
        %v2671 = vadd.f32 %v2312, %v2605
        %v2672 = vadd.f32 %v2313, %v2608
        %v2673 = vadd.f32 %v2314, %v2613
        %v2674 = vadd.f32 %v2315, %v2616
        %v2675 = vadd.f32 %v2316, %v2621
        %v2676 = vadd.f32 %v2317, %v2624
        %v2677 = vadd.f32 %v2318, %v2629
        %v2678 = vadd.f32 %v2319, %v2632
        %v2679 = vadd.f32 %v2320, %v2637
        %v2680 = vadd.f32 %v2321, %v2640
        %v2681 = vadd.f32 %v2322, %v2645
        %v2682 = vadd.f32 %v2323, %v2648
        %v2683 = vld [vmem:[%s2324] sm:$0xf]
        %v2684 = vld [vmem:[%s2324 + $0x4] sm:$0xf]
        %v2685 = vld [vmem:[%s2324 + $0x8] sm:$0x1]
        %v2686 = vld [vmem:[%s2324 + $0xc] sm:$0xf]
        %v2687 = vld [vmem:[%s2324 + $0x10] sm:$0xf]
        %v2688 = vld [vmem:[%s2324 + $0x14] sm:$0x1]
        %v2689 = vld [vmem:[%s2324 + $0x18] sm:$0xf]
        %v2690 = vld [vmem:[%s2324 + $0x1c] sm:$0xf]
        %v2691 = vld [vmem:[%s2324 + $0x20] sm:$0x1]
        %v2692 = vld [vmem:[%s2324 + $0x24] sm:$0xf]
        %v2693 = vld [vmem:[%s2324 + $0x28] sm:$0xf]
        %v2694 = vld [vmem:[%s2324 + $0x2c] sm:$0x1]
        %v2695 = vld [vmem:[%s2324 + $0x30] sm:$0xf]
        %v2696 = vld [vmem:[%s2324 + $0x34] sm:$0xf]
        %v2697 = vld [vmem:[%s2324 + $0x38] sm:$0x1]
        %v2698 = vld [vmem:[%s2324 + $0x3c] sm:$0xf]
        %v2699 = vld [vmem:[%s2324 + $0x40] sm:$0xf]
        %v2700 = vld [vmem:[%s2324 + $0x44] sm:$0x1]
        %v2701 = vld [vmem:[%s2324 + $0x48] sm:$0xf]
        %v2702 = vld [vmem:[%s2324 + $0x4c] sm:$0xf]
        %v2703 = vld [vmem:[%s2324 + $0x50] sm:$0x1]
        %v2704 = vld [vmem:[%s2324 + $0x54] sm:$0xf]
        %v2705 = vld [vmem:[%s2324 + $0x58] sm:$0xf]
        %v2706 = vld [vmem:[%s2324 + $0x5c] sm:$0x1]
        %v2707 = vld [vmem:[%s2324 + $0x60] sm:$0xf]
        %v2708 = vld [vmem:[%s2324 + $0x64] sm:$0xf]
        %v2709 = vld [vmem:[%s2324 + $0x68] sm:$0x1]
        %v2710 = vld [vmem:[%s2324 + $0x6c] sm:$0xf]
        %v2711 = vld [vmem:[%s2324 + $0x70] sm:$0xf]
        %v2712 = vld [vmem:[%s2324 + $0x74] sm:$0x1]
        %v2713 = vld [vmem:[%s2324 + $0x78] sm:$0xf]
        %v2714 = vld [vmem:[%s2324 + $0x7c] sm:$0xf]
        %v2715 = vld [vmem:[%s2324 + $0x80] sm:$0x1]
        %v2716 = vld [vmem:[%s2324 + $0x84] sm:$0xf]
        %v2717 = vld [vmem:[%s2324 + $0x88] sm:$0xf]
        %v2718 = vld [vmem:[%s2324 + $0x8c] sm:$0x1]
        %v2719 = vld [vmem:[%s2324 + $0x90] sm:$0xf]
        %v2720 = vld [vmem:[%s2324 + $0x94] sm:$0xf]
        %v2721 = vld [vmem:[%s2324 + $0x98] sm:$0x1]
        %v2722 = vld [vmem:[%s2324 + $0x9c] sm:$0xf]
        %v2723 = vld [vmem:[%s2324 + $0xa0] sm:$0xf]
        %v2724 = vld [vmem:[%s2324 + $0xa4] sm:$0x1]
        %v2725 = vld [vmem:[%s2324 + $0xa8] sm:$0xf]
        %v2726 = vld [vmem:[%s2324 + $0xac] sm:$0xf]
        %v2727 = vld [vmem:[%s2324 + $0xb0] sm:$0x1]
        %v2728 = vld [vmem:[%s2324 + $0xb4] sm:$0xf]
        %v2729 = vld [vmem:[%s2324 + $0xb8] sm:$0xf]
        %v2730 = vld [vmem:[%s2324 + $0xbc] sm:$0x1]
        %v2732 = vshrl.u32 %v2683, 16
        %v2734 = vrot.slane %v2732, 4
        %v2735 = vshll.u32 %v2683, 16
        %v2737 = vrot.slane %v2735, 5
        %v2738 = vor.u32 %v2734, %v2737
        %v2739 = vrot.slane %v2738, 4
        %v2741 = vshll.u32 %v2684, 16
        %v2743 = vrot.slane %v2741, 5
        %v2744 = vsel %vm926, %v2739, %v2743
        %v2745 = vshrl.u32 %v2684, 16
        %v2747 = vrot.slane %v2745, 4
        %v2748 = vor.u32 %v2747, %v2743
        %v2749 = vrot.slane %v2748, 4
        %v2751 = vshll.u32 %v2685, 16
        %v2753 = vrot.slane %v2751, 5
        %v2754 = vsel %vm926, %v2749, %v2753
        %v2756 = vshrl.u32 %v2686, 16
        %v2758 = vrot.slane %v2756, 4
        %v2759 = vshll.u32 %v2686, 16
        %v2761 = vrot.slane %v2759, 5
        %v2762 = vor.u32 %v2758, %v2761
        %v2763 = vrot.slane %v2762, 4
        %v2765 = vshll.u32 %v2687, 16
        %v2767 = vrot.slane %v2765, 5
        %v2768 = vsel %vm926, %v2763, %v2767
        %v2769 = vshrl.u32 %v2687, 16
        %v2771 = vrot.slane %v2769, 4
        %v2772 = vor.u32 %v2771, %v2767
        %v2773 = vrot.slane %v2772, 4
        %v2775 = vshll.u32 %v2688, 16
        %v2777 = vrot.slane %v2775, 5
        %v2778 = vsel %vm926, %v2773, %v2777
        %v2780 = vshrl.u32 %v2689, 16
        %v2782 = vrot.slane %v2780, 4
        %v2783 = vshll.u32 %v2689, 16
        %v2785 = vrot.slane %v2783, 5
        %v2786 = vor.u32 %v2782, %v2785
        %v2787 = vrot.slane %v2786, 4
        %v2789 = vshll.u32 %v2690, 16
        %v2791 = vrot.slane %v2789, 5
        %v2792 = vsel %vm926, %v2787, %v2791
        %v2793 = vshrl.u32 %v2690, 16
        %v2795 = vrot.slane %v2793, 4
        %v2796 = vor.u32 %v2795, %v2791
        %v2797 = vrot.slane %v2796, 4
        %v2799 = vshll.u32 %v2691, 16
        %v2801 = vrot.slane %v2799, 5
        %v2802 = vsel %vm926, %v2797, %v2801
        %v2804 = vshrl.u32 %v2692, 16
        %v2806 = vrot.slane %v2804, 4
        %v2807 = vshll.u32 %v2692, 16
        %v2809 = vrot.slane %v2807, 5
        %v2810 = vor.u32 %v2806, %v2809
        %v2811 = vrot.slane %v2810, 4
        %v2813 = vshll.u32 %v2693, 16
        %v2815 = vrot.slane %v2813, 5
        %v2816 = vsel %vm926, %v2811, %v2815
        %v2817 = vshrl.u32 %v2693, 16
        %v2819 = vrot.slane %v2817, 4
        %v2820 = vor.u32 %v2819, %v2815
        %v2821 = vrot.slane %v2820, 4
        %v2823 = vshll.u32 %v2694, 16
        %v2825 = vrot.slane %v2823, 5
        %v2826 = vsel %vm926, %v2821, %v2825
        %v2828 = vshrl.u32 %v2695, 16
        %v2830 = vrot.slane %v2828, 4
        %v2831 = vshll.u32 %v2695, 16
        %v2833 = vrot.slane %v2831, 5
        %v2834 = vor.u32 %v2830, %v2833
        %v2835 = vrot.slane %v2834, 4
        %v2837 = vshll.u32 %v2696, 16
        %v2839 = vrot.slane %v2837, 5
        %v2840 = vsel %vm926, %v2835, %v2839
        %v2841 = vshrl.u32 %v2696, 16
        %v2843 = vrot.slane %v2841, 4
        %v2844 = vor.u32 %v2843, %v2839
        %v2845 = vrot.slane %v2844, 4
        %v2847 = vshll.u32 %v2697, 16
        %v2849 = vrot.slane %v2847, 5
        %v2850 = vsel %vm926, %v2845, %v2849
        %v2852 = vshrl.u32 %v2698, 16
        %v2854 = vrot.slane %v2852, 4
        %v2855 = vshll.u32 %v2698, 16
        %v2857 = vrot.slane %v2855, 5
        %v2858 = vor.u32 %v2854, %v2857
        %v2859 = vrot.slane %v2858, 4
        %v2861 = vshll.u32 %v2699, 16
        %v2863 = vrot.slane %v2861, 5
        %v2864 = vsel %vm926, %v2859, %v2863
        %v2865 = vshrl.u32 %v2699, 16
        %v2867 = vrot.slane %v2865, 4
        %v2868 = vor.u32 %v2867, %v2863
        %v2869 = vrot.slane %v2868, 4
        %v2871 = vshll.u32 %v2700, 16
        %v2873 = vrot.slane %v2871, 5
        %v2874 = vsel %vm926, %v2869, %v2873
        %v2876 = vshrl.u32 %v2701, 16
        %v2878 = vrot.slane %v2876, 4
        %v2879 = vshll.u32 %v2701, 16
        %v2881 = vrot.slane %v2879, 5
        %v2882 = vor.u32 %v2878, %v2881
        %v2883 = vrot.slane %v2882, 4
        %v2885 = vshll.u32 %v2702, 16
        %v2887 = vrot.slane %v2885, 5
        %v2888 = vsel %vm926, %v2883, %v2887
        %v2889 = vshrl.u32 %v2702, 16
        %v2891 = vrot.slane %v2889, 4
        %v2892 = vor.u32 %v2891, %v2887
        %v2893 = vrot.slane %v2892, 4
        %v2895 = vshll.u32 %v2703, 16
        %v2897 = vrot.slane %v2895, 5
        %v2898 = vsel %vm926, %v2893, %v2897
        %v2900 = vshrl.u32 %v2704, 16
        %v2902 = vrot.slane %v2900, 4
        %v2903 = vshll.u32 %v2704, 16
        %v2905 = vrot.slane %v2903, 5
        %v2906 = vor.u32 %v2902, %v2905
        %v2907 = vrot.slane %v2906, 4
        %v2909 = vshll.u32 %v2705, 16
        %v2911 = vrot.slane %v2909, 5
        %v2912 = vsel %vm926, %v2907, %v2911
        %v2913 = vshrl.u32 %v2705, 16
        %v2915 = vrot.slane %v2913, 4
        %v2916 = vor.u32 %v2915, %v2911
        %v2917 = vrot.slane %v2916, 4
        %v2919 = vshll.u32 %v2706, 16
        %v2921 = vrot.slane %v2919, 5
        %v2922 = vsel %vm926, %v2917, %v2921
        %v2924 = vshrl.u32 %v2707, 16
        %v2926 = vrot.slane %v2924, 4
        %v2927 = vshll.u32 %v2707, 16
        %v2929 = vrot.slane %v2927, 5
        %v2930 = vor.u32 %v2926, %v2929
        %v2931 = vrot.slane %v2930, 4
        %v2933 = vshll.u32 %v2708, 16
        %v2935 = vrot.slane %v2933, 5
        %v2936 = vsel %vm926, %v2931, %v2935
        %v2937 = vshrl.u32 %v2708, 16
        %v2939 = vrot.slane %v2937, 4
        %v2940 = vor.u32 %v2939, %v2935
        %v2941 = vrot.slane %v2940, 4
        %v2943 = vshll.u32 %v2709, 16
        %v2945 = vrot.slane %v2943, 5
        %v2946 = vsel %vm926, %v2941, %v2945
        %v2948 = vshrl.u32 %v2710, 16
        %v2950 = vrot.slane %v2948, 4
        %v2951 = vshll.u32 %v2710, 16
        %v2953 = vrot.slane %v2951, 5
        %v2954 = vor.u32 %v2950, %v2953
        %v2955 = vrot.slane %v2954, 4
        %v2957 = vshll.u32 %v2711, 16
        %v2959 = vrot.slane %v2957, 5
        %v2960 = vsel %vm926, %v2955, %v2959
        %v2961 = vshrl.u32 %v2711, 16
        %v2963 = vrot.slane %v2961, 4
        %v2964 = vor.u32 %v2963, %v2959
        %v2965 = vrot.slane %v2964, 4
        %v2967 = vshll.u32 %v2712, 16
        %v2969 = vrot.slane %v2967, 5
        %v2970 = vsel %vm926, %v2965, %v2969
        %v2972 = vshrl.u32 %v2713, 16
        %v2974 = vrot.slane %v2972, 4
        %v2975 = vshll.u32 %v2713, 16
        %v2977 = vrot.slane %v2975, 5
        %v2978 = vor.u32 %v2974, %v2977
        %v2979 = vrot.slane %v2978, 4
        %v2981 = vshll.u32 %v2714, 16
        %v2983 = vrot.slane %v2981, 5
        %v2984 = vsel %vm926, %v2979, %v2983
        %v2985 = vshrl.u32 %v2714, 16
        %v2987 = vrot.slane %v2985, 4
        %v2988 = vor.u32 %v2987, %v2983
        %v2989 = vrot.slane %v2988, 4
        %v2991 = vshll.u32 %v2715, 16
        %v2993 = vrot.slane %v2991, 5
        %v2994 = vsel %vm926, %v2989, %v2993
        %v2996 = vshrl.u32 %v2716, 16
        %v2998 = vrot.slane %v2996, 4
        %v2999 = vshll.u32 %v2716, 16
        %v3001 = vrot.slane %v2999, 5
        %v3002 = vor.u32 %v2998, %v3001
        %v3003 = vrot.slane %v3002, 4
        %v3005 = vshll.u32 %v2717, 16
        %v3007 = vrot.slane %v3005, 5
        %v3008 = vsel %vm926, %v3003, %v3007
        %v3009 = vshrl.u32 %v2717, 16
        %v3011 = vrot.slane %v3009, 4
        %v3012 = vor.u32 %v3011, %v3007
        %v3013 = vrot.slane %v3012, 4
        %v3015 = vshll.u32 %v2718, 16
        %v3017 = vrot.slane %v3015, 5
        %v3018 = vsel %vm926, %v3013, %v3017
        %v3020 = vshrl.u32 %v2719, 16
        %v3022 = vrot.slane %v3020, 4
        %v3023 = vshll.u32 %v2719, 16
        %v3025 = vrot.slane %v3023, 5
        %v3026 = vor.u32 %v3022, %v3025
        %v3027 = vrot.slane %v3026, 4
        %v3029 = vshll.u32 %v2720, 16
        %v3031 = vrot.slane %v3029, 5
        %v3032 = vsel %vm926, %v3027, %v3031
        %v3033 = vshrl.u32 %v2720, 16
        %v3035 = vrot.slane %v3033, 4
        %v3036 = vor.u32 %v3035, %v3031
        %v3037 = vrot.slane %v3036, 4
        %v3039 = vshll.u32 %v2721, 16
        %v3041 = vrot.slane %v3039, 5
        %v3042 = vsel %vm926, %v3037, %v3041
        %v3044 = vshrl.u32 %v2722, 16
        %v3046 = vrot.slane %v3044, 4
        %v3047 = vshll.u32 %v2722, 16
        %v3049 = vrot.slane %v3047, 5
        %v3050 = vor.u32 %v3046, %v3049
        %v3051 = vrot.slane %v3050, 4
        %v3053 = vshll.u32 %v2723, 16
        %v3055 = vrot.slane %v3053, 5
        %v3056 = vsel %vm926, %v3051, %v3055
        %v3057 = vshrl.u32 %v2723, 16
        %v3059 = vrot.slane %v3057, 4
        %v3060 = vor.u32 %v3059, %v3055
        %v3061 = vrot.slane %v3060, 4
        %v3063 = vshll.u32 %v2724, 16
        %v3065 = vrot.slane %v3063, 5
        %v3066 = vsel %vm926, %v3061, %v3065
        %v3068 = vshrl.u32 %v2725, 16
        %v3070 = vrot.slane %v3068, 4
        %v3071 = vshll.u32 %v2725, 16
        %v3073 = vrot.slane %v3071, 5
        %v3074 = vor.u32 %v3070, %v3073
        %v3075 = vrot.slane %v3074, 4
        %v3077 = vshll.u32 %v2726, 16
        %v3079 = vrot.slane %v3077, 5
        %v3080 = vsel %vm926, %v3075, %v3079
        %v3081 = vshrl.u32 %v2726, 16
        %v3083 = vrot.slane %v3081, 4
        %v3084 = vor.u32 %v3083, %v3079
        %v3085 = vrot.slane %v3084, 4
        %v3087 = vshll.u32 %v2727, 16
        %v3089 = vrot.slane %v3087, 5
        %v3090 = vsel %vm926, %v3085, %v3089
        %v3092 = vshrl.u32 %v2728, 16
        %v3094 = vrot.slane %v3092, 4
        %v3095 = vshll.u32 %v2728, 16
        %v3097 = vrot.slane %v3095, 5
        %v3098 = vor.u32 %v3094, %v3097
        %v3099 = vrot.slane %v3098, 4
        %v3101 = vshll.u32 %v2729, 16
        %v3103 = vrot.slane %v3101, 5
        %v3104 = vsel %vm926, %v3099, %v3103
        %v3105 = vshrl.u32 %v2729, 16
        %v3107 = vrot.slane %v3105, 4
        %v3108 = vor.u32 %v3107, %v3103
        %v3109 = vrot.slane %v3108, 4
        %v3111 = vshll.u32 %v2730, 16
        %v3113 = vrot.slane %v3111, 5
        %v3114 = vsel %vm926, %v3109, %v3113
        %s3115 = scalar_lea.vmem %s866, 8
        %v3116 = vld [vmem:[%s3115] sm:$0x3]
        %v3117 = vunpack.c.l.b16 %v2744
        %v3118 = vunpack.c.l.b16 %v2754
        %v3119 = vunpack.c.l.b16 %v2768
        %v3120 = vunpack.c.l.b16 %v2778
        %v3121 = vunpack.c.l.b16 %v2792
        %v3122 = vunpack.c.l.b16 %v2802
        %v3123 = vunpack.c.l.b16 %v2816
        %v3124 = vunpack.c.l.b16 %v2826
        %v3125 = vunpack.c.l.b16 %v2840
        %v3126 = vunpack.c.l.b16 %v2850
        %v3127 = vunpack.c.l.b16 %v2864
        %v3128 = vunpack.c.l.b16 %v2874
        %v3129 = vunpack.c.l.b16 %v2888
        %v3130 = vunpack.c.l.b16 %v2898
        %v3131 = vunpack.c.l.b16 %v2912
        %v3132 = vunpack.c.l.b16 %v2922
        %v3133 = vunpack.c.l.b16 %v2936
        %v3134 = vunpack.c.l.b16 %v2946
        %v3135 = vunpack.c.l.b16 %v2960
        %v3136 = vunpack.c.l.b16 %v2970
        %v3137 = vunpack.c.l.b16 %v2984
        %v3138 = vunpack.c.l.b16 %v2994
        %v3139 = vunpack.c.l.b16 %v3008
        %v3140 = vunpack.c.l.b16 %v3018
        %v3141 = vunpack.c.l.b16 %v3032
        %v3142 = vunpack.c.l.b16 %v3042
        %v3143 = vunpack.c.l.b16 %v3056
        %v3144 = vunpack.c.l.b16 %v3066
        %v3145 = vunpack.c.l.b16 %v3080
        %v3146 = vunpack.c.l.b16 %v3090
        %v3147 = vunpack.c.l.b16 %v3104
        %v3148 = vunpack.c.l.b16 %v3114
        %v3149 = vpack.c.b16 %v3118, %v3117
        %v3150 = vpack.c.b16 %v3120, %v3119
        %v3151 = vpack.c.b16 %v3122, %v3121
        %v3152 = vpack.c.b16 %v3124, %v3123
        %v3153 = vpack.c.b16 %v3126, %v3125
        %v3154 = vpack.c.b16 %v3128, %v3127
        %v3155 = vpack.c.b16 %v3130, %v3129
        %v3156 = vpack.c.b16 %v3132, %v3131
        %v3157 = vpack.c.b16 %v3134, %v3133
        %v3158 = vpack.c.b16 %v3136, %v3135
        %v3159 = vpack.c.b16 %v3138, %v3137
        %v3160 = vpack.c.b16 %v3140, %v3139
        %v3161 = vpack.c.b16 %v3142, %v3141
        %v3162 = vpack.c.b16 %v3144, %v3143
        %v3163 = vpack.c.b16 %v3146, %v3145
        %v3164 = vpack.c.b16 %v3148, %v3147
        %v3166 = vsel %vm1361, %v3149, 0
        %v3169 = vsel %vm1361, %v3150, 0
        %v3172 = vsel %vm1361, %v3151, 0
        %v3175 = vsel %vm1361, %v3152, 0
        %v3178 = vsel %vm1361, %v3153, 0
        %v3181 = vsel %vm1361, %v3154, 0
        %v3184 = vsel %vm1361, %v3155, 0
        %v3187 = vsel %vm1361, %v3156, 0
        %v3190 = vsel %vm1361, %v3157, 0
        %v3193 = vsel %vm1361, %v3158, 0
        %v3196 = vsel %vm1361, %v3159, 0
        %v3199 = vsel %vm1361, %v3160, 0
        %v3202 = vsel %vm1361, %v3161, 0
        %v3205 = vsel %vm1361, %v3162, 0
        %v3208 = vsel %vm1361, %v3163, 0
        %v3211 = vsel %vm1361, %v3164, 0
        %v3214 = vsel %vm1410, %v3116, 0
        %3216 = vmatprep.subr.bf16.mxu0 0
        %3217 = vmatpush1.bf16.msra.mxu0 0
        %3218 = vmatprep.subr.bf16.mxu0 0
        %3219 = vmatpush1.bf16.msra.mxu0 0
        %3220 = vmatprep.subr.bf16.mxu0 0
        %3221 = vmatpush1.bf16.msra.mxu0 0
        %3222 = vmatprep.subr.bf16.mxu0 0
        %3223 = vmatpush1.bf16.msra.mxu0 0
        %3224 = vmatprep.subr.bf16.mxu0 0
        %3225 = vmatpush1.bf16.msra.mxu0 0
        %3226 = vmatprep.subr.bf16.mxu0 0
        %3227 = vmatpush1.bf16.msra.mxu0 0
        %3228 = vmatprep.subr.bf16.mxu0 0
        %3229 = vmatpush1.bf16.msra.mxu0 0
        %3230 = vmatprep.subr.bf16.mxu0 0
        %3231 = vmatpush1.bf16.msra.mxu0 %v3214
        %3232 = vmatprep.subr.bf16.mxu0 0
        %3233 = vmatpush2.bf16.msra.mxu0 0
        %3234 = vmatprep.subr.bf16.mxu0 0
        %3235 = vmatpush2.bf16.msra.mxu0 0
        %3236 = vmatprep.subr.bf16.mxu0 0
        %3237 = vmatpush2.bf16.msra.mxu0 0
        %3238 = vmatprep.subr.bf16.mxu0 0
        %3239 = vmatpush2.bf16.msra.mxu0 0
        %3240 = vmatprep.subr.bf16.mxu0 0
        %3241 = vmatpush2.bf16.msra.mxu0 0
        %3242 = vmatprep.subr.bf16.mxu0 0
        %3243 = vmatpush2.bf16.msra.mxu0 0
        %3244 = vmatprep.subr.bf16.mxu0 0
        %3245 = vmatpush2.bf16.msra.mxu0 0
        %3246 = vmatprep.subr.bf16.mxu0 0
        %3247 = vmatpush2.bf16.msra.mxu0 0
        %3248 = vmatprep.mubr.bf16.mxu0 0
        %3249 = vmatmul.mubr.bf16.gmra.mxu0 %v3166
        %v3250 = vpop.f32.mrf.mxu0
        %v3251 = vadd.f32 0.0, %v3250
        %v3252 = vpop.f32.mrf.mxu0
        %v3253 = vpop.f32.mrf.mxu0
        %v3254 = vadd.f32 0.0, %v3253
        %v3255 = vpop.f32.mrf.mxu0
        %3256 = vmatprep.mubr.bf16.mxu0 0
        %3257 = vmatmul.mubr.bf16.gmra.mxu0 %v3169
        %v3258 = vpop.f32.mrf.mxu0
        %v3259 = vadd.f32 0.0, %v3258
        %v3260 = vpop.f32.mrf.mxu0
        %v3261 = vpop.f32.mrf.mxu0
        %v3262 = vadd.f32 0.0, %v3261
        %v3263 = vpop.f32.mrf.mxu0
        %3264 = vmatprep.mubr.bf16.mxu0 0
        %3265 = vmatmul.mubr.bf16.gmra.mxu0 %v3172
        %v3266 = vpop.f32.mrf.mxu0
        %v3267 = vadd.f32 0.0, %v3266
        %v3268 = vpop.f32.mrf.mxu0
        %v3269 = vpop.f32.mrf.mxu0
        %v3270 = vadd.f32 0.0, %v3269
        %v3271 = vpop.f32.mrf.mxu0
        %3272 = vmatprep.mubr.bf16.mxu0 0
        %3273 = vmatmul.mubr.bf16.gmra.mxu0 %v3175
        %v3274 = vpop.f32.mrf.mxu0
        %v3275 = vadd.f32 0.0, %v3274
        %v3276 = vpop.f32.mrf.mxu0
        %v3277 = vpop.f32.mrf.mxu0
        %v3278 = vadd.f32 0.0, %v3277
        %v3279 = vpop.f32.mrf.mxu0
        %3280 = vmatprep.mubr.bf16.mxu0 0
        %3281 = vmatmul.mubr.bf16.gmra.mxu0 %v3178
        %v3282 = vpop.f32.mrf.mxu0
        %v3283 = vadd.f32 0.0, %v3282
        %v3284 = vpop.f32.mrf.mxu0
        %v3285 = vpop.f32.mrf.mxu0
        %v3286 = vadd.f32 0.0, %v3285
        %v3287 = vpop.f32.mrf.mxu0
        %3288 = vmatprep.mubr.bf16.mxu0 0
        %3289 = vmatmul.mubr.bf16.gmra.mxu0 %v3181
        %v3290 = vpop.f32.mrf.mxu0
        %v3291 = vadd.f32 0.0, %v3290
        %v3292 = vpop.f32.mrf.mxu0
        %v3293 = vpop.f32.mrf.mxu0
        %v3294 = vadd.f32 0.0, %v3293
        %v3295 = vpop.f32.mrf.mxu0
        %3296 = vmatprep.mubr.bf16.mxu0 0
        %3297 = vmatmul.mubr.bf16.gmra.mxu0 %v3184
        %v3298 = vpop.f32.mrf.mxu0
        %v3299 = vadd.f32 0.0, %v3298
        %v3300 = vpop.f32.mrf.mxu0
        %v3301 = vpop.f32.mrf.mxu0
        %v3302 = vadd.f32 0.0, %v3301
        %v3303 = vpop.f32.mrf.mxu0
        %3304 = vmatprep.mubr.bf16.mxu0 0
        %3305 = vmatmul.mubr.bf16.gmra.mxu0 %v3187
        %v3306 = vpop.f32.mrf.mxu0
        %v3307 = vadd.f32 0.0, %v3306
        %v3308 = vpop.f32.mrf.mxu0
        %v3309 = vpop.f32.mrf.mxu0
        %v3310 = vadd.f32 0.0, %v3309
        %v3311 = vpop.f32.mrf.mxu0
        %3312 = vmatprep.mubr.bf16.mxu0 0
        %3313 = vmatmul.mubr.bf16.gmra.mxu0 %v3190
        %v3314 = vpop.f32.mrf.mxu0
        %v3315 = vadd.f32 0.0, %v3314
        %v3316 = vpop.f32.mrf.mxu0
        %v3317 = vpop.f32.mrf.mxu0
        %v3318 = vadd.f32 0.0, %v3317
        %v3319 = vpop.f32.mrf.mxu0
        %3320 = vmatprep.mubr.bf16.mxu0 0
        %3321 = vmatmul.mubr.bf16.gmra.mxu0 %v3193
        %v3322 = vpop.f32.mrf.mxu0
        %v3323 = vadd.f32 0.0, %v3322
        %v3324 = vpop.f32.mrf.mxu0
        %v3325 = vpop.f32.mrf.mxu0
        %v3326 = vadd.f32 0.0, %v3325
        %v3327 = vpop.f32.mrf.mxu0
        %3328 = vmatprep.mubr.bf16.mxu0 0
        %3329 = vmatmul.mubr.bf16.gmra.mxu0 %v3196
        %v3330 = vpop.f32.mrf.mxu0
        %v3331 = vadd.f32 0.0, %v3330
        %v3332 = vpop.f32.mrf.mxu0
        %v3333 = vpop.f32.mrf.mxu0
        %v3334 = vadd.f32 0.0, %v3333
        %v3335 = vpop.f32.mrf.mxu0
        %3336 = vmatprep.mubr.bf16.mxu0 0
        %3337 = vmatmul.mubr.bf16.gmra.mxu0 %v3199
        %v3338 = vpop.f32.mrf.mxu0
        %v3339 = vadd.f32 0.0, %v3338
        %v3340 = vpop.f32.mrf.mxu0
        %v3341 = vpop.f32.mrf.mxu0
        %v3342 = vadd.f32 0.0, %v3341
        %v3343 = vpop.f32.mrf.mxu0
        %3344 = vmatprep.mubr.bf16.mxu0 0
        %3345 = vmatmul.mubr.bf16.gmra.mxu0 %v3202
        %v3346 = vpop.f32.mrf.mxu0
        %v3347 = vadd.f32 0.0, %v3346
        %v3348 = vpop.f32.mrf.mxu0
        %v3349 = vpop.f32.mrf.mxu0
        %v3350 = vadd.f32 0.0, %v3349
        %v3351 = vpop.f32.mrf.mxu0
        %3352 = vmatprep.mubr.bf16.mxu0 0
        %3353 = vmatmul.mubr.bf16.gmra.mxu0 %v3205
        %v3354 = vpop.f32.mrf.mxu0
        %v3355 = vadd.f32 0.0, %v3354
        %v3356 = vpop.f32.mrf.mxu0
        %v3357 = vpop.f32.mrf.mxu0
        %v3358 = vadd.f32 0.0, %v3357
        %v3359 = vpop.f32.mrf.mxu0
        %3360 = vmatprep.mubr.bf16.mxu0 0
        %3361 = vmatmul.mubr.bf16.gmra.mxu0 %v3208
        %v3362 = vpop.f32.mrf.mxu0
        %v3363 = vadd.f32 0.0, %v3362
        %v3364 = vpop.f32.mrf.mxu0
        %v3365 = vpop.f32.mrf.mxu0
        %v3366 = vadd.f32 0.0, %v3365
        %v3367 = vpop.f32.mrf.mxu0
        %3368 = vmatprep.mubr.bf16.mxu0 0
        %3369 = vmatmul.mubr.bf16.gmra.mxu0 %v3211
        %v3370 = vpop.f32.mrf.mxu0
        %v3371 = vadd.f32 0.0, %v3370
        %v3372 = vpop.f32.mrf.mxu0
        %v3373 = vpop.f32.mrf.mxu0
        %v3374 = vadd.f32 0.0, %v3373
        %v3375 = vpop.f32.mrf.mxu0
        %3376 = vdwg.mxu0
        %v3377 = vadd.f32 %v2651, %v3251
        %v3378 = vadd.f32 %v2652, %v3254
        %v3379 = vadd.f32 %v2653, %v3259
        %v3380 = vadd.f32 %v2654, %v3262
        %v3381 = vadd.f32 %v2655, %v3267
        %v3382 = vadd.f32 %v2656, %v3270
        %v3383 = vadd.f32 %v2657, %v3275
        %v3384 = vadd.f32 %v2658, %v3278
        %v3385 = vadd.f32 %v2659, %v3283
        %v3386 = vadd.f32 %v2660, %v3286
        %v3387 = vadd.f32 %v2661, %v3291
        %v3388 = vadd.f32 %v2662, %v3294
        %v3389 = vadd.f32 %v2663, %v3299
        %v3390 = vadd.f32 %v2664, %v3302
        %v3391 = vadd.f32 %v2665, %v3307
        %v3392 = vadd.f32 %v2666, %v3310
        %v3393 = vadd.f32 %v2667, %v3315
        %v3394 = vadd.f32 %v2668, %v3318
        %v3395 = vadd.f32 %v2669, %v3323
        %v3396 = vadd.f32 %v2670, %v3326
        %v3397 = vadd.f32 %v2671, %v3331
        %v3398 = vadd.f32 %v2672, %v3334
        %v3399 = vadd.f32 %v2673, %v3339
        %v3400 = vadd.f32 %v2674, %v3342
        %v3401 = vadd.f32 %v2675, %v3347
        %v3402 = vadd.f32 %v2676, %v3350
        %v3403 = vadd.f32 %v2677, %v3355
        %v3404 = vadd.f32 %v2678, %v3358
        %v3405 = vadd.f32 %v2679, %v3363
        %v3406 = vadd.f32 %v2680, %v3366
        %v3407 = vadd.f32 %v2681, %v3371
        %v3408 = vadd.f32 %v2682, %v3374
        %v3409 = vld [vmem:[%s2324] sm:$0xe]
        %v3410 = vld [vmem:[%s2324 + $0xc] sm:$0xe]
        %v3411 = vld [vmem:[%s2324 + $0x18] sm:$0xe]
        %v3412 = vld [vmem:[%s2324 + $0x24] sm:$0xe]
        %v3413 = vld [vmem:[%s2324 + $0x30] sm:$0xe]
        %v3414 = vld [vmem:[%s2324 + $0x3c] sm:$0xe]
        %v3415 = vld [vmem:[%s2324 + $0x48] sm:$0xe]
        %v3416 = vld [vmem:[%s2324 + $0x54] sm:$0xe]
        %v3417 = vld [vmem:[%s2324 + $0x60] sm:$0xe]
        %v3418 = vld [vmem:[%s2324 + $0x6c] sm:$0xe]
        %v3419 = vld [vmem:[%s2324 + $0x78] sm:$0xe]
        %v3420 = vld [vmem:[%s2324 + $0x84] sm:$0xe]
        %v3421 = vld [vmem:[%s2324 + $0x90] sm:$0xe]
        %v3422 = vld [vmem:[%s2324 + $0x9c] sm:$0xe]
        %v3423 = vld [vmem:[%s2324 + $0xa8] sm:$0xe]
        %v3424 = vld [vmem:[%s2324 + $0xb4] sm:$0xe]
        %v3473 = vrot.slane %v3409, 5
        %v3474 = vrot.slane %v3473, 4
        %v3475 = vrot.slane %v2684, 5
        %v3476 = vsel %vm1917, %v3474, %v3475
        %v3477 = vrot.slane %v3475, 4
        %v3478 = vrot.slane %v2685, 5
        %v3479 = vsel %vm1917, %v3477, %v3478
        %v3480 = vrot.slane %v3410, 5
        %v3481 = vrot.slane %v3480, 4
        %v3482 = vrot.slane %v2687, 5
        %v3483 = vsel %vm1917, %v3481, %v3482
        %v3484 = vrot.slane %v3482, 4
        %v3485 = vrot.slane %v2688, 5
        %v3486 = vsel %vm1917, %v3484, %v3485
        %v3487 = vrot.slane %v3411, 5
        %v3488 = vrot.slane %v3487, 4
        %v3489 = vrot.slane %v2690, 5
        %v3490 = vsel %vm1917, %v3488, %v3489
        %v3491 = vrot.slane %v3489, 4
        %v3492 = vrot.slane %v2691, 5
        %v3493 = vsel %vm1917, %v3491, %v3492
        %v3494 = vrot.slane %v3412, 5
        %v3495 = vrot.slane %v3494, 4
        %v3496 = vrot.slane %v2693, 5
        %v3497 = vsel %vm1917, %v3495, %v3496
        %v3498 = vrot.slane %v3496, 4
        %v3499 = vrot.slane %v2694, 5
        %v3500 = vsel %vm1917, %v3498, %v3499
        %v3501 = vrot.slane %v3413, 5
        %v3502 = vrot.slane %v3501, 4
        %v3503 = vrot.slane %v2696, 5
        %v3504 = vsel %vm1917, %v3502, %v3503
        %v3505 = vrot.slane %v3503, 4
        %v3506 = vrot.slane %v2697, 5
        %v3507 = vsel %vm1917, %v3505, %v3506
        %v3508 = vrot.slane %v3414, 5
        %v3509 = vrot.slane %v3508, 4
        %v3510 = vrot.slane %v2699, 5
        %v3511 = vsel %vm1917, %v3509, %v3510
        %v3512 = vrot.slane %v3510, 4
        %v3513 = vrot.slane %v2700, 5
        %v3514 = vsel %vm1917, %v3512, %v3513
        %v3515 = vrot.slane %v3415, 5
        %v3516 = vrot.slane %v3515, 4
        %v3517 = vrot.slane %v2702, 5
        %v3518 = vsel %vm1917, %v3516, %v3517
        %v3519 = vrot.slane %v3517, 4
        %v3520 = vrot.slane %v2703, 5
        %v3521 = vsel %vm1917, %v3519, %v3520
        %v3522 = vrot.slane %v3416, 5
        %v3523 = vrot.slane %v3522, 4
        %v3524 = vrot.slane %v2705, 5
        %v3525 = vsel %vm1917, %v3523, %v3524
        %v3526 = vrot.slane %v3524, 4
        %v3527 = vrot.slane %v2706, 5
        %v3528 = vsel %vm1917, %v3526, %v3527
        %v3529 = vrot.slane %v3417, 5
        %v3530 = vrot.slane %v3529, 4
        %v3531 = vrot.slane %v2708, 5
        %v3532 = vsel %vm1917, %v3530, %v3531
        %v3533 = vrot.slane %v3531, 4
        %v3534 = vrot.slane %v2709, 5
        %v3535 = vsel %vm1917, %v3533, %v3534
        %v3536 = vrot.slane %v3418, 5
        %v3537 = vrot.slane %v3536, 4
        %v3538 = vrot.slane %v2711, 5
        %v3539 = vsel %vm1917, %v3537, %v3538
        %v3540 = vrot.slane %v3538, 4
        %v3541 = vrot.slane %v2712, 5
        %v3542 = vsel %vm1917, %v3540, %v3541
        %v3543 = vrot.slane %v3419, 5
        %v3544 = vrot.slane %v3543, 4
        %v3545 = vrot.slane %v2714, 5
        %v3546 = vsel %vm1917, %v3544, %v3545
        %v3547 = vrot.slane %v3545, 4
        %v3548 = vrot.slane %v2715, 5
        %v3549 = vsel %vm1917, %v3547, %v3548
        %v3550 = vrot.slane %v3420, 5
        %v3551 = vrot.slane %v3550, 4
        %v3552 = vrot.slane %v2717, 5
        %v3553 = vsel %vm1917, %v3551, %v3552
        %v3554 = vrot.slane %v3552, 4
        %v3555 = vrot.slane %v2718, 5
        %v3556 = vsel %vm1917, %v3554, %v3555
        %v3557 = vrot.slane %v3421, 5
        %v3558 = vrot.slane %v3557, 4
        %v3559 = vrot.slane %v2720, 5
        %v3560 = vsel %vm1917, %v3558, %v3559
        %v3561 = vrot.slane %v3559, 4
        %v3562 = vrot.slane %v2721, 5
        %v3563 = vsel %vm1917, %v3561, %v3562
        %v3564 = vrot.slane %v3422, 5
        %v3565 = vrot.slane %v3564, 4
        %v3566 = vrot.slane %v2723, 5
        %v3567 = vsel %vm1917, %v3565, %v3566
        %v3568 = vrot.slane %v3566, 4
        %v3569 = vrot.slane %v2724, 5
        %v3570 = vsel %vm1917, %v3568, %v3569
        %v3571 = vrot.slane %v3423, 5
        %v3572 = vrot.slane %v3571, 4
        %v3573 = vrot.slane %v2726, 5
        %v3574 = vsel %vm1917, %v3572, %v3573
        %v3575 = vrot.slane %v3573, 4
        %v3576 = vrot.slane %v2727, 5
        %v3577 = vsel %vm1917, %v3575, %v3576
        %v3578 = vrot.slane %v3424, 5
        %v3579 = vrot.slane %v3578, 4
        %v3580 = vrot.slane %v2729, 5
        %v3581 = vsel %vm1917, %v3579, %v3580
        %v3582 = vrot.slane %v3580, 4
        %v3583 = vrot.slane %v2730, 5
        %v3584 = vsel %vm1917, %v3582, %v3583
        %s3585 = scalar_lea.vmem %s866, 10
        %v3586 = vld [vmem:[%s3585] sm:$0x3]
        %v3587 = vunpack.c.l.b16 %v3476
        %v3588 = vunpack.c.l.b16 %v3479
        %v3589 = vunpack.c.l.b16 %v3483
        %v3590 = vunpack.c.l.b16 %v3486
        %v3591 = vunpack.c.l.b16 %v3490
        %v3592 = vunpack.c.l.b16 %v3493
        %v3593 = vunpack.c.l.b16 %v3497
        %v3594 = vunpack.c.l.b16 %v3500
        %v3595 = vunpack.c.l.b16 %v3504
        %v3596 = vunpack.c.l.b16 %v3507
        %v3597 = vunpack.c.l.b16 %v3511
        %v3598 = vunpack.c.l.b16 %v3514
        %v3599 = vunpack.c.l.b16 %v3518
        %v3600 = vunpack.c.l.b16 %v3521
        %v3601 = vunpack.c.l.b16 %v3525
        %v3602 = vunpack.c.l.b16 %v3528
        %v3603 = vunpack.c.l.b16 %v3532
        %v3604 = vunpack.c.l.b16 %v3535
        %v3605 = vunpack.c.l.b16 %v3539
        %v3606 = vunpack.c.l.b16 %v3542
        %v3607 = vunpack.c.l.b16 %v3546
        %v3608 = vunpack.c.l.b16 %v3549
        %v3609 = vunpack.c.l.b16 %v3553
        %v3610 = vunpack.c.l.b16 %v3556
        %v3611 = vunpack.c.l.b16 %v3560
        %v3612 = vunpack.c.l.b16 %v3563
        %v3613 = vunpack.c.l.b16 %v3567
        %v3614 = vunpack.c.l.b16 %v3570
        %v3615 = vunpack.c.l.b16 %v3574
        %v3616 = vunpack.c.l.b16 %v3577
        %v3617 = vunpack.c.l.b16 %v3581
        %v3618 = vunpack.c.l.b16 %v3584
        %v3619 = vpack.c.b16 %v3588, %v3587
        %v3620 = vpack.c.b16 %v3590, %v3589
        %v3621 = vpack.c.b16 %v3592, %v3591
        %v3622 = vpack.c.b16 %v3594, %v3593
        %v3623 = vpack.c.b16 %v3596, %v3595
        %v3624 = vpack.c.b16 %v3598, %v3597
        %v3625 = vpack.c.b16 %v3600, %v3599
        %v3626 = vpack.c.b16 %v3602, %v3601
        %v3627 = vpack.c.b16 %v3604, %v3603
        %v3628 = vpack.c.b16 %v3606, %v3605
        %v3629 = vpack.c.b16 %v3608, %v3607
        %v3630 = vpack.c.b16 %v3610, %v3609
        %v3631 = vpack.c.b16 %v3612, %v3611
        %v3632 = vpack.c.b16 %v3614, %v3613
        %v3633 = vpack.c.b16 %v3616, %v3615
        %v3634 = vpack.c.b16 %v3618, %v3617
        %v3636 = vsel %vm1361, %v3619, 0
        %v3639 = vsel %vm1361, %v3620, 0
        %v3642 = vsel %vm1361, %v3621, 0
        %v3645 = vsel %vm1361, %v3622, 0
        %v3648 = vsel %vm1361, %v3623, 0
        %v3651 = vsel %vm1361, %v3624, 0
        %v3654 = vsel %vm1361, %v3625, 0
        %v3657 = vsel %vm1361, %v3626, 0
        %v3660 = vsel %vm1361, %v3627, 0
        %v3663 = vsel %vm1361, %v3628, 0
        %v3666 = vsel %vm1361, %v3629, 0
        %v3669 = vsel %vm1361, %v3630, 0
        %v3672 = vsel %vm1361, %v3631, 0
        %v3675 = vsel %vm1361, %v3632, 0
        %v3678 = vsel %vm1361, %v3633, 0
        %v3681 = vsel %vm1361, %v3634, 0
        %v3684 = vsel %vm1410, %v3586, 0
        %3686 = vmatprep.subr.bf16.mxu0 0
        %3687 = vmatpush1.bf16.msra.mxu0 0
        %3688 = vmatprep.subr.bf16.mxu0 0
        %3689 = vmatpush1.bf16.msra.mxu0 0
        %3690 = vmatprep.subr.bf16.mxu0 0
        %3691 = vmatpush1.bf16.msra.mxu0 0
        %3692 = vmatprep.subr.bf16.mxu0 0
        %3693 = vmatpush1.bf16.msra.mxu0 0
        %3694 = vmatprep.subr.bf16.mxu0 0
        %3695 = vmatpush1.bf16.msra.mxu0 0
        %3696 = vmatprep.subr.bf16.mxu0 0
        %3697 = vmatpush1.bf16.msra.mxu0 0
        %3698 = vmatprep.subr.bf16.mxu0 0
        %3699 = vmatpush1.bf16.msra.mxu0 0
        %3700 = vmatprep.subr.bf16.mxu0 0
        %3701 = vmatpush1.bf16.msra.mxu0 %v3684
        %3702 = vmatprep.subr.bf16.mxu0 0
        %3703 = vmatpush2.bf16.msra.mxu0 0
        %3704 = vmatprep.subr.bf16.mxu0 0
        %3705 = vmatpush2.bf16.msra.mxu0 0
        %3706 = vmatprep.subr.bf16.mxu0 0
        %3707 = vmatpush2.bf16.msra.mxu0 0
        %3708 = vmatprep.subr.bf16.mxu0 0
        %3709 = vmatpush2.bf16.msra.mxu0 0
        %3710 = vmatprep.subr.bf16.mxu0 0
        %3711 = vmatpush2.bf16.msra.mxu0 0
        %3712 = vmatprep.subr.bf16.mxu0 0
        %3713 = vmatpush2.bf16.msra.mxu0 0
        %3714 = vmatprep.subr.bf16.mxu0 0
        %3715 = vmatpush2.bf16.msra.mxu0 0
        %3716 = vmatprep.subr.bf16.mxu0 0
        %3717 = vmatpush2.bf16.msra.mxu0 0
        %3718 = vmatprep.mubr.bf16.mxu0 0
        %3719 = vmatmul.mubr.bf16.gmra.mxu0 %v3636
        %v3720 = vpop.f32.mrf.mxu0
        %v3721 = vadd.f32 0.0, %v3720
        %v3722 = vpop.f32.mrf.mxu0
        %v3723 = vpop.f32.mrf.mxu0
        %v3724 = vadd.f32 0.0, %v3723
        %v3725 = vpop.f32.mrf.mxu0
        %3726 = vmatprep.mubr.bf16.mxu0 0
        %3727 = vmatmul.mubr.bf16.gmra.mxu0 %v3639
        %v3728 = vpop.f32.mrf.mxu0
        %v3729 = vadd.f32 0.0, %v3728
        %v3730 = vpop.f32.mrf.mxu0
        %v3731 = vpop.f32.mrf.mxu0
        %v3732 = vadd.f32 0.0, %v3731
        %v3733 = vpop.f32.mrf.mxu0
        %3734 = vmatprep.mubr.bf16.mxu0 0
        %3735 = vmatmul.mubr.bf16.gmra.mxu0 %v3642
        %v3736 = vpop.f32.mrf.mxu0
        %v3737 = vadd.f32 0.0, %v3736
        %v3738 = vpop.f32.mrf.mxu0
        %v3739 = vpop.f32.mrf.mxu0
        %v3740 = vadd.f32 0.0, %v3739
        %v3741 = vpop.f32.mrf.mxu0
        %3742 = vmatprep.mubr.bf16.mxu0 0
        %3743 = vmatmul.mubr.bf16.gmra.mxu0 %v3645
        %v3744 = vpop.f32.mrf.mxu0
        %v3745 = vadd.f32 0.0, %v3744
        %v3746 = vpop.f32.mrf.mxu0
        %v3747 = vpop.f32.mrf.mxu0
        %v3748 = vadd.f32 0.0, %v3747
        %v3749 = vpop.f32.mrf.mxu0
        %3750 = vmatprep.mubr.bf16.mxu0 0
        %3751 = vmatmul.mubr.bf16.gmra.mxu0 %v3648
        %v3752 = vpop.f32.mrf.mxu0
        %v3753 = vadd.f32 0.0, %v3752
        %v3754 = vpop.f32.mrf.mxu0
        %v3755 = vpop.f32.mrf.mxu0
        %v3756 = vadd.f32 0.0, %v3755
        %v3757 = vpop.f32.mrf.mxu0
        %3758 = vmatprep.mubr.bf16.mxu0 0
        %3759 = vmatmul.mubr.bf16.gmra.mxu0 %v3651
        %v3760 = vpop.f32.mrf.mxu0
        %v3761 = vadd.f32 0.0, %v3760
        %v3762 = vpop.f32.mrf.mxu0
        %v3763 = vpop.f32.mrf.mxu0
        %v3764 = vadd.f32 0.0, %v3763
        %v3765 = vpop.f32.mrf.mxu0
        %3766 = vmatprep.mubr.bf16.mxu0 0
        %3767 = vmatmul.mubr.bf16.gmra.mxu0 %v3654
        %v3768 = vpop.f32.mrf.mxu0
        %v3769 = vadd.f32 0.0, %v3768
        %v3770 = vpop.f32.mrf.mxu0
        %v3771 = vpop.f32.mrf.mxu0
        %v3772 = vadd.f32 0.0, %v3771
        %v3773 = vpop.f32.mrf.mxu0
        %3774 = vmatprep.mubr.bf16.mxu0 0
        %3775 = vmatmul.mubr.bf16.gmra.mxu0 %v3657
        %v3776 = vpop.f32.mrf.mxu0
        %v3777 = vadd.f32 0.0, %v3776
        %v3778 = vpop.f32.mrf.mxu0
        %v3779 = vpop.f32.mrf.mxu0
        %v3780 = vadd.f32 0.0, %v3779
        %v3781 = vpop.f32.mrf.mxu0
        %3782 = vmatprep.mubr.bf16.mxu0 0
        %3783 = vmatmul.mubr.bf16.gmra.mxu0 %v3660
        %v3784 = vpop.f32.mrf.mxu0
        %v3785 = vadd.f32 0.0, %v3784
        %v3786 = vpop.f32.mrf.mxu0
        %v3787 = vpop.f32.mrf.mxu0
        %v3788 = vadd.f32 0.0, %v3787
        %v3789 = vpop.f32.mrf.mxu0
        %3790 = vmatprep.mubr.bf16.mxu0 0
        %3791 = vmatmul.mubr.bf16.gmra.mxu0 %v3663
        %v3792 = vpop.f32.mrf.mxu0
        %v3793 = vadd.f32 0.0, %v3792
        %v3794 = vpop.f32.mrf.mxu0
        %v3795 = vpop.f32.mrf.mxu0
        %v3796 = vadd.f32 0.0, %v3795
        %v3797 = vpop.f32.mrf.mxu0
        %3798 = vmatprep.mubr.bf16.mxu0 0
        %3799 = vmatmul.mubr.bf16.gmra.mxu0 %v3666
        %v3800 = vpop.f32.mrf.mxu0
        %v3801 = vadd.f32 0.0, %v3800
        %v3802 = vpop.f32.mrf.mxu0
        %v3803 = vpop.f32.mrf.mxu0
        %v3804 = vadd.f32 0.0, %v3803
        %v3805 = vpop.f32.mrf.mxu0
        %3806 = vmatprep.mubr.bf16.mxu0 0
        %3807 = vmatmul.mubr.bf16.gmra.mxu0 %v3669
        %v3808 = vpop.f32.mrf.mxu0
        %v3809 = vadd.f32 0.0, %v3808
        %v3810 = vpop.f32.mrf.mxu0
        %v3811 = vpop.f32.mrf.mxu0
        %v3812 = vadd.f32 0.0, %v3811
        %v3813 = vpop.f32.mrf.mxu0
        %3814 = vmatprep.mubr.bf16.mxu0 0
        %3815 = vmatmul.mubr.bf16.gmra.mxu0 %v3672
        %v3816 = vpop.f32.mrf.mxu0
        %v3817 = vadd.f32 0.0, %v3816
        %v3818 = vpop.f32.mrf.mxu0
        %v3819 = vpop.f32.mrf.mxu0
        %v3820 = vadd.f32 0.0, %v3819
        %v3821 = vpop.f32.mrf.mxu0
        %3822 = vmatprep.mubr.bf16.mxu0 0
        %3823 = vmatmul.mubr.bf16.gmra.mxu0 %v3675
        %v3824 = vpop.f32.mrf.mxu0
        %v3825 = vadd.f32 0.0, %v3824
        %v3826 = vpop.f32.mrf.mxu0
        %v3827 = vpop.f32.mrf.mxu0
        %v3828 = vadd.f32 0.0, %v3827
        %v3829 = vpop.f32.mrf.mxu0
        %3830 = vmatprep.mubr.bf16.mxu0 0
        %3831 = vmatmul.mubr.bf16.gmra.mxu0 %v3678
        %v3832 = vpop.f32.mrf.mxu0
        %v3833 = vadd.f32 0.0, %v3832
        %v3834 = vpop.f32.mrf.mxu0
        %v3835 = vpop.f32.mrf.mxu0
        %v3836 = vadd.f32 0.0, %v3835
        %v3837 = vpop.f32.mrf.mxu0
        %3838 = vmatprep.mubr.bf16.mxu0 0
        %3839 = vmatmul.mubr.bf16.gmra.mxu0 %v3681
        %v3840 = vpop.f32.mrf.mxu0
        %v3841 = vadd.f32 0.0, %v3840
        %v3842 = vpop.f32.mrf.mxu0
        %v3843 = vpop.f32.mrf.mxu0
        %v3844 = vadd.f32 0.0, %v3843
        %v3845 = vpop.f32.mrf.mxu0
        %3846 = vdwg.mxu0
        %v3847 = vadd.f32 %v3377, %v3721
        %v3848 = vadd.f32 %v3378, %v3724
        %v3849 = vadd.f32 %v3379, %v3729
        %v3850 = vadd.f32 %v3380, %v3732
        %v3851 = vadd.f32 %v3381, %v3737
        %v3852 = vadd.f32 %v3382, %v3740
        %v3853 = vadd.f32 %v3383, %v3745
        %v3854 = vadd.f32 %v3384, %v3748
        %v3855 = vadd.f32 %v3385, %v3753
        %v3856 = vadd.f32 %v3386, %v3756
        %v3857 = vadd.f32 %v3387, %v3761
        %v3858 = vadd.f32 %v3388, %v3764
        %v3859 = vadd.f32 %v3389, %v3769
        %v3860 = vadd.f32 %v3390, %v3772
        %v3861 = vadd.f32 %v3391, %v3777
        %v3862 = vadd.f32 %v3392, %v3780
        %v3863 = vadd.f32 %v3393, %v3785
        %v3864 = vadd.f32 %v3394, %v3788
        %v3865 = vadd.f32 %v3395, %v3793
        %v3866 = vadd.f32 %v3396, %v3796
        %v3867 = vadd.f32 %v3397, %v3801
        %v3868 = vadd.f32 %v3398, %v3804
        %v3869 = vadd.f32 %v3399, %v3809
        %v3870 = vadd.f32 %v3400, %v3812
        %v3871 = vadd.f32 %v3401, %v3817
        %v3872 = vadd.f32 %v3402, %v3820
        %v3873 = vadd.f32 %v3403, %v3825
        %v3874 = vadd.f32 %v3404, %v3828
        %v3875 = vadd.f32 %v3405, %v3833
        %v3876 = vadd.f32 %v3406, %v3836
        %v3877 = vadd.f32 %v3407, %v3841
        %v3878 = vadd.f32 %v3408, %v3844
        %s3879 = scalar_lea.vmem %s829, 384 [#allocation2]
        %v3880 = vld [vmem:[%s3879] sm:$0xf]
        %v3881 = vld [vmem:[%s3879 + $0x4] sm:$0xf]
        %v3882 = vld [vmem:[%s3879 + $0xc] sm:$0xf]
        %v3883 = vld [vmem:[%s3879 + $0x10] sm:$0xf]
        %v3884 = vld [vmem:[%s3879 + $0x18] sm:$0xf]
        %v3885 = vld [vmem:[%s3879 + $0x1c] sm:$0xf]
        %v3886 = vld [vmem:[%s3879 + $0x24] sm:$0xf]
        %v3887 = vld [vmem:[%s3879 + $0x28] sm:$0xf]
        %v3888 = vld [vmem:[%s3879 + $0x30] sm:$0xf]
        %v3889 = vld [vmem:[%s3879 + $0x34] sm:$0xf]
        %v3890 = vld [vmem:[%s3879 + $0x3c] sm:$0xf]
        %v3891 = vld [vmem:[%s3879 + $0x40] sm:$0xf]
        %v3892 = vld [vmem:[%s3879 + $0x48] sm:$0xf]
        %v3893 = vld [vmem:[%s3879 + $0x4c] sm:$0xf]
        %v3894 = vld [vmem:[%s3879 + $0x54] sm:$0xf]
        %v3895 = vld [vmem:[%s3879 + $0x58] sm:$0xf]
        %v3896 = vld [vmem:[%s3879 + $0x60] sm:$0xf]
        %v3897 = vld [vmem:[%s3879 + $0x64] sm:$0xf]
        %v3898 = vld [vmem:[%s3879 + $0x6c] sm:$0xf]
        %v3899 = vld [vmem:[%s3879 + $0x70] sm:$0xf]
        %v3900 = vld [vmem:[%s3879 + $0x78] sm:$0xf]
        %v3901 = vld [vmem:[%s3879 + $0x7c] sm:$0xf]
        %v3902 = vld [vmem:[%s3879 + $0x84] sm:$0xf]
        %v3903 = vld [vmem:[%s3879 + $0x88] sm:$0xf]
        %v3904 = vld [vmem:[%s3879 + $0x90] sm:$0xf]
        %v3905 = vld [vmem:[%s3879 + $0x94] sm:$0xf]
        %v3906 = vld [vmem:[%s3879 + $0x9c] sm:$0xf]
        %v3907 = vld [vmem:[%s3879 + $0xa0] sm:$0xf]
        %v3908 = vld [vmem:[%s3879 + $0xa8] sm:$0xf]
        %v3909 = vld [vmem:[%s3879 + $0xac] sm:$0xf]
        %v3910 = vld [vmem:[%s3879 + $0xb4] sm:$0xf]
        %v3911 = vld [vmem:[%s3879 + $0xb8] sm:$0xf]
        %s3912 = scalar_lea.vmem %s866, 12
        %v3913 = vld [vmem:[%s3912] sm:$0x3]
        %v3946 = vunpack.c.l.b16 %v3880
        %v3947 = vunpack.c.l.b16 %v3881
        %v3948 = vunpack.c.l.b16 %v3882
        %v3949 = vunpack.c.l.b16 %v3883
        %v3950 = vunpack.c.l.b16 %v3884
        %v3951 = vunpack.c.l.b16 %v3885
        %v3952 = vunpack.c.l.b16 %v3886
        %v3953 = vunpack.c.l.b16 %v3887
        %v3954 = vunpack.c.l.b16 %v3888
        %v3955 = vunpack.c.l.b16 %v3889
        %v3956 = vunpack.c.l.b16 %v3890
        %v3957 = vunpack.c.l.b16 %v3891
        %v3958 = vunpack.c.l.b16 %v3892
        %v3959 = vunpack.c.l.b16 %v3893
        %v3960 = vunpack.c.l.b16 %v3894
        %v3961 = vunpack.c.l.b16 %v3895
        %v3962 = vunpack.c.l.b16 %v3896
        %v3963 = vunpack.c.l.b16 %v3897
        %v3964 = vunpack.c.l.b16 %v3898
        %v3965 = vunpack.c.l.b16 %v3899
        %v3966 = vunpack.c.l.b16 %v3900
        %v3967 = vunpack.c.l.b16 %v3901
        %v3968 = vunpack.c.l.b16 %v3902
        %v3969 = vunpack.c.l.b16 %v3903
        %v3970 = vunpack.c.l.b16 %v3904
        %v3971 = vunpack.c.l.b16 %v3905
        %v3972 = vunpack.c.l.b16 %v3906
        %v3973 = vunpack.c.l.b16 %v3907
        %v3974 = vunpack.c.l.b16 %v3908
        %v3975 = vunpack.c.l.b16 %v3909
        %v3976 = vunpack.c.l.b16 %v3910
        %v3977 = vunpack.c.l.b16 %v3911
        %v3978 = vpack.c.b16 %v3947, %v3946
        %v3979 = vpack.c.b16 %v3949, %v3948
        %v3980 = vpack.c.b16 %v3951, %v3950
        %v3981 = vpack.c.b16 %v3953, %v3952
        %v3982 = vpack.c.b16 %v3955, %v3954
        %v3983 = vpack.c.b16 %v3957, %v3956
        %v3984 = vpack.c.b16 %v3959, %v3958
        %v3985 = vpack.c.b16 %v3961, %v3960
        %v3986 = vpack.c.b16 %v3963, %v3962
        %v3987 = vpack.c.b16 %v3965, %v3964
        %v3988 = vpack.c.b16 %v3967, %v3966
        %v3989 = vpack.c.b16 %v3969, %v3968
        %v3990 = vpack.c.b16 %v3971, %v3970
        %v3991 = vpack.c.b16 %v3973, %v3972
        %v3992 = vpack.c.b16 %v3975, %v3974
        %v3993 = vpack.c.b16 %v3977, %v3976
        %v3995 = vsel %vm1361, %v3978, 0
        %v3998 = vsel %vm1361, %v3979, 0
        %v4001 = vsel %vm1361, %v3980, 0
        %v4004 = vsel %vm1361, %v3981, 0
        %v4007 = vsel %vm1361, %v3982, 0
        %v4010 = vsel %vm1361, %v3983, 0
        %v4013 = vsel %vm1361, %v3984, 0
        %v4016 = vsel %vm1361, %v3985, 0
        %v4019 = vsel %vm1361, %v3986, 0
        %v4022 = vsel %vm1361, %v3987, 0
        %v4025 = vsel %vm1361, %v3988, 0
        %v4028 = vsel %vm1361, %v3989, 0
        %v4031 = vsel %vm1361, %v3990, 0
        %v4034 = vsel %vm1361, %v3991, 0
        %v4037 = vsel %vm1361, %v3992, 0
        %v4040 = vsel %vm1361, %v3993, 0
        %v4043 = vsel %vm1410, %v3913, 0
        %4045 = vmatprep.subr.bf16.mxu0 0
        %4046 = vmatpush1.bf16.msra.mxu0 0
        %4047 = vmatprep.subr.bf16.mxu0 0
        %4048 = vmatpush1.bf16.msra.mxu0 0
        %4049 = vmatprep.subr.bf16.mxu0 0
        %4050 = vmatpush1.bf16.msra.mxu0 0
        %4051 = vmatprep.subr.bf16.mxu0 0
        %4052 = vmatpush1.bf16.msra.mxu0 0
        %4053 = vmatprep.subr.bf16.mxu0 0
        %4054 = vmatpush1.bf16.msra.mxu0 0
        %4055 = vmatprep.subr.bf16.mxu0 0
        %4056 = vmatpush1.bf16.msra.mxu0 0
        %4057 = vmatprep.subr.bf16.mxu0 0
        %4058 = vmatpush1.bf16.msra.mxu0 0
        %4059 = vmatprep.subr.bf16.mxu0 0
        %4060 = vmatpush1.bf16.msra.mxu0 %v4043
        %4061 = vmatprep.subr.bf16.mxu0 0
        %4062 = vmatpush2.bf16.msra.mxu0 0
        %4063 = vmatprep.subr.bf16.mxu0 0
        %4064 = vmatpush2.bf16.msra.mxu0 0
        %4065 = vmatprep.subr.bf16.mxu0 0
        %4066 = vmatpush2.bf16.msra.mxu0 0
        %4067 = vmatprep.subr.bf16.mxu0 0
        %4068 = vmatpush2.bf16.msra.mxu0 0
        %4069 = vmatprep.subr.bf16.mxu0 0
        %4070 = vmatpush2.bf16.msra.mxu0 0
        %4071 = vmatprep.subr.bf16.mxu0 0
        %4072 = vmatpush2.bf16.msra.mxu0 0
        %4073 = vmatprep.subr.bf16.mxu0 0
        %4074 = vmatpush2.bf16.msra.mxu0 0
        %4075 = vmatprep.subr.bf16.mxu0 0
        %4076 = vmatpush2.bf16.msra.mxu0 0
        %4077 = vmatprep.mubr.bf16.mxu0 0
        %4078 = vmatmul.mubr.bf16.gmra.mxu0 %v3995
        %v4079 = vpop.f32.mrf.mxu0
        %v4080 = vadd.f32 0.0, %v4079
        %v4081 = vpop.f32.mrf.mxu0
        %v4082 = vpop.f32.mrf.mxu0
        %v4083 = vadd.f32 0.0, %v4082
        %v4084 = vpop.f32.mrf.mxu0
        %4085 = vmatprep.mubr.bf16.mxu0 0
        %4086 = vmatmul.mubr.bf16.gmra.mxu0 %v3998
        %v4087 = vpop.f32.mrf.mxu0
        %v4088 = vadd.f32 0.0, %v4087
        %v4089 = vpop.f32.mrf.mxu0
        %v4090 = vpop.f32.mrf.mxu0
        %v4091 = vadd.f32 0.0, %v4090
        %v4092 = vpop.f32.mrf.mxu0
        %4093 = vmatprep.mubr.bf16.mxu0 0
        %4094 = vmatmul.mubr.bf16.gmra.mxu0 %v4001
        %v4095 = vpop.f32.mrf.mxu0
        %v4096 = vadd.f32 0.0, %v4095
        %v4097 = vpop.f32.mrf.mxu0
        %v4098 = vpop.f32.mrf.mxu0
        %v4099 = vadd.f32 0.0, %v4098
        %v4100 = vpop.f32.mrf.mxu0
        %4101 = vmatprep.mubr.bf16.mxu0 0
        %4102 = vmatmul.mubr.bf16.gmra.mxu0 %v4004
        %v4103 = vpop.f32.mrf.mxu0
        %v4104 = vadd.f32 0.0, %v4103
        %v4105 = vpop.f32.mrf.mxu0
        %v4106 = vpop.f32.mrf.mxu0
        %v4107 = vadd.f32 0.0, %v4106
        %v4108 = vpop.f32.mrf.mxu0
        %4109 = vmatprep.mubr.bf16.mxu0 0
        %4110 = vmatmul.mubr.bf16.gmra.mxu0 %v4007
        %v4111 = vpop.f32.mrf.mxu0
        %v4112 = vadd.f32 0.0, %v4111
        %v4113 = vpop.f32.mrf.mxu0
        %v4114 = vpop.f32.mrf.mxu0
        %v4115 = vadd.f32 0.0, %v4114
        %v4116 = vpop.f32.mrf.mxu0
        %4117 = vmatprep.mubr.bf16.mxu0 0
        %4118 = vmatmul.mubr.bf16.gmra.mxu0 %v4010
        %v4119 = vpop.f32.mrf.mxu0
        %v4120 = vadd.f32 0.0, %v4119
        %v4121 = vpop.f32.mrf.mxu0
        %v4122 = vpop.f32.mrf.mxu0
        %v4123 = vadd.f32 0.0, %v4122
        %v4124 = vpop.f32.mrf.mxu0
        %4125 = vmatprep.mubr.bf16.mxu0 0
        %4126 = vmatmul.mubr.bf16.gmra.mxu0 %v4013
        %v4127 = vpop.f32.mrf.mxu0
        %v4128 = vadd.f32 0.0, %v4127
        %v4129 = vpop.f32.mrf.mxu0
        %v4130 = vpop.f32.mrf.mxu0
        %v4131 = vadd.f32 0.0, %v4130
        %v4132 = vpop.f32.mrf.mxu0
        %4133 = vmatprep.mubr.bf16.mxu0 0
        %4134 = vmatmul.mubr.bf16.gmra.mxu0 %v4016
        %v4135 = vpop.f32.mrf.mxu0
        %v4136 = vadd.f32 0.0, %v4135
        %v4137 = vpop.f32.mrf.mxu0
        %v4138 = vpop.f32.mrf.mxu0
        %v4139 = vadd.f32 0.0, %v4138
        %v4140 = vpop.f32.mrf.mxu0
        %4141 = vmatprep.mubr.bf16.mxu0 0
        %4142 = vmatmul.mubr.bf16.gmra.mxu0 %v4019
        %v4143 = vpop.f32.mrf.mxu0
        %v4144 = vadd.f32 0.0, %v4143
        %v4145 = vpop.f32.mrf.mxu0
        %v4146 = vpop.f32.mrf.mxu0
        %v4147 = vadd.f32 0.0, %v4146
        %v4148 = vpop.f32.mrf.mxu0
        %4149 = vmatprep.mubr.bf16.mxu0 0
        %4150 = vmatmul.mubr.bf16.gmra.mxu0 %v4022
        %v4151 = vpop.f32.mrf.mxu0
        %v4152 = vadd.f32 0.0, %v4151
        %v4153 = vpop.f32.mrf.mxu0
        %v4154 = vpop.f32.mrf.mxu0
        %v4155 = vadd.f32 0.0, %v4154
        %v4156 = vpop.f32.mrf.mxu0
        %4157 = vmatprep.mubr.bf16.mxu0 0
        %4158 = vmatmul.mubr.bf16.gmra.mxu0 %v4025
        %v4159 = vpop.f32.mrf.mxu0
        %v4160 = vadd.f32 0.0, %v4159
        %v4161 = vpop.f32.mrf.mxu0
        %v4162 = vpop.f32.mrf.mxu0
        %v4163 = vadd.f32 0.0, %v4162
        %v4164 = vpop.f32.mrf.mxu0
        %4165 = vmatprep.mubr.bf16.mxu0 0
        %4166 = vmatmul.mubr.bf16.gmra.mxu0 %v4028
        %v4167 = vpop.f32.mrf.mxu0
        %v4168 = vadd.f32 0.0, %v4167
        %v4169 = vpop.f32.mrf.mxu0
        %v4170 = vpop.f32.mrf.mxu0
        %v4171 = vadd.f32 0.0, %v4170
        %v4172 = vpop.f32.mrf.mxu0
        %4173 = vmatprep.mubr.bf16.mxu0 0
        %4174 = vmatmul.mubr.bf16.gmra.mxu0 %v4031
        %v4175 = vpop.f32.mrf.mxu0
        %v4176 = vadd.f32 0.0, %v4175
        %v4177 = vpop.f32.mrf.mxu0
        %v4178 = vpop.f32.mrf.mxu0
        %v4179 = vadd.f32 0.0, %v4178
        %v4180 = vpop.f32.mrf.mxu0
        %4181 = vmatprep.mubr.bf16.mxu0 0
        %4182 = vmatmul.mubr.bf16.gmra.mxu0 %v4034
        %v4183 = vpop.f32.mrf.mxu0
        %v4184 = vadd.f32 0.0, %v4183
        %v4185 = vpop.f32.mrf.mxu0
        %v4186 = vpop.f32.mrf.mxu0
        %v4187 = vadd.f32 0.0, %v4186
        %v4188 = vpop.f32.mrf.mxu0
        %4189 = vmatprep.mubr.bf16.mxu0 0
        %4190 = vmatmul.mubr.bf16.gmra.mxu0 %v4037
        %v4191 = vpop.f32.mrf.mxu0
        %v4192 = vadd.f32 0.0, %v4191
        %v4193 = vpop.f32.mrf.mxu0
        %v4194 = vpop.f32.mrf.mxu0
        %v4195 = vadd.f32 0.0, %v4194
        %v4196 = vpop.f32.mrf.mxu0
        %4197 = vmatprep.mubr.bf16.mxu0 0
        %4198 = vmatmul.mubr.bf16.gmra.mxu0 %v4040
        %v4199 = vpop.f32.mrf.mxu0
        %v4200 = vadd.f32 0.0, %v4199
        %v4201 = vpop.f32.mrf.mxu0
        %v4202 = vpop.f32.mrf.mxu0
        %v4203 = vadd.f32 0.0, %v4202
        %v4204 = vpop.f32.mrf.mxu0
        %4205 = vdwg.mxu0
        %v4206 = vadd.f32 %v3847, %v4080
        %v4207 = vadd.f32 %v3848, %v4083
        %v4208 = vadd.f32 %v3849, %v4088
        %v4209 = vadd.f32 %v3850, %v4091
        %v4210 = vadd.f32 %v3851, %v4096
        %v4211 = vadd.f32 %v3852, %v4099
        %v4212 = vadd.f32 %v3853, %v4104
        %v4213 = vadd.f32 %v3854, %v4107
        %v4214 = vadd.f32 %v3855, %v4112
        %v4215 = vadd.f32 %v3856, %v4115
        %v4216 = vadd.f32 %v3857, %v4120
        %v4217 = vadd.f32 %v3858, %v4123
        %v4218 = vadd.f32 %v3859, %v4128
        %v4219 = vadd.f32 %v3860, %v4131
        %v4220 = vadd.f32 %v3861, %v4136
        %v4221 = vadd.f32 %v3862, %v4139
        %v4222 = vadd.f32 %v3863, %v4144
        %v4223 = vadd.f32 %v3864, %v4147
        %v4224 = vadd.f32 %v3865, %v4152
        %v4225 = vadd.f32 %v3866, %v4155
        %v4226 = vadd.f32 %v3867, %v4160
        %v4227 = vadd.f32 %v3868, %v4163
        %v4228 = vadd.f32 %v3869, %v4168
        %v4229 = vadd.f32 %v3870, %v4171
        %v4230 = vadd.f32 %v3871, %v4176
        %v4231 = vadd.f32 %v3872, %v4179
        %v4232 = vadd.f32 %v3873, %v4184
        %v4233 = vadd.f32 %v3874, %v4187
        %v4234 = vadd.f32 %v3875, %v4192
        %v4235 = vadd.f32 %v3876, %v4195
        %v4236 = vadd.f32 %v3877, %v4200
        %v4237 = vadd.f32 %v3878, %v4203
        %v4238 = vld [vmem:[%s3879] sm:$0xf]
        %v4239 = vld [vmem:[%s3879 + $0x4] sm:$0xf]
        %v4240 = vld [vmem:[%s3879 + $0x8] sm:$0x1]
        %v4241 = vld [vmem:[%s3879 + $0xc] sm:$0xf]
        %v4242 = vld [vmem:[%s3879 + $0x10] sm:$0xf]
        %v4243 = vld [vmem:[%s3879 + $0x14] sm:$0x1]
        %v4244 = vld [vmem:[%s3879 + $0x18] sm:$0xf]
        %v4245 = vld [vmem:[%s3879 + $0x1c] sm:$0xf]
        %v4246 = vld [vmem:[%s3879 + $0x20] sm:$0x1]
        %v4247 = vld [vmem:[%s3879 + $0x24] sm:$0xf]
        %v4248 = vld [vmem:[%s3879 + $0x28] sm:$0xf]
        %v4249 = vld [vmem:[%s3879 + $0x2c] sm:$0x1]
        %v4250 = vld [vmem:[%s3879 + $0x30] sm:$0xf]
        %v4251 = vld [vmem:[%s3879 + $0x34] sm:$0xf]
        %v4252 = vld [vmem:[%s3879 + $0x38] sm:$0x1]
        %v4253 = vld [vmem:[%s3879 + $0x3c] sm:$0xf]
        %v4254 = vld [vmem:[%s3879 + $0x40] sm:$0xf]
        %v4255 = vld [vmem:[%s3879 + $0x44] sm:$0x1]
        %v4256 = vld [vmem:[%s3879 + $0x48] sm:$0xf]
        %v4257 = vld [vmem:[%s3879 + $0x4c] sm:$0xf]
        %v4258 = vld [vmem:[%s3879 + $0x50] sm:$0x1]
        %v4259 = vld [vmem:[%s3879 + $0x54] sm:$0xf]
        %v4260 = vld [vmem:[%s3879 + $0x58] sm:$0xf]
        %v4261 = vld [vmem:[%s3879 + $0x5c] sm:$0x1]
        %v4262 = vld [vmem:[%s3879 + $0x60] sm:$0xf]
        %v4263 = vld [vmem:[%s3879 + $0x64] sm:$0xf]
        %v4264 = vld [vmem:[%s3879 + $0x68] sm:$0x1]
        %v4265 = vld [vmem:[%s3879 + $0x6c] sm:$0xf]
        %v4266 = vld [vmem:[%s3879 + $0x70] sm:$0xf]
        %v4267 = vld [vmem:[%s3879 + $0x74] sm:$0x1]
        %v4268 = vld [vmem:[%s3879 + $0x78] sm:$0xf]
        %v4269 = vld [vmem:[%s3879 + $0x7c] sm:$0xf]
        %v4270 = vld [vmem:[%s3879 + $0x80] sm:$0x1]
        %v4271 = vld [vmem:[%s3879 + $0x84] sm:$0xf]
        %v4272 = vld [vmem:[%s3879 + $0x88] sm:$0xf]
        %v4273 = vld [vmem:[%s3879 + $0x8c] sm:$0x1]
        %v4274 = vld [vmem:[%s3879 + $0x90] sm:$0xf]
        %v4275 = vld [vmem:[%s3879 + $0x94] sm:$0xf]
        %v4276 = vld [vmem:[%s3879 + $0x98] sm:$0x1]
        %v4277 = vld [vmem:[%s3879 + $0x9c] sm:$0xf]
        %v4278 = vld [vmem:[%s3879 + $0xa0] sm:$0xf]
        %v4279 = vld [vmem:[%s3879 + $0xa4] sm:$0x1]
        %v4280 = vld [vmem:[%s3879 + $0xa8] sm:$0xf]
        %v4281 = vld [vmem:[%s3879 + $0xac] sm:$0xf]
        %v4282 = vld [vmem:[%s3879 + $0xb0] sm:$0x1]
        %v4283 = vld [vmem:[%s3879 + $0xb4] sm:$0xf]
        %v4284 = vld [vmem:[%s3879 + $0xb8] sm:$0xf]
        %v4285 = vld [vmem:[%s3879 + $0xbc] sm:$0x1]
        %v4287 = vshrl.u32 %v4238, 16
        %v4289 = vrot.slane %v4287, 4
        %v4290 = vshll.u32 %v4238, 16
        %v4292 = vrot.slane %v4290, 5
        %v4293 = vor.u32 %v4289, %v4292
        %v4294 = vrot.slane %v4293, 4
        %v4296 = vshll.u32 %v4239, 16
        %v4298 = vrot.slane %v4296, 5
        %v4299 = vsel %vm926, %v4294, %v4298
        %v4300 = vshrl.u32 %v4239, 16
        %v4302 = vrot.slane %v4300, 4
        %v4303 = vor.u32 %v4302, %v4298
        %v4304 = vrot.slane %v4303, 4
        %v4306 = vshll.u32 %v4240, 16
        %v4308 = vrot.slane %v4306, 5
        %v4309 = vsel %vm926, %v4304, %v4308
        %v4311 = vshrl.u32 %v4241, 16
        %v4313 = vrot.slane %v4311, 4
        %v4314 = vshll.u32 %v4241, 16
        %v4316 = vrot.slane %v4314, 5
        %v4317 = vor.u32 %v4313, %v4316
        %v4318 = vrot.slane %v4317, 4
        %v4320 = vshll.u32 %v4242, 16
        %v4322 = vrot.slane %v4320, 5
        %v4323 = vsel %vm926, %v4318, %v4322
        %v4324 = vshrl.u32 %v4242, 16
        %v4326 = vrot.slane %v4324, 4
        %v4327 = vor.u32 %v4326, %v4322
        %v4328 = vrot.slane %v4327, 4
        %v4330 = vshll.u32 %v4243, 16
        %v4332 = vrot.slane %v4330, 5
        %v4333 = vsel %vm926, %v4328, %v4332
        %v4335 = vshrl.u32 %v4244, 16
        %v4337 = vrot.slane %v4335, 4
        %v4338 = vshll.u32 %v4244, 16
        %v4340 = vrot.slane %v4338, 5
        %v4341 = vor.u32 %v4337, %v4340
        %v4342 = vrot.slane %v4341, 4
        %v4344 = vshll.u32 %v4245, 16
        %v4346 = vrot.slane %v4344, 5
        %v4347 = vsel %vm926, %v4342, %v4346
        %v4348 = vshrl.u32 %v4245, 16
        %v4350 = vrot.slane %v4348, 4
        %v4351 = vor.u32 %v4350, %v4346
        %v4352 = vrot.slane %v4351, 4
        %v4354 = vshll.u32 %v4246, 16
        %v4356 = vrot.slane %v4354, 5
        %v4357 = vsel %vm926, %v4352, %v4356
        %v4359 = vshrl.u32 %v4247, 16
        %v4361 = vrot.slane %v4359, 4
        %v4362 = vshll.u32 %v4247, 16
        %v4364 = vrot.slane %v4362, 5
        %v4365 = vor.u32 %v4361, %v4364
        %v4366 = vrot.slane %v4365, 4
        %v4368 = vshll.u32 %v4248, 16
        %v4370 = vrot.slane %v4368, 5
        %v4371 = vsel %vm926, %v4366, %v4370
        %v4372 = vshrl.u32 %v4248, 16
        %v4374 = vrot.slane %v4372, 4
        %v4375 = vor.u32 %v4374, %v4370
        %v4376 = vrot.slane %v4375, 4
        %v4378 = vshll.u32 %v4249, 16
        %v4380 = vrot.slane %v4378, 5
        %v4381 = vsel %vm926, %v4376, %v4380
        %v4383 = vshrl.u32 %v4250, 16
        %v4385 = vrot.slane %v4383, 4
        %v4386 = vshll.u32 %v4250, 16
        %v4388 = vrot.slane %v4386, 5
        %v4389 = vor.u32 %v4385, %v4388
        %v4390 = vrot.slane %v4389, 4
        %v4392 = vshll.u32 %v4251, 16
        %v4394 = vrot.slane %v4392, 5
        %v4395 = vsel %vm926, %v4390, %v4394
        %v4396 = vshrl.u32 %v4251, 16
        %v4398 = vrot.slane %v4396, 4
        %v4399 = vor.u32 %v4398, %v4394
        %v4400 = vrot.slane %v4399, 4
        %v4402 = vshll.u32 %v4252, 16
        %v4404 = vrot.slane %v4402, 5
        %v4405 = vsel %vm926, %v4400, %v4404
        %v4407 = vshrl.u32 %v4253, 16
        %v4409 = vrot.slane %v4407, 4
        %v4410 = vshll.u32 %v4253, 16
        %v4412 = vrot.slane %v4410, 5
        %v4413 = vor.u32 %v4409, %v4412
        %v4414 = vrot.slane %v4413, 4
        %v4416 = vshll.u32 %v4254, 16
        %v4418 = vrot.slane %v4416, 5
        %v4419 = vsel %vm926, %v4414, %v4418
        %v4420 = vshrl.u32 %v4254, 16
        %v4422 = vrot.slane %v4420, 4
        %v4423 = vor.u32 %v4422, %v4418
        %v4424 = vrot.slane %v4423, 4
        %v4426 = vshll.u32 %v4255, 16
        %v4428 = vrot.slane %v4426, 5
        %v4429 = vsel %vm926, %v4424, %v4428
        %v4431 = vshrl.u32 %v4256, 16
        %v4433 = vrot.slane %v4431, 4
        %v4434 = vshll.u32 %v4256, 16
        %v4436 = vrot.slane %v4434, 5
        %v4437 = vor.u32 %v4433, %v4436
        %v4438 = vrot.slane %v4437, 4
        %v4440 = vshll.u32 %v4257, 16
        %v4442 = vrot.slane %v4440, 5
        %v4443 = vsel %vm926, %v4438, %v4442
        %v4444 = vshrl.u32 %v4257, 16
        %v4446 = vrot.slane %v4444, 4
        %v4447 = vor.u32 %v4446, %v4442
        %v4448 = vrot.slane %v4447, 4
        %v4450 = vshll.u32 %v4258, 16
        %v4452 = vrot.slane %v4450, 5
        %v4453 = vsel %vm926, %v4448, %v4452
        %v4455 = vshrl.u32 %v4259, 16
        %v4457 = vrot.slane %v4455, 4
        %v4458 = vshll.u32 %v4259, 16
        %v4460 = vrot.slane %v4458, 5
        %v4461 = vor.u32 %v4457, %v4460
        %v4462 = vrot.slane %v4461, 4
        %v4464 = vshll.u32 %v4260, 16
        %v4466 = vrot.slane %v4464, 5
        %v4467 = vsel %vm926, %v4462, %v4466
        %v4468 = vshrl.u32 %v4260, 16
        %v4470 = vrot.slane %v4468, 4
        %v4471 = vor.u32 %v4470, %v4466
        %v4472 = vrot.slane %v4471, 4
        %v4474 = vshll.u32 %v4261, 16
        %v4476 = vrot.slane %v4474, 5
        %v4477 = vsel %vm926, %v4472, %v4476
        %v4479 = vshrl.u32 %v4262, 16
        %v4481 = vrot.slane %v4479, 4
        %v4482 = vshll.u32 %v4262, 16
        %v4484 = vrot.slane %v4482, 5
        %v4485 = vor.u32 %v4481, %v4484
        %v4486 = vrot.slane %v4485, 4
        %v4488 = vshll.u32 %v4263, 16
        %v4490 = vrot.slane %v4488, 5
        %v4491 = vsel %vm926, %v4486, %v4490
        %v4492 = vshrl.u32 %v4263, 16
        %v4494 = vrot.slane %v4492, 4
        %v4495 = vor.u32 %v4494, %v4490
        %v4496 = vrot.slane %v4495, 4
        %v4498 = vshll.u32 %v4264, 16
        %v4500 = vrot.slane %v4498, 5
        %v4501 = vsel %vm926, %v4496, %v4500
        %v4503 = vshrl.u32 %v4265, 16
        %v4505 = vrot.slane %v4503, 4
        %v4506 = vshll.u32 %v4265, 16
        %v4508 = vrot.slane %v4506, 5
        %v4509 = vor.u32 %v4505, %v4508
        %v4510 = vrot.slane %v4509, 4
        %v4512 = vshll.u32 %v4266, 16
        %v4514 = vrot.slane %v4512, 5
        %v4515 = vsel %vm926, %v4510, %v4514
        %v4516 = vshrl.u32 %v4266, 16
        %v4518 = vrot.slane %v4516, 4
        %v4519 = vor.u32 %v4518, %v4514
        %v4520 = vrot.slane %v4519, 4
        %v4522 = vshll.u32 %v4267, 16
        %v4524 = vrot.slane %v4522, 5
        %v4525 = vsel %vm926, %v4520, %v4524
        %v4527 = vshrl.u32 %v4268, 16
        %v4529 = vrot.slane %v4527, 4
        %v4530 = vshll.u32 %v4268, 16
        %v4532 = vrot.slane %v4530, 5
        %v4533 = vor.u32 %v4529, %v4532
        %v4534 = vrot.slane %v4533, 4
        %v4536 = vshll.u32 %v4269, 16
        %v4538 = vrot.slane %v4536, 5
        %v4539 = vsel %vm926, %v4534, %v4538
        %v4540 = vshrl.u32 %v4269, 16
        %v4542 = vrot.slane %v4540, 4
        %v4543 = vor.u32 %v4542, %v4538
        %v4544 = vrot.slane %v4543, 4
        %v4546 = vshll.u32 %v4270, 16
        %v4548 = vrot.slane %v4546, 5
        %v4549 = vsel %vm926, %v4544, %v4548
        %v4551 = vshrl.u32 %v4271, 16
        %v4553 = vrot.slane %v4551, 4
        %v4554 = vshll.u32 %v4271, 16
        %v4556 = vrot.slane %v4554, 5
        %v4557 = vor.u32 %v4553, %v4556
        %v4558 = vrot.slane %v4557, 4
        %v4560 = vshll.u32 %v4272, 16
        %v4562 = vrot.slane %v4560, 5
        %v4563 = vsel %vm926, %v4558, %v4562
        %v4564 = vshrl.u32 %v4272, 16
        %v4566 = vrot.slane %v4564, 4
        %v4567 = vor.u32 %v4566, %v4562
        %v4568 = vrot.slane %v4567, 4
        %v4570 = vshll.u32 %v4273, 16
        %v4572 = vrot.slane %v4570, 5
        %v4573 = vsel %vm926, %v4568, %v4572
        %v4575 = vshrl.u32 %v4274, 16
        %v4577 = vrot.slane %v4575, 4
        %v4578 = vshll.u32 %v4274, 16
        %v4580 = vrot.slane %v4578, 5
        %v4581 = vor.u32 %v4577, %v4580
        %v4582 = vrot.slane %v4581, 4
        %v4584 = vshll.u32 %v4275, 16
        %v4586 = vrot.slane %v4584, 5
        %v4587 = vsel %vm926, %v4582, %v4586
        %v4588 = vshrl.u32 %v4275, 16
        %v4590 = vrot.slane %v4588, 4
        %v4591 = vor.u32 %v4590, %v4586
        %v4592 = vrot.slane %v4591, 4
        %v4594 = vshll.u32 %v4276, 16
        %v4596 = vrot.slane %v4594, 5
        %v4597 = vsel %vm926, %v4592, %v4596
        %v4599 = vshrl.u32 %v4277, 16
        %v4601 = vrot.slane %v4599, 4
        %v4602 = vshll.u32 %v4277, 16
        %v4604 = vrot.slane %v4602, 5
        %v4605 = vor.u32 %v4601, %v4604
        %v4606 = vrot.slane %v4605, 4
        %v4608 = vshll.u32 %v4278, 16
        %v4610 = vrot.slane %v4608, 5
        %v4611 = vsel %vm926, %v4606, %v4610
        %v4612 = vshrl.u32 %v4278, 16
        %v4614 = vrot.slane %v4612, 4
        %v4615 = vor.u32 %v4614, %v4610
        %v4616 = vrot.slane %v4615, 4
        %v4618 = vshll.u32 %v4279, 16
        %v4620 = vrot.slane %v4618, 5
        %v4621 = vsel %vm926, %v4616, %v4620
        %v4623 = vshrl.u32 %v4280, 16
        %v4625 = vrot.slane %v4623, 4
        %v4626 = vshll.u32 %v4280, 16
        %v4628 = vrot.slane %v4626, 5
        %v4629 = vor.u32 %v4625, %v4628
        %v4630 = vrot.slane %v4629, 4
        %v4632 = vshll.u32 %v4281, 16
        %v4634 = vrot.slane %v4632, 5
        %v4635 = vsel %vm926, %v4630, %v4634
        %v4636 = vshrl.u32 %v4281, 16
        %v4638 = vrot.slane %v4636, 4
        %v4639 = vor.u32 %v4638, %v4634
        %v4640 = vrot.slane %v4639, 4
        %v4642 = vshll.u32 %v4282, 16
        %v4644 = vrot.slane %v4642, 5
        %v4645 = vsel %vm926, %v4640, %v4644
        %v4647 = vshrl.u32 %v4283, 16
        %v4649 = vrot.slane %v4647, 4
        %v4650 = vshll.u32 %v4283, 16
        %v4652 = vrot.slane %v4650, 5
        %v4653 = vor.u32 %v4649, %v4652
        %v4654 = vrot.slane %v4653, 4
        %v4656 = vshll.u32 %v4284, 16
        %v4658 = vrot.slane %v4656, 5
        %v4659 = vsel %vm926, %v4654, %v4658
        %v4660 = vshrl.u32 %v4284, 16
        %v4662 = vrot.slane %v4660, 4
        %v4663 = vor.u32 %v4662, %v4658
        %v4664 = vrot.slane %v4663, 4
        %v4666 = vshll.u32 %v4285, 16
        %v4668 = vrot.slane %v4666, 5
        %v4669 = vsel %vm926, %v4664, %v4668
        %s4670 = scalar_lea.vmem %s866, 14
        %v4671 = vld [vmem:[%s4670] sm:$0x3]
        %v4672 = vunpack.c.l.b16 %v4299
        %v4673 = vunpack.c.l.b16 %v4309
        %v4674 = vunpack.c.l.b16 %v4323
        %v4675 = vunpack.c.l.b16 %v4333
        %v4676 = vunpack.c.l.b16 %v4347
        %v4677 = vunpack.c.l.b16 %v4357
        %v4678 = vunpack.c.l.b16 %v4371
        %v4679 = vunpack.c.l.b16 %v4381
        %v4680 = vunpack.c.l.b16 %v4395
        %v4681 = vunpack.c.l.b16 %v4405
        %v4682 = vunpack.c.l.b16 %v4419
        %v4683 = vunpack.c.l.b16 %v4429
        %v4684 = vunpack.c.l.b16 %v4443
        %v4685 = vunpack.c.l.b16 %v4453
        %v4686 = vunpack.c.l.b16 %v4467
        %v4687 = vunpack.c.l.b16 %v4477
        %v4688 = vunpack.c.l.b16 %v4491
        %v4689 = vunpack.c.l.b16 %v4501
        %v4690 = vunpack.c.l.b16 %v4515
        %v4691 = vunpack.c.l.b16 %v4525
        %v4692 = vunpack.c.l.b16 %v4539
        %v4693 = vunpack.c.l.b16 %v4549
        %v4694 = vunpack.c.l.b16 %v4563
        %v4695 = vunpack.c.l.b16 %v4573
        %v4696 = vunpack.c.l.b16 %v4587
        %v4697 = vunpack.c.l.b16 %v4597
        %v4698 = vunpack.c.l.b16 %v4611
        %v4699 = vunpack.c.l.b16 %v4621
        %v4700 = vunpack.c.l.b16 %v4635
        %v4701 = vunpack.c.l.b16 %v4645
        %v4702 = vunpack.c.l.b16 %v4659
        %v4703 = vunpack.c.l.b16 %v4669
        %v4704 = vpack.c.b16 %v4673, %v4672
        %v4705 = vpack.c.b16 %v4675, %v4674
        %v4706 = vpack.c.b16 %v4677, %v4676
        %v4707 = vpack.c.b16 %v4679, %v4678
        %v4708 = vpack.c.b16 %v4681, %v4680
        %v4709 = vpack.c.b16 %v4683, %v4682
        %v4710 = vpack.c.b16 %v4685, %v4684
        %v4711 = vpack.c.b16 %v4687, %v4686
        %v4712 = vpack.c.b16 %v4689, %v4688
        %v4713 = vpack.c.b16 %v4691, %v4690
        %v4714 = vpack.c.b16 %v4693, %v4692
        %v4715 = vpack.c.b16 %v4695, %v4694
        %v4716 = vpack.c.b16 %v4697, %v4696
        %v4717 = vpack.c.b16 %v4699, %v4698
        %v4718 = vpack.c.b16 %v4701, %v4700
        %v4719 = vpack.c.b16 %v4703, %v4702
        %v4721 = vsel %vm1361, %v4704, 0
        %v4724 = vsel %vm1361, %v4705, 0
        %v4727 = vsel %vm1361, %v4706, 0
        %v4730 = vsel %vm1361, %v4707, 0
        %v4733 = vsel %vm1361, %v4708, 0
        %v4736 = vsel %vm1361, %v4709, 0
        %v4739 = vsel %vm1361, %v4710, 0
        %v4742 = vsel %vm1361, %v4711, 0
        %v4745 = vsel %vm1361, %v4712, 0
        %v4748 = vsel %vm1361, %v4713, 0
        %v4751 = vsel %vm1361, %v4714, 0
        %v4754 = vsel %vm1361, %v4715, 0
        %v4757 = vsel %vm1361, %v4716, 0
        %v4760 = vsel %vm1361, %v4717, 0
        %v4763 = vsel %vm1361, %v4718, 0
        %v4766 = vsel %vm1361, %v4719, 0
        %v4769 = vsel %vm1410, %v4671, 0
        %4771 = vmatprep.subr.bf16.mxu0 0
        %4772 = vmatpush1.bf16.msra.mxu0 0
        %4773 = vmatprep.subr.bf16.mxu0 0
        %4774 = vmatpush1.bf16.msra.mxu0 0
        %4775 = vmatprep.subr.bf16.mxu0 0
        %4776 = vmatpush1.bf16.msra.mxu0 0
        %4777 = vmatprep.subr.bf16.mxu0 0
        %4778 = vmatpush1.bf16.msra.mxu0 0
        %4779 = vmatprep.subr.bf16.mxu0 0
        %4780 = vmatpush1.bf16.msra.mxu0 0
        %4781 = vmatprep.subr.bf16.mxu0 0
        %4782 = vmatpush1.bf16.msra.mxu0 0
        %4783 = vmatprep.subr.bf16.mxu0 0
        %4784 = vmatpush1.bf16.msra.mxu0 0
        %4785 = vmatprep.subr.bf16.mxu0 0
        %4786 = vmatpush1.bf16.msra.mxu0 %v4769
        %4787 = vmatprep.subr.bf16.mxu0 0
        %4788 = vmatpush2.bf16.msra.mxu0 0
        %4789 = vmatprep.subr.bf16.mxu0 0
        %4790 = vmatpush2.bf16.msra.mxu0 0
        %4791 = vmatprep.subr.bf16.mxu0 0
        %4792 = vmatpush2.bf16.msra.mxu0 0
        %4793 = vmatprep.subr.bf16.mxu0 0
        %4794 = vmatpush2.bf16.msra.mxu0 0
        %4795 = vmatprep.subr.bf16.mxu0 0
        %4796 = vmatpush2.bf16.msra.mxu0 0
        %4797 = vmatprep.subr.bf16.mxu0 0
        %4798 = vmatpush2.bf16.msra.mxu0 0
        %4799 = vmatprep.subr.bf16.mxu0 0
        %4800 = vmatpush2.bf16.msra.mxu0 0
        %4801 = vmatprep.subr.bf16.mxu0 0
        %4802 = vmatpush2.bf16.msra.mxu0 0
        %4803 = vmatprep.mubr.bf16.mxu0 0
        %4804 = vmatmul.mubr.bf16.gmra.mxu0 %v4721
        %v4805 = vpop.f32.mrf.mxu0
        %v4806 = vadd.f32 0.0, %v4805
        %v4807 = vpop.f32.mrf.mxu0
        %v4808 = vpop.f32.mrf.mxu0
        %v4809 = vadd.f32 0.0, %v4808
        %v4810 = vpop.f32.mrf.mxu0
        %4811 = vmatprep.mubr.bf16.mxu0 0
        %4812 = vmatmul.mubr.bf16.gmra.mxu0 %v4724
        %v4813 = vpop.f32.mrf.mxu0
        %v4814 = vadd.f32 0.0, %v4813
        %v4815 = vpop.f32.mrf.mxu0
        %v4816 = vpop.f32.mrf.mxu0
        %v4817 = vadd.f32 0.0, %v4816
        %v4818 = vpop.f32.mrf.mxu0
        %4819 = vmatprep.mubr.bf16.mxu0 0
        %4820 = vmatmul.mubr.bf16.gmra.mxu0 %v4727
        %v4821 = vpop.f32.mrf.mxu0
        %v4822 = vadd.f32 0.0, %v4821
        %v4823 = vpop.f32.mrf.mxu0
        %v4824 = vpop.f32.mrf.mxu0
        %v4825 = vadd.f32 0.0, %v4824
        %v4826 = vpop.f32.mrf.mxu0
        %4827 = vmatprep.mubr.bf16.mxu0 0
        %4828 = vmatmul.mubr.bf16.gmra.mxu0 %v4730
        %v4829 = vpop.f32.mrf.mxu0
        %v4830 = vadd.f32 0.0, %v4829
        %v4831 = vpop.f32.mrf.mxu0
        %v4832 = vpop.f32.mrf.mxu0
        %v4833 = vadd.f32 0.0, %v4832
        %v4834 = vpop.f32.mrf.mxu0
        %4835 = vmatprep.mubr.bf16.mxu0 0
        %4836 = vmatmul.mubr.bf16.gmra.mxu0 %v4733
        %v4837 = vpop.f32.mrf.mxu0
        %v4838 = vadd.f32 0.0, %v4837
        %v4839 = vpop.f32.mrf.mxu0
        %v4840 = vpop.f32.mrf.mxu0
        %v4841 = vadd.f32 0.0, %v4840
        %v4842 = vpop.f32.mrf.mxu0
        %4843 = vmatprep.mubr.bf16.mxu0 0
        %4844 = vmatmul.mubr.bf16.gmra.mxu0 %v4736
        %v4845 = vpop.f32.mrf.mxu0
        %v4846 = vadd.f32 0.0, %v4845
        %v4847 = vpop.f32.mrf.mxu0
        %v4848 = vpop.f32.mrf.mxu0
        %v4849 = vadd.f32 0.0, %v4848
        %v4850 = vpop.f32.mrf.mxu0
        %4851 = vmatprep.mubr.bf16.mxu0 0
        %4852 = vmatmul.mubr.bf16.gmra.mxu0 %v4739
        %v4853 = vpop.f32.mrf.mxu0
        %v4854 = vadd.f32 0.0, %v4853
        %v4855 = vpop.f32.mrf.mxu0
        %v4856 = vpop.f32.mrf.mxu0
        %v4857 = vadd.f32 0.0, %v4856
        %v4858 = vpop.f32.mrf.mxu0
        %4859 = vmatprep.mubr.bf16.mxu0 0
        %4860 = vmatmul.mubr.bf16.gmra.mxu0 %v4742
        %v4861 = vpop.f32.mrf.mxu0
        %v4862 = vadd.f32 0.0, %v4861
        %v4863 = vpop.f32.mrf.mxu0
        %v4864 = vpop.f32.mrf.mxu0
        %v4865 = vadd.f32 0.0, %v4864
        %v4866 = vpop.f32.mrf.mxu0
        %4867 = vmatprep.mubr.bf16.mxu0 0
        %4868 = vmatmul.mubr.bf16.gmra.mxu0 %v4745
        %v4869 = vpop.f32.mrf.mxu0
        %v4870 = vadd.f32 0.0, %v4869
        %v4871 = vpop.f32.mrf.mxu0
        %v4872 = vpop.f32.mrf.mxu0
        %v4873 = vadd.f32 0.0, %v4872
        %v4874 = vpop.f32.mrf.mxu0
        %4875 = vmatprep.mubr.bf16.mxu0 0
        %4876 = vmatmul.mubr.bf16.gmra.mxu0 %v4748
        %v4877 = vpop.f32.mrf.mxu0
        %v4878 = vadd.f32 0.0, %v4877
        %v4879 = vpop.f32.mrf.mxu0
        %v4880 = vpop.f32.mrf.mxu0
        %v4881 = vadd.f32 0.0, %v4880
        %v4882 = vpop.f32.mrf.mxu0
        %4883 = vmatprep.mubr.bf16.mxu0 0
        %4884 = vmatmul.mubr.bf16.gmra.mxu0 %v4751
        %v4885 = vpop.f32.mrf.mxu0
        %v4886 = vadd.f32 0.0, %v4885
        %v4887 = vpop.f32.mrf.mxu0
        %v4888 = vpop.f32.mrf.mxu0
        %v4889 = vadd.f32 0.0, %v4888
        %v4890 = vpop.f32.mrf.mxu0
        %4891 = vmatprep.mubr.bf16.mxu0 0
        %4892 = vmatmul.mubr.bf16.gmra.mxu0 %v4754
        %v4893 = vpop.f32.mrf.mxu0
        %v4894 = vadd.f32 0.0, %v4893
        %v4895 = vpop.f32.mrf.mxu0
        %v4896 = vpop.f32.mrf.mxu0
        %v4897 = vadd.f32 0.0, %v4896
        %v4898 = vpop.f32.mrf.mxu0
        %4899 = vmatprep.mubr.bf16.mxu0 0
        %4900 = vmatmul.mubr.bf16.gmra.mxu0 %v4757
        %v4901 = vpop.f32.mrf.mxu0
        %v4902 = vadd.f32 0.0, %v4901
        %v4903 = vpop.f32.mrf.mxu0
        %v4904 = vpop.f32.mrf.mxu0
        %v4905 = vadd.f32 0.0, %v4904
        %v4906 = vpop.f32.mrf.mxu0
        %4907 = vmatprep.mubr.bf16.mxu0 0
        %4908 = vmatmul.mubr.bf16.gmra.mxu0 %v4760
        %v4909 = vpop.f32.mrf.mxu0
        %v4910 = vadd.f32 0.0, %v4909
        %v4911 = vpop.f32.mrf.mxu0
        %v4912 = vpop.f32.mrf.mxu0
        %v4913 = vadd.f32 0.0, %v4912
        %v4914 = vpop.f32.mrf.mxu0
        %4915 = vmatprep.mubr.bf16.mxu0 0
        %4916 = vmatmul.mubr.bf16.gmra.mxu0 %v4763
        %v4917 = vpop.f32.mrf.mxu0
        %v4918 = vadd.f32 0.0, %v4917
        %v4919 = vpop.f32.mrf.mxu0
        %v4920 = vpop.f32.mrf.mxu0
        %v4921 = vadd.f32 0.0, %v4920
        %v4922 = vpop.f32.mrf.mxu0
        %4923 = vmatprep.mubr.bf16.mxu0 0
        %4924 = vmatmul.mubr.bf16.gmra.mxu0 %v4766
        %v4925 = vpop.f32.mrf.mxu0
        %v4926 = vadd.f32 0.0, %v4925
        %v4927 = vpop.f32.mrf.mxu0
        %v4928 = vpop.f32.mrf.mxu0
        %v4929 = vadd.f32 0.0, %v4928
        %v4930 = vpop.f32.mrf.mxu0
        %4931 = vdwg.mxu0
        %v4932 = vadd.f32 %v4206, %v4806
        %v4933 = vadd.f32 %v4207, %v4809
        %v4934 = vadd.f32 %v4208, %v4814
        %v4935 = vadd.f32 %v4209, %v4817
        %v4936 = vadd.f32 %v4210, %v4822
        %v4937 = vadd.f32 %v4211, %v4825
        %v4938 = vadd.f32 %v4212, %v4830
        %v4939 = vadd.f32 %v4213, %v4833
        %v4940 = vadd.f32 %v4214, %v4838
        %v4941 = vadd.f32 %v4215, %v4841
        %v4942 = vadd.f32 %v4216, %v4846
        %v4943 = vadd.f32 %v4217, %v4849
        %v4944 = vadd.f32 %v4218, %v4854
        %v4945 = vadd.f32 %v4219, %v4857
        %v4946 = vadd.f32 %v4220, %v4862
        %v4947 = vadd.f32 %v4221, %v4865
        %v4948 = vadd.f32 %v4222, %v4870
        %v4949 = vadd.f32 %v4223, %v4873
        %v4950 = vadd.f32 %v4224, %v4878
        %v4951 = vadd.f32 %v4225, %v4881
        %v4952 = vadd.f32 %v4226, %v4886
        %v4953 = vadd.f32 %v4227, %v4889
        %v4954 = vadd.f32 %v4228, %v4894
        %v4955 = vadd.f32 %v4229, %v4897
        %v4956 = vadd.f32 %v4230, %v4902
        %v4957 = vadd.f32 %v4231, %v4905
        %v4958 = vadd.f32 %v4232, %v4910
        %v4959 = vadd.f32 %v4233, %v4913
        %v4960 = vadd.f32 %v4234, %v4918
        %v4961 = vadd.f32 %v4235, %v4921
        %v4962 = vadd.f32 %v4236, %v4926
        %v4963 = vadd.f32 %v4237, %v4929
        %v4964 = vld [vmem:[%s3879] sm:$0xe]
        %v4965 = vld [vmem:[%s3879 + $0xc] sm:$0xe]
        %v4966 = vld [vmem:[%s3879 + $0x18] sm:$0xe]
        %v4967 = vld [vmem:[%s3879 + $0x24] sm:$0xe]
        %v4968 = vld [vmem:[%s3879 + $0x30] sm:$0xe]
        %v4969 = vld [vmem:[%s3879 + $0x3c] sm:$0xe]
        %v4970 = vld [vmem:[%s3879 + $0x48] sm:$0xe]
        %v4971 = vld [vmem:[%s3879 + $0x54] sm:$0xe]
        %v4972 = vld [vmem:[%s3879 + $0x60] sm:$0xe]
        %v4973 = vld [vmem:[%s3879 + $0x6c] sm:$0xe]
        %v4974 = vld [vmem:[%s3879 + $0x78] sm:$0xe]
        %v4975 = vld [vmem:[%s3879 + $0x84] sm:$0xe]
        %v4976 = vld [vmem:[%s3879 + $0x90] sm:$0xe]
        %v4977 = vld [vmem:[%s3879 + $0x9c] sm:$0xe]
        %v4978 = vld [vmem:[%s3879 + $0xa8] sm:$0xe]
        %v4979 = vld [vmem:[%s3879 + $0xb4] sm:$0xe]
        %v5028 = vrot.slane %v4964, 5
        %v5029 = vrot.slane %v5028, 4
        %v5030 = vrot.slane %v4239, 5
        %v5031 = vsel %vm1917, %v5029, %v5030
        %v5032 = vrot.slane %v5030, 4
        %v5033 = vrot.slane %v4240, 5
        %v5034 = vsel %vm1917, %v5032, %v5033
        %v5035 = vrot.slane %v4965, 5
        %v5036 = vrot.slane %v5035, 4
        %v5037 = vrot.slane %v4242, 5
        %v5038 = vsel %vm1917, %v5036, %v5037
        %v5039 = vrot.slane %v5037, 4
        %v5040 = vrot.slane %v4243, 5
        %v5041 = vsel %vm1917, %v5039, %v5040
        %v5042 = vrot.slane %v4966, 5
        %v5043 = vrot.slane %v5042, 4
        %v5044 = vrot.slane %v4245, 5
        %v5045 = vsel %vm1917, %v5043, %v5044
        %v5046 = vrot.slane %v5044, 4
        %v5047 = vrot.slane %v4246, 5
        %v5048 = vsel %vm1917, %v5046, %v5047
        %v5049 = vrot.slane %v4967, 5
        %v5050 = vrot.slane %v5049, 4
        %v5051 = vrot.slane %v4248, 5
        %v5052 = vsel %vm1917, %v5050, %v5051
        %v5053 = vrot.slane %v5051, 4
        %v5054 = vrot.slane %v4249, 5
        %v5055 = vsel %vm1917, %v5053, %v5054
        %v5056 = vrot.slane %v4968, 5
        %v5057 = vrot.slane %v5056, 4
        %v5058 = vrot.slane %v4251, 5
        %v5059 = vsel %vm1917, %v5057, %v5058
        %v5060 = vrot.slane %v5058, 4
        %v5061 = vrot.slane %v4252, 5
        %v5062 = vsel %vm1917, %v5060, %v5061
        %v5063 = vrot.slane %v4969, 5
        %v5064 = vrot.slane %v5063, 4
        %v5065 = vrot.slane %v4254, 5
        %v5066 = vsel %vm1917, %v5064, %v5065
        %v5067 = vrot.slane %v5065, 4
        %v5068 = vrot.slane %v4255, 5
        %v5069 = vsel %vm1917, %v5067, %v5068
        %v5070 = vrot.slane %v4970, 5
        %v5071 = vrot.slane %v5070, 4
        %v5072 = vrot.slane %v4257, 5
        %v5073 = vsel %vm1917, %v5071, %v5072
        %v5074 = vrot.slane %v5072, 4
        %v5075 = vrot.slane %v4258, 5
        %v5076 = vsel %vm1917, %v5074, %v5075
        %v5077 = vrot.slane %v4971, 5
        %v5078 = vrot.slane %v5077, 4
        %v5079 = vrot.slane %v4260, 5
        %v5080 = vsel %vm1917, %v5078, %v5079
        %v5081 = vrot.slane %v5079, 4
        %v5082 = vrot.slane %v4261, 5
        %v5083 = vsel %vm1917, %v5081, %v5082
        %v5084 = vrot.slane %v4972, 5
        %v5085 = vrot.slane %v5084, 4
        %v5086 = vrot.slane %v4263, 5
        %v5087 = vsel %vm1917, %v5085, %v5086
        %v5088 = vrot.slane %v5086, 4
        %v5089 = vrot.slane %v4264, 5
        %v5090 = vsel %vm1917, %v5088, %v5089
        %v5091 = vrot.slane %v4973, 5
        %v5092 = vrot.slane %v5091, 4
        %v5093 = vrot.slane %v4266, 5
        %v5094 = vsel %vm1917, %v5092, %v5093
        %v5095 = vrot.slane %v5093, 4
        %v5096 = vrot.slane %v4267, 5
        %v5097 = vsel %vm1917, %v5095, %v5096
        %v5098 = vrot.slane %v4974, 5
        %v5099 = vrot.slane %v5098, 4
        %v5100 = vrot.slane %v4269, 5
        %v5101 = vsel %vm1917, %v5099, %v5100
        %v5102 = vrot.slane %v5100, 4
        %v5103 = vrot.slane %v4270, 5
        %v5104 = vsel %vm1917, %v5102, %v5103
        %v5105 = vrot.slane %v4975, 5
        %v5106 = vrot.slane %v5105, 4
        %v5107 = vrot.slane %v4272, 5
        %v5108 = vsel %vm1917, %v5106, %v5107
        %v5109 = vrot.slane %v5107, 4
        %v5110 = vrot.slane %v4273, 5
        %v5111 = vsel %vm1917, %v5109, %v5110
        %v5112 = vrot.slane %v4976, 5
        %v5113 = vrot.slane %v5112, 4
        %v5114 = vrot.slane %v4275, 5
        %v5115 = vsel %vm1917, %v5113, %v5114
        %v5116 = vrot.slane %v5114, 4
        %v5117 = vrot.slane %v4276, 5
        %v5118 = vsel %vm1917, %v5116, %v5117
        %v5119 = vrot.slane %v4977, 5
        %v5120 = vrot.slane %v5119, 4
        %v5121 = vrot.slane %v4278, 5
        %v5122 = vsel %vm1917, %v5120, %v5121
        %v5123 = vrot.slane %v5121, 4
        %v5124 = vrot.slane %v4279, 5
        %v5125 = vsel %vm1917, %v5123, %v5124
        %v5126 = vrot.slane %v4978, 5
        %v5127 = vrot.slane %v5126, 4
        %v5128 = vrot.slane %v4281, 5
        %v5129 = vsel %vm1917, %v5127, %v5128
        %v5130 = vrot.slane %v5128, 4
        %v5131 = vrot.slane %v4282, 5
        %v5132 = vsel %vm1917, %v5130, %v5131
        %v5133 = vrot.slane %v4979, 5
        %v5134 = vrot.slane %v5133, 4
        %v5135 = vrot.slane %v4284, 5
        %v5136 = vsel %vm1917, %v5134, %v5135
        %v5137 = vrot.slane %v5135, 4
        %v5138 = vrot.slane %v4285, 5
        %v5139 = vsel %vm1917, %v5137, %v5138
        %s5140 = scalar_lea.vmem %s866, 16
        %v5141 = vld [vmem:[%s5140] sm:$0x3]
        %v5142 = vunpack.c.l.b16 %v5031
        %v5143 = vunpack.c.l.b16 %v5034
        %v5144 = vunpack.c.l.b16 %v5038
        %v5145 = vunpack.c.l.b16 %v5041
        %v5146 = vunpack.c.l.b16 %v5045
        %v5147 = vunpack.c.l.b16 %v5048
        %v5148 = vunpack.c.l.b16 %v5052
        %v5149 = vunpack.c.l.b16 %v5055
        %v5150 = vunpack.c.l.b16 %v5059
        %v5151 = vunpack.c.l.b16 %v5062
        %v5152 = vunpack.c.l.b16 %v5066
        %v5153 = vunpack.c.l.b16 %v5069
        %v5154 = vunpack.c.l.b16 %v5073
        %v5155 = vunpack.c.l.b16 %v5076
        %v5156 = vunpack.c.l.b16 %v5080
        %v5157 = vunpack.c.l.b16 %v5083
        %v5158 = vunpack.c.l.b16 %v5087
        %v5159 = vunpack.c.l.b16 %v5090
        %v5160 = vunpack.c.l.b16 %v5094
        %v5161 = vunpack.c.l.b16 %v5097
        %v5162 = vunpack.c.l.b16 %v5101
        %v5163 = vunpack.c.l.b16 %v5104
        %v5164 = vunpack.c.l.b16 %v5108
        %v5165 = vunpack.c.l.b16 %v5111
        %v5166 = vunpack.c.l.b16 %v5115
        %v5167 = vunpack.c.l.b16 %v5118
        %v5168 = vunpack.c.l.b16 %v5122
        %v5169 = vunpack.c.l.b16 %v5125
        %v5170 = vunpack.c.l.b16 %v5129
        %v5171 = vunpack.c.l.b16 %v5132
        %v5172 = vunpack.c.l.b16 %v5136
        %v5173 = vunpack.c.l.b16 %v5139
        %v5174 = vpack.c.b16 %v5143, %v5142
        %v5175 = vpack.c.b16 %v5145, %v5144
        %v5176 = vpack.c.b16 %v5147, %v5146
        %v5177 = vpack.c.b16 %v5149, %v5148
        %v5178 = vpack.c.b16 %v5151, %v5150
        %v5179 = vpack.c.b16 %v5153, %v5152
        %v5180 = vpack.c.b16 %v5155, %v5154
        %v5181 = vpack.c.b16 %v5157, %v5156
        %v5182 = vpack.c.b16 %v5159, %v5158
        %v5183 = vpack.c.b16 %v5161, %v5160
        %v5184 = vpack.c.b16 %v5163, %v5162
        %v5185 = vpack.c.b16 %v5165, %v5164
        %v5186 = vpack.c.b16 %v5167, %v5166
        %v5187 = vpack.c.b16 %v5169, %v5168
        %v5188 = vpack.c.b16 %v5171, %v5170
        %v5189 = vpack.c.b16 %v5173, %v5172
        %v5191 = vsel %vm1361, %v5174, 0
        %v5194 = vsel %vm1361, %v5175, 0
        %v5197 = vsel %vm1361, %v5176, 0
        %v5200 = vsel %vm1361, %v5177, 0
        %v5203 = vsel %vm1361, %v5178, 0
        %v5206 = vsel %vm1361, %v5179, 0
        %v5209 = vsel %vm1361, %v5180, 0
        %v5212 = vsel %vm1361, %v5181, 0
        %v5215 = vsel %vm1361, %v5182, 0
        %v5218 = vsel %vm1361, %v5183, 0
        %v5221 = vsel %vm1361, %v5184, 0
        %v5224 = vsel %vm1361, %v5185, 0
        %v5227 = vsel %vm1361, %v5186, 0
        %v5230 = vsel %vm1361, %v5187, 0
        %v5233 = vsel %vm1361, %v5188, 0
        %v5236 = vsel %vm1361, %v5189, 0
        %v5239 = vsel %vm1410, %v5141, 0
        %5241 = vmatprep.subr.bf16.mxu0 0
        %5242 = vmatpush1.bf16.msra.mxu0 0
        %5243 = vmatprep.subr.bf16.mxu0 0
        %5244 = vmatpush1.bf16.msra.mxu0 0
        %5245 = vmatprep.subr.bf16.mxu0 0
        %5246 = vmatpush1.bf16.msra.mxu0 0
        %5247 = vmatprep.subr.bf16.mxu0 0
        %5248 = vmatpush1.bf16.msra.mxu0 0
        %5249 = vmatprep.subr.bf16.mxu0 0
        %5250 = vmatpush1.bf16.msra.mxu0 0
        %5251 = vmatprep.subr.bf16.mxu0 0
        %5252 = vmatpush1.bf16.msra.mxu0 0
        %5253 = vmatprep.subr.bf16.mxu0 0
        %5254 = vmatpush1.bf16.msra.mxu0 0
        %5255 = vmatprep.subr.bf16.mxu0 0
        %5256 = vmatpush1.bf16.msra.mxu0 %v5239
        %5257 = vmatprep.subr.bf16.mxu0 0
        %5258 = vmatpush2.bf16.msra.mxu0 0
        %5259 = vmatprep.subr.bf16.mxu0 0
        %5260 = vmatpush2.bf16.msra.mxu0 0
        %5261 = vmatprep.subr.bf16.mxu0 0
        %5262 = vmatpush2.bf16.msra.mxu0 0
        %5263 = vmatprep.subr.bf16.mxu0 0
        %5264 = vmatpush2.bf16.msra.mxu0 0
        %5265 = vmatprep.subr.bf16.mxu0 0
        %5266 = vmatpush2.bf16.msra.mxu0 0
        %5267 = vmatprep.subr.bf16.mxu0 0
        %5268 = vmatpush2.bf16.msra.mxu0 0
        %5269 = vmatprep.subr.bf16.mxu0 0
        %5270 = vmatpush2.bf16.msra.mxu0 0
        %5271 = vmatprep.subr.bf16.mxu0 0
        %5272 = vmatpush2.bf16.msra.mxu0 0
        %5273 = vmatprep.mubr.bf16.mxu0 0
        %5274 = vmatmul.mubr.bf16.gmra.mxu0 %v5191
        %v5275 = vpop.f32.mrf.mxu0
        %v5276 = vadd.f32 0.0, %v5275
        %v5277 = vpop.f32.mrf.mxu0
        %v5278 = vpop.f32.mrf.mxu0
        %v5279 = vadd.f32 0.0, %v5278
        %v5280 = vpop.f32.mrf.mxu0
        %5281 = vmatprep.mubr.bf16.mxu0 0
        %5282 = vmatmul.mubr.bf16.gmra.mxu0 %v5194
        %v5283 = vpop.f32.mrf.mxu0
        %v5284 = vadd.f32 0.0, %v5283
        %v5285 = vpop.f32.mrf.mxu0
        %v5286 = vpop.f32.mrf.mxu0
        %v5287 = vadd.f32 0.0, %v5286
        %v5288 = vpop.f32.mrf.mxu0
        %5289 = vmatprep.mubr.bf16.mxu0 0
        %5290 = vmatmul.mubr.bf16.gmra.mxu0 %v5197
        %v5291 = vpop.f32.mrf.mxu0
        %v5292 = vadd.f32 0.0, %v5291
        %v5293 = vpop.f32.mrf.mxu0
        %v5294 = vpop.f32.mrf.mxu0
        %v5295 = vadd.f32 0.0, %v5294
        %v5296 = vpop.f32.mrf.mxu0
        %5297 = vmatprep.mubr.bf16.mxu0 0
        %5298 = vmatmul.mubr.bf16.gmra.mxu0 %v5200
        %v5299 = vpop.f32.mrf.mxu0
        %v5300 = vadd.f32 0.0, %v5299
        %v5301 = vpop.f32.mrf.mxu0
        %v5302 = vpop.f32.mrf.mxu0
        %v5303 = vadd.f32 0.0, %v5302
        %v5304 = vpop.f32.mrf.mxu0
        %5305 = vmatprep.mubr.bf16.mxu0 0
        %5306 = vmatmul.mubr.bf16.gmra.mxu0 %v5203
        %v5307 = vpop.f32.mrf.mxu0
        %v5308 = vadd.f32 0.0, %v5307
        %v5309 = vpop.f32.mrf.mxu0
        %v5310 = vpop.f32.mrf.mxu0
        %v5311 = vadd.f32 0.0, %v5310
        %v5312 = vpop.f32.mrf.mxu0
        %5313 = vmatprep.mubr.bf16.mxu0 0
        %5314 = vmatmul.mubr.bf16.gmra.mxu0 %v5206
        %v5315 = vpop.f32.mrf.mxu0
        %v5316 = vadd.f32 0.0, %v5315
        %v5317 = vpop.f32.mrf.mxu0
        %v5318 = vpop.f32.mrf.mxu0
        %v5319 = vadd.f32 0.0, %v5318
        %v5320 = vpop.f32.mrf.mxu0
        %5321 = vmatprep.mubr.bf16.mxu0 0
        %5322 = vmatmul.mubr.bf16.gmra.mxu0 %v5209
        %v5323 = vpop.f32.mrf.mxu0
        %v5324 = vadd.f32 0.0, %v5323
        %v5325 = vpop.f32.mrf.mxu0
        %v5326 = vpop.f32.mrf.mxu0
        %v5327 = vadd.f32 0.0, %v5326
        %v5328 = vpop.f32.mrf.mxu0
        %5329 = vmatprep.mubr.bf16.mxu0 0
        %5330 = vmatmul.mubr.bf16.gmra.mxu0 %v5212
        %v5331 = vpop.f32.mrf.mxu0
        %v5332 = vadd.f32 0.0, %v5331
        %v5333 = vpop.f32.mrf.mxu0
        %v5334 = vpop.f32.mrf.mxu0
        %v5335 = vadd.f32 0.0, %v5334
        %v5336 = vpop.f32.mrf.mxu0
        %5337 = vmatprep.mubr.bf16.mxu0 0
        %5338 = vmatmul.mubr.bf16.gmra.mxu0 %v5215
        %v5339 = vpop.f32.mrf.mxu0
        %v5340 = vadd.f32 0.0, %v5339
        %v5341 = vpop.f32.mrf.mxu0
        %v5342 = vpop.f32.mrf.mxu0
        %v5343 = vadd.f32 0.0, %v5342
        %v5344 = vpop.f32.mrf.mxu0
        %5345 = vmatprep.mubr.bf16.mxu0 0
        %5346 = vmatmul.mubr.bf16.gmra.mxu0 %v5218
        %v5347 = vpop.f32.mrf.mxu0
        %v5348 = vadd.f32 0.0, %v5347
        %v5349 = vpop.f32.mrf.mxu0
        %v5350 = vpop.f32.mrf.mxu0
        %v5351 = vadd.f32 0.0, %v5350
        %v5352 = vpop.f32.mrf.mxu0
        %5353 = vmatprep.mubr.bf16.mxu0 0
        %5354 = vmatmul.mubr.bf16.gmra.mxu0 %v5221
        %v5355 = vpop.f32.mrf.mxu0
        %v5356 = vadd.f32 0.0, %v5355
        %v5357 = vpop.f32.mrf.mxu0
        %v5358 = vpop.f32.mrf.mxu0
        %v5359 = vadd.f32 0.0, %v5358
        %v5360 = vpop.f32.mrf.mxu0
        %5361 = vmatprep.mubr.bf16.mxu0 0
        %5362 = vmatmul.mubr.bf16.gmra.mxu0 %v5224
        %v5363 = vpop.f32.mrf.mxu0
        %v5364 = vadd.f32 0.0, %v5363
        %v5365 = vpop.f32.mrf.mxu0
        %v5366 = vpop.f32.mrf.mxu0
        %v5367 = vadd.f32 0.0, %v5366
        %v5368 = vpop.f32.mrf.mxu0
        %5369 = vmatprep.mubr.bf16.mxu0 0
        %5370 = vmatmul.mubr.bf16.gmra.mxu0 %v5227
        %v5371 = vpop.f32.mrf.mxu0
        %v5372 = vadd.f32 0.0, %v5371
        %v5373 = vpop.f32.mrf.mxu0
        %v5374 = vpop.f32.mrf.mxu0
        %v5375 = vadd.f32 0.0, %v5374
        %v5376 = vpop.f32.mrf.mxu0
        %5377 = vmatprep.mubr.bf16.mxu0 0
        %5378 = vmatmul.mubr.bf16.gmra.mxu0 %v5230
        %v5379 = vpop.f32.mrf.mxu0
        %v5380 = vadd.f32 0.0, %v5379
        %v5381 = vpop.f32.mrf.mxu0
        %v5382 = vpop.f32.mrf.mxu0
        %v5383 = vadd.f32 0.0, %v5382
        %v5384 = vpop.f32.mrf.mxu0
        %5385 = vmatprep.mubr.bf16.mxu0 0
        %5386 = vmatmul.mubr.bf16.gmra.mxu0 %v5233
        %v5387 = vpop.f32.mrf.mxu0
        %v5388 = vadd.f32 0.0, %v5387
        %v5389 = vpop.f32.mrf.mxu0
        %v5390 = vpop.f32.mrf.mxu0
        %v5391 = vadd.f32 0.0, %v5390
        %v5392 = vpop.f32.mrf.mxu0
        %5393 = vmatprep.mubr.bf16.mxu0 0
        %5394 = vmatmul.mubr.bf16.gmra.mxu0 %v5236
        %v5395 = vpop.f32.mrf.mxu0
        %v5396 = vadd.f32 0.0, %v5395
        %v5397 = vpop.f32.mrf.mxu0
        %v5398 = vpop.f32.mrf.mxu0
        %v5399 = vadd.f32 0.0, %v5398
        %v5400 = vpop.f32.mrf.mxu0
        %5401 = vdwg.mxu0
        %v5402 = vadd.f32 %v4932, %v5276
        %v5403 = vadd.f32 %v4933, %v5279
        %v5404 = vadd.f32 %v4934, %v5284
        %v5405 = vadd.f32 %v4935, %v5287
        %v5406 = vadd.f32 %v4936, %v5292
        %v5407 = vadd.f32 %v4937, %v5295
        %v5408 = vadd.f32 %v4938, %v5300
        %v5409 = vadd.f32 %v4939, %v5303
        %v5410 = vadd.f32 %v4940, %v5308
        %v5411 = vadd.f32 %v4941, %v5311
        %v5412 = vadd.f32 %v4942, %v5316
        %v5413 = vadd.f32 %v4943, %v5319
        %v5414 = vadd.f32 %v4944, %v5324
        %v5415 = vadd.f32 %v4945, %v5327
        %v5416 = vadd.f32 %v4946, %v5332
        %v5417 = vadd.f32 %v4947, %v5335
        %v5418 = vadd.f32 %v4948, %v5340
        %v5419 = vadd.f32 %v4949, %v5343
        %v5420 = vadd.f32 %v4950, %v5348
        %v5421 = vadd.f32 %v4951, %v5351
        %v5422 = vadd.f32 %v4952, %v5356
        %v5423 = vadd.f32 %v4953, %v5359
        %v5424 = vadd.f32 %v4954, %v5364
        %v5425 = vadd.f32 %v4955, %v5367
        %v5426 = vadd.f32 %v4956, %v5372
        %v5427 = vadd.f32 %v4957, %v5375
        %v5428 = vadd.f32 %v4958, %v5380
        %v5429 = vadd.f32 %v4959, %v5383
        %v5430 = vadd.f32 %v4960, %v5388
        %v5431 = vadd.f32 %v4961, %v5391
        %v5432 = vadd.f32 %v4962, %v5396
        %v5433 = vadd.f32 %v4963, %v5399
        %v5434 = vld [vmem:[%s869] sm:$0x1]
        %v5436 = vlaneseq
        %v5437 = vshrl.u32 %v5436, 7
        %v5438 = vsub.s32 0, %v5437
        %v5439 = vrot.slane %v5434, %v5438
        %v5441 = vmul.f32 %v5402, %v5439
        %v5442 = vmul.f32 %v5403, %v5439
        %v5443 = vmul.f32 %v5404, %v5439
        %v5444 = vmul.f32 %v5405, %v5439
        %v5445 = vmul.f32 %v5406, %v5439
        %v5446 = vmul.f32 %v5407, %v5439
        %v5447 = vmul.f32 %v5408, %v5439
        %v5448 = vmul.f32 %v5409, %v5439
        %v5449 = vmul.f32 %v5410, %v5439
        %v5450 = vmul.f32 %v5411, %v5439
        %v5451 = vmul.f32 %v5412, %v5439
        %v5452 = vmul.f32 %v5413, %v5439
        %v5453 = vmul.f32 %v5414, %v5439
        %v5454 = vmul.f32 %v5415, %v5439
        %v5455 = vmul.f32 %v5416, %v5439
        %v5456 = vmul.f32 %v5417, %v5439
        %v5457 = vmul.f32 %v5418, %v5439
        %v5458 = vmul.f32 %v5419, %v5439
        %v5459 = vmul.f32 %v5420, %v5439
        %v5460 = vmul.f32 %v5421, %v5439
        %v5461 = vmul.f32 %v5422, %v5439
        %v5462 = vmul.f32 %v5423, %v5439
        %v5463 = vmul.f32 %v5424, %v5439
        %v5464 = vmul.f32 %v5425, %v5439
        %v5465 = vmul.f32 %v5426, %v5439
        %v5466 = vmul.f32 %v5427, %v5439
        %v5467 = vmul.f32 %v5428, %v5439
        %v5468 = vmul.f32 %v5429, %v5439
        %v5469 = vmul.f32 %v5430, %v5439
        %v5470 = vmul.f32 %v5431, %v5439
        %v5471 = vmul.f32 %v5432, %v5439
        %v5472 = vmul.f32 %v5433, %v5439
        %v5473 = vld [vmem:[%s872] sm:$0x1]
        %v5475 = vlaneseq
        %v5476 = vshrl.u32 %v5475, 7
        %v5477 = vsub.s32 0, %v5476
        %v5478 = vrot.slane %v5473, %v5477
        %v5480 = vadd.f32 %v5441, %v5478
        %v5481 = vadd.f32 %v5442, %v5478
        %v5482 = vadd.f32 %v5443, %v5478
        %v5483 = vadd.f32 %v5444, %v5478
        %v5484 = vadd.f32 %v5445, %v5478
        %v5485 = vadd.f32 %v5446, %v5478
        %v5486 = vadd.f32 %v5447, %v5478
        %v5487 = vadd.f32 %v5448, %v5478
        %v5488 = vadd.f32 %v5449, %v5478
        %v5489 = vadd.f32 %v5450, %v5478
        %v5490 = vadd.f32 %v5451, %v5478
        %v5491 = vadd.f32 %v5452, %v5478
        %v5492 = vadd.f32 %v5453, %v5478
        %v5493 = vadd.f32 %v5454, %v5478
        %v5494 = vadd.f32 %v5455, %v5478
        %v5495 = vadd.f32 %v5456, %v5478
        %v5496 = vadd.f32 %v5457, %v5478
        %v5497 = vadd.f32 %v5458, %v5478
        %v5498 = vadd.f32 %v5459, %v5478
        %v5499 = vadd.f32 %v5460, %v5478
        %v5500 = vadd.f32 %v5461, %v5478
        %v5501 = vadd.f32 %v5462, %v5478
        %v5502 = vadd.f32 %v5463, %v5478
        %v5503 = vadd.f32 %v5464, %v5478
        %v5504 = vadd.f32 %v5465, %v5478
        %v5505 = vadd.f32 %v5466, %v5478
        %v5506 = vadd.f32 %v5467, %v5478
        %v5507 = vadd.f32 %v5468, %v5478
        %v5508 = vadd.f32 %v5469, %v5478
        %v5509 = vadd.f32 %v5470, %v5478
        %v5510 = vadd.f32 %v5471, %v5478
        %v5511 = vadd.f32 %v5472, %v5478
        %v5512 = vmax.f32 %v5480, 0.0
        %v5513 = vmax.f32 %v5481, 0.0
        %v5514 = vmax.f32 %v5482, 0.0
        %v5515 = vmax.f32 %v5483, 0.0
        %v5516 = vmax.f32 %v5484, 0.0
        %v5517 = vmax.f32 %v5485, 0.0
        %v5518 = vmax.f32 %v5486, 0.0
        %v5519 = vmax.f32 %v5487, 0.0
        %v5520 = vmax.f32 %v5488, 0.0
        %v5521 = vmax.f32 %v5489, 0.0
        %v5522 = vmax.f32 %v5490, 0.0
        %v5523 = vmax.f32 %v5491, 0.0
        %v5524 = vmax.f32 %v5492, 0.0
        %v5525 = vmax.f32 %v5493, 0.0
        %v5526 = vmax.f32 %v5494, 0.0
        %v5527 = vmax.f32 %v5495, 0.0
        %v5528 = vmax.f32 %v5496, 0.0
        %v5529 = vmax.f32 %v5497, 0.0
        %v5530 = vmax.f32 %v5498, 0.0
        %v5531 = vmax.f32 %v5499, 0.0
        %v5532 = vmax.f32 %v5500, 0.0
        %v5533 = vmax.f32 %v5501, 0.0
        %v5534 = vmax.f32 %v5502, 0.0
        %v5535 = vmax.f32 %v5503, 0.0
        %v5536 = vmax.f32 %v5504, 0.0
        %v5537 = vmax.f32 %v5505, 0.0
        %v5538 = vmax.f32 %v5506, 0.0
        %v5539 = vmax.f32 %v5507, 0.0
        %v5540 = vmax.f32 %v5508, 0.0
        %v5541 = vmax.f32 %v5509, 0.0
        %v5542 = vmax.f32 %v5510, 0.0
        %v5543 = vmax.f32 %v5511, 0.0
        %5544 = vst [vmem:[%s861] sm:$0xff] %v5512
        %5545 = vst [vmem:[%s861 + $0x8] sm:$0xff] %v5513
        %5546 = vst [vmem:[%s861 + $0x10] sm:$0xff] %v5514
        %5547 = vst [vmem:[%s861 + $0x18] sm:$0xff] %v5515
        %5548 = vst [vmem:[%s861 + $0x20] sm:$0xff] %v5516
        %5549 = vst [vmem:[%s861 + $0x28] sm:$0xff] %v5517
        %5550 = vst [vmem:[%s861 + $0x30] sm:$0xff] %v5518
        %5551 = vst [vmem:[%s861 + $0x38] sm:$0xff] %v5519
        %5552 = vst [vmem:[%s861 + $0x40] sm:$0xff] %v5520
        %5553 = vst [vmem:[%s861 + $0x48] sm:$0xff] %v5521
        %5554 = vst [vmem:[%s861 + $0x50] sm:$0xff] %v5522
        %5555 = vst [vmem:[%s861 + $0x58] sm:$0xff] %v5523
        %5556 = vst [vmem:[%s861 + $0x60] sm:$0xff] %v5524
        %5557 = vst [vmem:[%s861 + $0x68] sm:$0xff] %v5525
        %5558 = vst [vmem:[%s861 + $0x70] sm:$0xff] %v5526
        %5559 = vst [vmem:[%s861 + $0x78] sm:$0xff] %v5527
        %5560 = vst [vmem:[%s861 + $0x80] sm:$0xff] %v5528
        %5561 = vst [vmem:[%s861 + $0x88] sm:$0xff] %v5529
        %5562 = vst [vmem:[%s861 + $0x90] sm:$0xff] %v5530
        %5563 = vst [vmem:[%s861 + $0x98] sm:$0xff] %v5531
        %5564 = vst [vmem:[%s861 + $0xa0] sm:$0xff] %v5532
        %5565 = vst [vmem:[%s861 + $0xa8] sm:$0xff] %v5533
        %5566 = vst [vmem:[%s861 + $0xb0] sm:$0xff] %v5534
        %5567 = vst [vmem:[%s861 + $0xb8] sm:$0xff] %v5535
        %5568 = vst [vmem:[%s861 + $0xc0] sm:$0xff] %v5536
        %5569 = vst [vmem:[%s861 + $0xc8] sm:$0xff] %v5537
        %5570 = vst [vmem:[%s861 + $0xd0] sm:$0xff] %v5538
        %5571 = vst [vmem:[%s861 + $0xd8] sm:$0xff] %v5539
        %5572 = vst [vmem:[%s861 + $0xe0] sm:$0xff] %v5540
        %5573 = vst [vmem:[%s861 + $0xe8] sm:$0xff] %v5541
        %5574 = vst [vmem:[%s861 + $0xf0] sm:$0xff] %v5542
        %5575 = vst [vmem:[%s861 + $0xf8] sm:$0xff] %v5543
        %s5576 = sand.u32 %s144, 1
        %s5577 = scalar_lea.sflag [#allocation4], %s5576
        %s5578 = sand.u32 %s144, 1
        %s5579 = smul.addr %s5578, 256
        %s5580 = scalar_lea.vmem [#allocation3], %s5579
        // Predicated region
        $region78: #{basic_conv_forward.1} parent=72 // pred_check
          %p5581 = pneg %p154
        $region79: #{basic_conv_forward.1} parent=72 // pred_check_branch
          %5583 = sbr.rel (%p5581) target = $region81
        $region80: #{basic_conv_forward.1} parent=72 // pred_region
          %s5584 = smul.u32 32, %s22
          %s5586 = ssub.s32 4096, 4096
          %5587 = vsyncadd %s5577, %s5586
          %s5588 = sadd.s32 %s23, %s5584
          %s5589 = smul.addr %s5588, 128
          %s5590 = scalar_lea.hbm %s4, %s5589
          %s5591 = sshll.u32 %s5580, 4
          %s5592 = int_to_ptr.vmem [resolvable:$true] %s5591
          %5597 = dma.vmem_to_hbm [thread:$0]  %s5592, 4096, %s5590, %s5577, 128, 128, 8
        $region81: #{basic_conv_forward.1} parent=72 // pred_fallthru
          _
      $region73: #{basic_conv_forward.1} parent=5 // pred_fallthru
        _
      %p5598 = scmp.le.s32.totalorder 2, %s13
      // Predicated region
      $region82: #{basic_conv_forward.1} parent=5 // pred_check
        %p5599 = pneg %p5598
      $region83: #{basic_conv_forward.1} parent=5 // pred_check_branch
        %5601 = sbr.rel (%p5599) target = $region85
      $region84: #{basic_conv_forward.1} parent=5 // pred_region
        %s5602 = ssub.s32 %s13, 2
        // Predicated region
        $region86: #{basic_conv_forward.1} parent=84 // pred_check
          %p5603 = pneg %p160
        $region87: #{basic_conv_forward.1} parent=84 // pred_check_branch
          %5605 = sbr.rel (%p5603) target = $region89
        $region88: #{basic_conv_forward.1} parent=84 // pred_region
          %s5606 = sand.u32 %s145, 1
          %s5607 = scalar_lea.sflag [#allocation4], %s5606
          %s5608 = sand.u32 %s145, 1
          %s5609 = smul.addr %s5608, 256
          %s5610 = scalar_lea.vmem [#allocation3], %s5609
          %5611 = dma.done %s5607, 4096
        $region89: #{basic_conv_forward.1} parent=84 // pred_fallthru
          _
      $region85: #{basic_conv_forward.1} parent=5 // pred_fallthru
        _
    $region6: #{basic_conv_forward.1} parent=1 // loop_footer
      %s17 = sadd.s32 1, %s13
    $region7: #{basic_conv_forward.1} parent=1 // loop_footer_branch
      %12 = sbr.rel target = $region3
    $region8: #{basic_conv_forward.1} parent=1 // loop_exit
      _
    %5612 = vsyncpa [#allocation4], 1
    %s5613 = scalar_lea.sflag [#allocation4], 1
    %5614 = vsyncpa %s5613, 1

</llo_original>
